<compile_context>
chip_gen: v7x
topology: tpu7x:2x2x1
jax: 0.10.0
libtpu: 0.0.40
codegen_flags: <defaults>
</compile_context>

<pallas_src>
import functools

import jax
import jax.numpy as jnp
import numpy as np
from jax import lax
from jax.experimental import pallas as pl
from jax.experimental.pallas import tpu as pltpu


# ----------------------------------------------------------------------------
# Fused kernel: tri-plane bilinear sampling (one-hot matmul) + 3-layer MLP.
# ----------------------------------------------------------------------------
def _fused_triplane_mlp_kernel(x_ref, gxy_ref, gxz_ref, gyz_ref,
                               b1_ref, w2_ref, b2_ref, w3_ref, b3_ref,
                               o_ref, *, plane_dims, scales, offsets):
    """plane_dims: ((H_xy,W_xy),(H_xz,W_xz),(H_yz,W_yz)); scales/offsets: per-axis floats."""
    xyz = x_ref[...]                                   # (bn, 3) f32
    bn = xyz.shape[0]

    # Per-axis continuous grid coordinate, clamped to [0, size-1] (align_corners style).
    grid_sizes = (plane_dims[0][0], plane_dims[0][1], plane_dims[1][1])
    p = []
    for k in range(3):
        pk = xyz[:, k:k + 1] * scales[k] + offsets[k]   # (bn, 1)
        p.append(jnp.clip(pk, 0.0, float(grid_sizes[k] - 1)))

    def interp_matrix(pa, pb, hd, wd):
        # Build the (bn, hd*wd) bilinear interpolation weight matrix (4 taps per row).
        a0f = jnp.floor(pa)
        b0f = jnp.floor(pb)
        fa = pa - a0f
        fb = pb - b0f
        a0 = jnp.clip(a0f.astype(jnp.int32), 0, hd - 1)
        b0 = jnp.clip(b0f.astype(jnp.int32), 0, wd - 1)
        a1 = jnp.minimum(a0 + 1, hd - 1)
        b1 = jnp.minimum(b0 + 1, wd - 1)
        hw = hd * wd
        cols = lax.broadcasted_iota(jnp.int32, (bn, hw), 1)

        def tap(ai, bi, w):
            return (cols == ai * wd + bi).astype(jnp.float32) * w

        s = (tap(a0, b0, (1.0 - fa) * (1.0 - fb))
             + tap(a0, b1, (1.0 - fa) * fb)
             + tap(a1, b0, fa * (1.0 - fb))
             + tap(a1, b1, fa * fb))
        return s.astype(jnp.bfloat16)

    s_xy = interp_matrix(p[0], p[1], *plane_dims[0])
    s_xz = interp_matrix(p[0], p[2], *plane_dims[1])
    s_yz = interp_matrix(p[1], p[2], *plane_dims[2])

    # Layer 1 (plane values pre-folded into G), f32 accumulation on the MXU.
    h = (jnp.dot(s_xy, gxy_ref[...], preferred_element_type=jnp.float32)
         + jnp.dot(s_xz, gxz_ref[...], preferred_element_type=jnp.float32)
         + jnp.dot(s_yz, gyz_ref[...], preferred_element_type=jnp.float32))
    h = jnp.maximum(h + b1_ref[...], 0.0).astype(jnp.bfloat16)
    h = jnp.dot(h, w2_ref[...], preferred_element_type=jnp.float32)
    h = jnp.maximum(h + b2_ref[...], 0.0).astype(jnp.bfloat16)
    out = jnp.dot(h, w3_ref[...], preferred_element_type=jnp.float32) + b3_ref[...]
    o_ref[...] = out.astype(o_ref.dtype)               # dense (bn, 128) store


def _pick_block_n(n):
    """Largest of {128,256,512,1024} that still leaves >= 2 grid steps (v7x megacore)."""
    block_n = 128
    for cand in (256, 512, 1024):
        if n >= 2 * cand:
            block_n = cand
    return block_n


def triplane_mlp_forward(xyz, kp, *, block_n=None):
    """xyz: (N, 3) f32 -> (N, out_dim) f32 using the fused kernel params `kp`."""
    n = xyz.shape[0]
    if block_n is None:
        block_n = _pick_block_n(n)
    grid = (pl.cdiv(n, block_n),)                      # ragged last tile handled by Pallas

    d_hid = kp["w2"].shape[0]
    d_out_pad = kp["w3"].shape[1]
    hw_xy = kp["g_xy"].shape[0]
    hw_xz = kp["g_xz"].shape[0]
    hw_yz = kp["g_yz"].shape[0]

    kernel = functools.partial(
        _fused_triplane_mlp_kernel,
        plane_dims=kp["plane_dims"], scales=kp["scales"], offsets=kp["offsets"])

    full = lambda shape: pl.BlockSpec(shape, lambda i: (0, 0))   # constant block -> no re-DMA

    out = pl.pallas_call(
        kernel,
        out_shape=jax.ShapeDtypeStruct((n, d_out_pad), jnp.float32),
        grid=grid,
        in_specs=[
            pl.BlockSpec((block_n, 3), lambda i: (i, 0)),        # xyz row tile
            full((hw_xy, d_hid)),                                # G_xy (bf16)
            full((hw_xz, d_hid)),                                # G_xz
            full((hw_yz, d_hid)),                                # G_yz
            full((1, d_hid)),                                    # b1 (f32)
            full((d_hid, d_hid)),                                # W2 (bf16)
            full((1, d_hid)),                                    # b2 (f32)
            full((d_hid, d_out_pad)),                            # W3 (bf16)
            full((1, d_out_pad)),                                # b3 (f32)
        ],
        out_specs=pl.BlockSpec((block_n, d_out_pad), lambda i: (i, 0)),
        compiler_params=pltpu.CompilerParams(dimension_semantics=("parallel",)),
    )(xyz, kp["g_xy"], kp["g_xz"], kp["g_yz"],
      kp["b1"], kp["w2"], kp["b2"], kp["w3"], kp["b3"])

    return out[:, :kp["out_dim"]]


# ----------------------------------------------------------------------------
# Pure-JAX reference (unfused, f32) — used only for the correctness spot-check.
# ----------------------------------------------------------------------------
def _bilinear_sample_plane(plane, u, v):
    """plane: (C, H, W); u, v in [0, 1], shape (N,). align_corners=True style."""
    c, h, w = plane.shape
    y = u * (h - 1)
    x = v * (w - 1)
    y0 = jnp.floor(y)
    x0 = jnp.floor(x)
    wy = y - y0
    wx = x - x0
    y0i = jnp.clip(y0.astype(jnp.int32), 0, h - 1)
    x0i = jnp.clip(x0.astype(jnp.int32), 0, w - 1)
    y1i = jnp.clip(y0i + 1, 0, h - 1)
    x1i = jnp.clip(x0i + 1, 0, w - 1)
    f00 = plane[:, y0i, x0i]
    f01 = plane[:, y0i, x1i]
    f10 = plane[:, y1i, x0i]
    f11 = plane[:, y1i, x1i]
    f = (f00 * (1 - wy) * (1 - wx) + f01 * (1 - wy) * wx
         + f10 * wy * (1 - wx) + f11 * wy * wx)        # (C, N)
    return f.T                                          # (N, C)


def triplane_features(planes, xyz, xyz_min, xyz_max):
    u = jnp.clip((xyz - xyz_min) / (xyz_max - xyz_min), 0.0, 1.0)
    f_xy = _bilinear_sample_plane(planes["xy"], u[:, 0], u[:, 1])
    f_xz = _bilinear_sample_plane(planes["xz"], u[:, 0], u[:, 2])
    f_yz = _bilinear_sample_plane(planes["yz"], u[:, 1], u[:, 2])
    return jnp.concatenate([f_xy, f_xz, f_yz], axis=-1)


def _mlp_ref(x, m):
    h = jnp.maximum(x @ m["w1"] + m["b1"], 0.0)
    h = jnp.maximum(h @ m["w2"] + m["b2"], 0.0)
    return h @ m["w3"] + m["b3"]


# ----------------------------------------------------------------------------
# FeaturePlanes (JAX): params + forward  (activate_level = 0, as in the module)
# ----------------------------------------------------------------------------
def _ceil_to(x, m):
    return ((x + m - 1) // m) * m


class FeaturePlanes:
    NUM_LEVELS = 3
    LEVEL_FACTOR = 0.5

    def __init__(self, world_size, xyz_min, xyz_max,
                 feat_dim=24, mlp_width=168, out_dim=53, key=None):
        self.xyz_min = jnp.asarray(xyz_min, jnp.float32)
        self.xyz_max = jnp.asarray(xyz_max, jnp.float32)
        self.feat_dim = feat_dim
        self.out_dim = out_dim
        self.activate_level = 0

        key = jax.random.PRNGKey(0) if key is None else key
        ws = np.asarray(world_size, np.float32)
        xyz_min_np = np.asarray(xyz_min, np.float32)
        xyz_max_np = np.asarray(xyz_max, np.float32)

        d_hid = _ceil_to(mlp_width, 128)      # 168 -> 256 (full MXU tiles)
        d_out_pad = _ceil_to(out_dim, 128)    # 53  -> 128 (lane-dense stores)

        self.levels = []          # raw f32 params (reference-equivalent)
        self.kernel_levels = []   # fused / padded bf16 params for the Pallas kernel
        names = ("xy", "xz", "yz")
        axes = ((0, 1), (0, 2), (1, 2))

        for i in range(self.NUM_LEVELS):
            cur_ws = (ws * self.LEVEL_FACTOR ** (self.NUM_LEVELS - i - 1)).astype(np.int32)
            cur_ws = np.maximum(cur_ws, 2).tolist()

            key, k1, k2, k3 = jax.random.split(key, 4)
            planes = {
                "xy": 0.1 * jax.random.normal(k1, (feat_dim, cur_ws[0], cur_ws[1]), jnp.float32),
                "xz": 0.1 * jax.random.normal(k2, (feat_dim, cur_ws[0], cur_ws[2]), jnp.float32),
                "yz": 0.1 * jax.random.normal(k3, (feat_dim, cur_ws[1], cur_ws[2]), jnp.float32),
            }
            d_in = 3 * feat_dim
            key, kw1, kw2, kw3 = jax.random.split(key, 4)
            mlp = {
                "w1": jax.random.normal(kw1, (d_in, mlp_width), jnp.float32) / np.sqrt(d_in),
                "b1": jnp.zeros((1, mlp_width), jnp.float32),
                "w2": jax.random.normal(kw2, (mlp_width, mlp_width), jnp.float32) / np.sqrt(mlp_width),
                "b2": jnp.zeros((1, mlp_width), jnp.float32),
                "w3": jax.random.normal(kw3, (mlp_width, out_dim), jnp.float32) / np.sqrt(mlp_width),
                "b3": jnp.zeros((1, out_dim), jnp.float32),
            }
            self.levels.append({"planes": planes, "mlp": mlp, "world_size": cur_ws})

            # --- fold plane values into layer-1 weights (exact: both are linear maps) ---
            g = {}
            plane_dims = []
            for j, (name, _ab) in enumerate(zip(names, axes)):
                plane = planes[name]                              # (C, H, W)
                _, ha, wb = plane.shape
                plane_dims.append((ha, wb))
                p_flat = plane.reshape(feat_dim, ha * wb).T       # (H*W, C)
                w1_chunk = mlp["w1"][j * feat_dim:(j + 1) * feat_dim, :]
                gj = p_flat @ w1_chunk                            # (H*W, mlp_width) f32
                gj = jnp.pad(gj, ((0, 0), (0, d_hid - mlp_width)))
                g[name] = gj.astype(jnp.bfloat16)

            w2p = (jnp.zeros((d_hid, d_hid), jnp.float32)
                   .at[:mlp_width, :mlp_width].set(mlp["w2"])).astype(jnp.bfloat16)
            w3p = (jnp.zeros((d_hid, d_out_pad), jnp.float32)
                   .at[:mlp_width, :out_dim].set(mlp["w3"])).astype(jnp.bfloat16)
            b1p = jnp.pad(mlp["b1"], ((0, 0), (0, d_hid - mlp_width)))
            b2p = jnp.pad(mlp["b2"], ((0, 0), (0, d_hid - mlp_width)))
            b3p = jnp.pad(mlp["b3"], ((0, 0), (0, d_out_pad - out_dim)))

            scales = tuple(float((cur_ws[k] - 1) / (xyz_max_np[k] - xyz_min_np[k]))
                           for k in range(3))
            offsets = tuple(float(-xyz_min_np[k] * scales[k]) for k in range(3))

            self.kernel_levels.append({
                "g_xy": g["xy"], "g_xz": g["xz"], "g_yz": g["yz"],
                "b1": b1p, "w2": w2p, "b2": b2p, "w3": w3p, "b3": b3p,
                "plane_dims": tuple(plane_dims),
                "scales": scales, "offsets": offsets,
                "out_dim": out_dim,
            })

    def __call__(self, xyz, Q=0):
        # Only levels 0..activate_level participate (default: level 0 only).
        res = None
        for i in range(self.activate_level + 1):
            rr = triplane_mlp_forward(xyz, self.kernel_levels[i])
            res = rr if res is None else res + rr
        return res


if __name__ == "__main__":
    key = jax.random.PRNGKey(0)
    world_size = [16, 16, 16]
    xyz_min = [-1.0, -1.0, -1.0]
    xyz_max = [1.0, 1.0, 1.0]

    model = FeaturePlanes(world_size, xyz_min, xyz_max,
                          feat_dim=24, mlp_width=168, out_dim=53, key=key)

    key, kx = jax.random.split(key)
    n_points = 256
    xyz = jax.random.uniform(kx, (n_points, 3), jnp.float32, minval=-1.0, maxval=1.0)

    out = jax.block_until_ready(model(xyz))
    assert out.shape == (n_points, 53), out.shape

    # Correctness spot-check vs. an unfused f32 reference (bf16 matmuls -> loose tol).
    lvl = model.levels[0]
    feat = triplane_features(lvl["planes"], xyz, model.xyz_min, model.xyz_max)
    ref = _mlp_ref(feat, lvl["mlp"])
    np.testing.assert_allclose(np.asarray(out), np.asarray(ref), rtol=5e-2, atol=1e-2)

    # Ragged-N path (grid = cdiv, last tile partially filled).
    xyz2 = xyz[:200]
    out2 = jax.block_until_ready(model(xyz2))
    ref2 = _mlp_ref(triplane_features(lvl["planes"], xyz2, model.xyz_min, model.xyz_max),
                    lvl["mlp"])
    np.testing.assert_allclose(np.asarray(out2), np.asarray(ref2), rtol=5e-2, atol=1e-2)

    print("KERNEL_OK")
</pallas_src>

<mosaic_0001>
module attributes {stable_mosaic.version = 11 : i64} {
  func.func @_fused_triplane_mlp_kernel(%arg0: i32, %arg1: memref<128x3xf32, #tpu.memory_space<vmem>>, %arg2: memref<16x256xbf16, #tpu.memory_space<vmem>>, %arg3: memref<16x256xbf16, #tpu.memory_space<vmem>>, %arg4: memref<16x256xbf16, #tpu.memory_space<vmem>>, %arg5: memref<1x256xf32, #tpu.memory_space<vmem>>, %arg6: memref<256x256xbf16, #tpu.memory_space<vmem>>, %arg7: memref<1x256xf32, #tpu.memory_space<vmem>>, %arg8: memref<256x128xbf16, #tpu.memory_space<vmem>>, %arg9: memref<1x128xf32, #tpu.memory_space<vmem>>, %arg10: memref<128x128xf32, #tpu.memory_space<vmem>>) attributes {dimension_semantics = [#tpu.dimension_semantics<parallel>], iteration_bounds = array<i64: 2>, scalar_prefetch = 0 : i64, scratch_operands = 0 : i64, tpu.core_type = #tpu.core_type<tc>, window_params = [{transform_indices = @transform_0, window_bounds = array<i64: 128, 3>}, {pipeline_mode = #tpu.pipeline_mode<synchronous>, transform_indices = @transform_1, window_bounds = array<i64: 16, 256>}, {pipeline_mode = #tpu.pipeline_mode<synchronous>, transform_indices = @transform_2, window_bounds = array<i64: 16, 256>}, {pipeline_mode = #tpu.pipeline_mode<synchronous>, transform_indices = @transform_3, window_bounds = array<i64: 16, 256>}, {pipeline_mode = #tpu.pipeline_mode<synchronous>, transform_indices = @transform_4, window_bounds = array<i64: 1, 256>}, {pipeline_mode = #tpu.pipeline_mode<synchronous>, transform_indices = @transform_5, window_bounds = array<i64: 256, 256>}, {pipeline_mode = #tpu.pipeline_mode<synchronous>, transform_indices = @transform_6, window_bounds = array<i64: 1, 256>}, {pipeline_mode = #tpu.pipeline_mode<synchronous>, transform_indices = @transform_7, window_bounds = array<i64: 256, 128>}, {pipeline_mode = #tpu.pipeline_mode<synchronous>, transform_indices = @transform_8, window_bounds = array<i64: 1, 128>}, {transform_indices = @transform_9, window_bounds = array<i64: 128, 128>}]} {
    %c0 = arith.constant 0 : index
    %c0_0 = arith.constant 0 : index
    %0 = vector.load %arg1[%c0, %c0_0] : memref<128x3xf32, #tpu.memory_space<vmem>>, vector<128x3xf32>
    %1 = vector.extract_strided_slice %0 {offsets = [0, 0], sizes = [128, 1], strides = [1, 1]} : vector<128x3xf32> to vector<128x1xf32>
    %cst = arith.constant 1.500000e+00 : f32
    %2 = vector.broadcast %cst : f32 to vector<128x1xf32>
    %3 = arith.mulf %1, %2 : vector<128x1xf32>
    %cst_1 = arith.constant 1.500000e+00 : f32
    %4 = vector.broadcast %cst_1 : f32 to vector<128x1xf32>
    %5 = arith.addf %3, %4 : vector<128x1xf32>
    %cst_2 = arith.constant 0.000000e+00 : f32
    %cst_3 = arith.constant 3.000000e+00 : f32
    %6 = vector.broadcast %cst_2 : f32 to vector<128x1xf32>
    %7 = arith.maximumf %6, %5 : vector<128x1xf32>
    %8 = vector.broadcast %cst_3 : f32 to vector<128x1xf32>
    %9 = arith.minimumf %8, %7 : vector<128x1xf32>
    %10 = vector.extract_strided_slice %0 {offsets = [0, 1], sizes = [128, 1], strides = [1, 1]} : vector<128x3xf32> to vector<128x1xf32>
    %cst_4 = arith.constant 1.500000e+00 : f32
    %11 = vector.broadcast %cst_4 : f32 to vector<128x1xf32>
    %12 = arith.mulf %10, %11 : vector<128x1xf32>
    %cst_5 = arith.constant 1.500000e+00 : f32
    %13 = vector.broadcast %cst_5 : f32 to vector<128x1xf32>
    %14 = arith.addf %12, %13 : vector<128x1xf32>
    %cst_6 = arith.constant 0.000000e+00 : f32
    %cst_7 = arith.constant 3.000000e+00 : f32
    %15 = vector.broadcast %cst_6 : f32 to vector<128x1xf32>
    %16 = arith.maximumf %15, %14 : vector<128x1xf32>
    %17 = vector.broadcast %cst_7 : f32 to vector<128x1xf32>
    %18 = arith.minimumf %17, %16 : vector<128x1xf32>
    %19 = vector.extract_strided_slice %0 {offsets = [0, 2], sizes = [128, 1], strides = [1, 1]} : vector<128x3xf32> to vector<128x1xf32>
    %cst_8 = arith.constant 1.500000e+00 : f32
    %20 = vector.broadcast %cst_8 : f32 to vector<128x1xf32>
    %21 = arith.mulf %19, %20 : vector<128x1xf32>
    %cst_9 = arith.constant 1.500000e+00 : f32
    %22 = vector.broadcast %cst_9 : f32 to vector<128x1xf32>
    %23 = arith.addf %21, %22 : vector<128x1xf32>
    %cst_10 = arith.constant 0.000000e+00 : f32
    %cst_11 = arith.constant 3.000000e+00 : f32
    %24 = vector.broadcast %cst_10 : f32 to vector<128x1xf32>
    %25 = arith.maximumf %24, %23 : vector<128x1xf32>
    %26 = vector.broadcast %cst_11 : f32 to vector<128x1xf32>
    %27 = arith.minimumf %26, %25 : vector<128x1xf32>
    %28 = math.floor %9 : vector<128x1xf32>
    %29 = math.floor %18 : vector<128x1xf32>
    %30 = arith.subf %9, %28 : vector<128x1xf32>
    %31 = arith.subf %18, %29 : vector<128x1xf32>
    %32 = arith.fptosi %28 : vector<128x1xf32> to vector<128x1xi32>
    %c0_i32 = arith.constant 0 : i32
    %c3_i32 = arith.constant 3 : i32
    %33 = vector.broadcast %c0_i32 : i32 to vector<128x1xi32>
    %34 = arith.maxsi %33, %32 : vector<128x1xi32>
    %35 = vector.broadcast %c3_i32 : i32 to vector<128x1xi32>
    %36 = arith.minsi %35, %34 : vector<128x1xi32>
    %37 = arith.fptosi %29 : vector<128x1xf32> to vector<128x1xi32>
    %c0_i32_12 = arith.constant 0 : i32
    %c3_i32_13 = arith.constant 3 : i32
    %38 = vector.broadcast %c0_i32_12 : i32 to vector<128x1xi32>
    %39 = arith.maxsi %38, %37 : vector<128x1xi32>
    %40 = vector.broadcast %c3_i32_13 : i32 to vector<128x1xi32>
    %41 = arith.minsi %40, %39 : vector<128x1xi32>
    %c1_i32 = arith.constant 1 : i32
    %42 = vector.broadcast %c1_i32 : i32 to vector<128x1xi32>
    %43 = arith.addi %36, %42 : vector<128x1xi32>
    %c3_i32_14 = arith.constant 3 : i32
    %44 = vector.broadcast %c3_i32_14 : i32 to vector<128x1xi32>
    %45 = arith.minsi %43, %44 : vector<128x1xi32>
    %c1_i32_15 = arith.constant 1 : i32
    %46 = vector.broadcast %c1_i32_15 : i32 to vector<128x1xi32>
    %47 = arith.addi %41, %46 : vector<128x1xi32>
    %c3_i32_16 = arith.constant 3 : i32
    %48 = vector.broadcast %c3_i32_16 : i32 to vector<128x1xi32>
    %49 = arith.minsi %47, %48 : vector<128x1xi32>
    %50 = tpu.iota {dimensions = array<i32: 1>} : vector<128x16xi32>
    %cst_17 = arith.constant 1.000000e+00 : f32
    %51 = vector.broadcast %cst_17 : f32 to vector<128x1xf32>
    %52 = arith.subf %51, %30 : vector<128x1xf32>
    %cst_18 = arith.constant 1.000000e+00 : f32
    %53 = vector.broadcast %cst_18 : f32 to vector<128x1xf32>
    %54 = arith.subf %53, %31 : vector<128x1xf32>
    %55 = arith.mulf %52, %54 : vector<128x1xf32>
    %c4_i32 = arith.constant 4 : i32
    %56 = vector.broadcast %c4_i32 : i32 to vector<128x1xi32>
    %57 = arith.muli %36, %56 : vector<128x1xi32>
    %58 = arith.addi %57, %41 : vector<128x1xi32>
    %59 = vector.broadcast %58 : vector<128x1xi32> to vector<128x16xi32>
    %60 = arith.cmpi eq, %50, %59 : vector<128x16xi32>
    %61 = arith.extui %60 : vector<128x16xi1> to vector<128x16xi32>
    %62 = arith.sitofp %61 : vector<128x16xi32> to vector<128x16xf32>
    %63 = vector.broadcast %55 : vector<128x1xf32> to vector<128x16xf32>
    %64 = arith.mulf %62, %63 : vector<128x16xf32>
    %cst_19 = arith.constant 1.000000e+00 : f32
    %65 = vector.broadcast %cst_19 : f32 to vector<128x1xf32>
    %66 = arith.subf %65, %30 : vector<128x1xf32>
    %67 = arith.mulf %66, %31 : vector<128x1xf32>
    %c4_i32_20 = arith.constant 4 : i32
    %68 = vector.broadcast %c4_i32_20 : i32 to vector<128x1xi32>
    %69 = arith.muli %36, %68 : vector<128x1xi32>
    %70 = arith.addi %69, %49 : vector<128x1xi32>
    %71 = vector.broadcast %70 : vector<128x1xi32> to vector<128x16xi32>
    %72 = arith.cmpi eq, %50, %71 : vector<128x16xi32>
    %73 = arith.extui %72 : vector<128x16xi1> to vector<128x16xi32>
    %74 = arith.sitofp %73 : vector<128x16xi32> to vector<128x16xf32>
    %75 = vector.broadcast %67 : vector<128x1xf32> to vector<128x16xf32>
    %76 = arith.mulf %74, %75 : vector<128x16xf32>
    %77 = arith.addf %64, %76 : vector<128x16xf32>
    %cst_21 = arith.constant 1.000000e+00 : f32
    %78 = vector.broadcast %cst_21 : f32 to vector<128x1xf32>
    %79 = arith.subf %78, %31 : vector<128x1xf32>
    %80 = arith.mulf %30, %79 : vector<128x1xf32>
    %c4_i32_22 = arith.constant 4 : i32
    %81 = vector.broadcast %c4_i32_22 : i32 to vector<128x1xi32>
    %82 = arith.muli %45, %81 : vector<128x1xi32>
    %83 = arith.addi %82, %41 : vector<128x1xi32>
    %84 = vector.broadcast %83 : vector<128x1xi32> to vector<128x16xi32>
    %85 = arith.cmpi eq, %50, %84 : vector<128x16xi32>
    %86 = arith.extui %85 : vector<128x16xi1> to vector<128x16xi32>
    %87 = arith.sitofp %86 : vector<128x16xi32> to vector<128x16xf32>
    %88 = vector.broadcast %80 : vector<128x1xf32> to vector<128x16xf32>
    %89 = arith.mulf %87, %88 : vector<128x16xf32>
    %90 = arith.addf %77, %89 : vector<128x16xf32>
    %91 = arith.mulf %30, %31 : vector<128x1xf32>
    %c4_i32_23 = arith.constant 4 : i32
    %92 = vector.broadcast %c4_i32_23 : i32 to vector<128x1xi32>
    %93 = arith.muli %45, %92 : vector<128x1xi32>
    %94 = arith.addi %93, %49 : vector<128x1xi32>
    %95 = vector.broadcast %94 : vector<128x1xi32> to vector<128x16xi32>
    %96 = arith.cmpi eq, %50, %95 : vector<128x16xi32>
    %97 = arith.extui %96 : vector<128x16xi1> to vector<128x16xi32>
    %98 = arith.sitofp %97 : vector<128x16xi32> to vector<128x16xf32>
    %99 = vector.broadcast %91 : vector<128x1xf32> to vector<128x16xf32>
    %100 = arith.mulf %98, %99 : vector<128x16xf32>
    %101 = arith.addf %90, %100 : vector<128x16xf32>
    %102 = arith.truncf %101 : vector<128x16xf32> to vector<128x16xbf16>
    %103 = math.floor %9 : vector<128x1xf32>
    %104 = math.floor %27 : vector<128x1xf32>
    %105 = arith.subf %9, %103 : vector<128x1xf32>
    %106 = arith.subf %27, %104 : vector<128x1xf32>
    %107 = arith.fptosi %103 : vector<128x1xf32> to vector<128x1xi32>
    %c0_i32_24 = arith.constant 0 : i32
    %c3_i32_25 = arith.constant 3 : i32
    %108 = vector.broadcast %c0_i32_24 : i32 to vector<128x1xi32>
    %109 = arith.maxsi %108, %107 : vector<128x1xi32>
    %110 = vector.broadcast %c3_i32_25 : i32 to vector<128x1xi32>
    %111 = arith.minsi %110, %109 : vector<128x1xi32>
    %112 = arith.fptosi %104 : vector<128x1xf32> to vector<128x1xi32>
    %c0_i32_26 = arith.constant 0 : i32
    %c3_i32_27 = arith.constant 3 : i32
    %113 = vector.broadcast %c0_i32_26 : i32 to vector<128x1xi32>
    %114 = arith.maxsi %113, %112 : vector<128x1xi32>
    %115 = vector.broadcast %c3_i32_27 : i32 to vector<128x1xi32>
    %116 = arith.minsi %115, %114 : vector<128x1xi32>
    %c1_i32_28 = arith.constant 1 : i32
    %117 = vector.broadcast %c1_i32_28 : i32 to vector<128x1xi32>
    %118 = arith.addi %111, %117 : vector<128x1xi32>
    %c3_i32_29 = arith.constant 3 : i32
    %119 = vector.broadcast %c3_i32_29 : i32 to vector<128x1xi32>
    %120 = arith.minsi %118, %119 : vector<128x1xi32>
    %c1_i32_30 = arith.constant 1 : i32
    %121 = vector.broadcast %c1_i32_30 : i32 to vector<128x1xi32>
    %122 = arith.addi %116, %121 : vector<128x1xi32>
    %c3_i32_31 = arith.constant 3 : i32
    %123 = vector.broadcast %c3_i32_31 : i32 to vector<128x1xi32>
    %124 = arith.minsi %122, %123 : vector<128x1xi32>
    %125 = tpu.iota {dimensions = array<i32: 1>} : vector<128x16xi32>
    %cst_32 = arith.constant 1.000000e+00 : f32
    %126 = vector.broadcast %cst_32 : f32 to vector<128x1xf32>
    %127 = arith.subf %126, %105 : vector<128x1xf32>
    %cst_33 = arith.constant 1.000000e+00 : f32
    %128 = vector.broadcast %cst_33 : f32 to vector<128x1xf32>
    %129 = arith.subf %128, %106 : vector<128x1xf32>
    %130 = arith.mulf %127, %129 : vector<128x1xf32>
    %c4_i32_34 = arith.constant 4 : i32
    %131 = vector.broadcast %c4_i32_34 : i32 to vector<128x1xi32>
    %132 = arith.muli %111, %131 : vector<128x1xi32>
    %133 = arith.addi %132, %116 : vector<128x1xi32>
    %134 = vector.broadcast %133 : vector<128x1xi32> to vector<128x16xi32>
    %135 = arith.cmpi eq, %125, %134 : vector<128x16xi32>
    %136 = arith.extui %135 : vector<128x16xi1> to vector<128x16xi32>
    %137 = arith.sitofp %136 : vector<128x16xi32> to vector<128x16xf32>
    %138 = vector.broadcast %130 : vector<128x1xf32> to vector<128x16xf32>
    %139 = arith.mulf %137, %138 : vector<128x16xf32>
    %cst_35 = arith.constant 1.000000e+00 : f32
    %140 = vector.broadcast %cst_35 : f32 to vector<128x1xf32>
    %141 = arith.subf %140, %105 : vector<128x1xf32>
    %142 = arith.mulf %141, %106 : vector<128x1xf32>
    %c4_i32_36 = arith.constant 4 : i32
    %143 = vector.broadcast %c4_i32_36 : i32 to vector<128x1xi32>
    %144 = arith.muli %111, %143 : vector<128x1xi32>
    %145 = arith.addi %144, %124 : vector<128x1xi32>
    %146 = vector.broadcast %145 : vector<128x1xi32> to vector<128x16xi32>
    %147 = arith.cmpi eq, %125, %146 : vector<128x16xi32>
    %148 = arith.extui %147 : vector<128x16xi1> to vector<128x16xi32>
    %149 = arith.sitofp %148 : vector<128x16xi32> to vector<128x16xf32>
    %150 = vector.broadcast %142 : vector<128x1xf32> to vector<128x16xf32>
    %151 = arith.mulf %149, %150 : vector<128x16xf32>
    %152 = arith.addf %139, %151 : vector<128x16xf32>
    %cst_37 = arith.constant 1.000000e+00 : f32
    %153 = vector.broadcast %cst_37 : f32 to vector<128x1xf32>
    %154 = arith.subf %153, %106 : vector<128x1xf32>
    %155 = arith.mulf %105, %154 : vector<128x1xf32>
    %c4_i32_38 = arith.constant 4 : i32
    %156 = vector.broadcast %c4_i32_38 : i32 to vector<128x1xi32>
    %157 = arith.muli %120, %156 : vector<128x1xi32>
    %158 = arith.addi %157, %116 : vector<128x1xi32>
    %159 = vector.broadcast %158 : vector<128x1xi32> to vector<128x16xi32>
    %160 = arith.cmpi eq, %125, %159 : vector<128x16xi32>
    %161 = arith.extui %160 : vector<128x16xi1> to vector<128x16xi32>
    %162 = arith.sitofp %161 : vector<128x16xi32> to vector<128x16xf32>
    %163 = vector.broadcast %155 : vector<128x1xf32> to vector<128x16xf32>
    %164 = arith.mulf %162, %163 : vector<128x16xf32>
    %165 = arith.addf %152, %164 : vector<128x16xf32>
    %166 = arith.mulf %105, %106 : vector<128x1xf32>
    %c4_i32_39 = arith.constant 4 : i32
    %167 = vector.broadcast %c4_i32_39 : i32 to vector<128x1xi32>
    %168 = arith.muli %120, %167 : vector<128x1xi32>
    %169 = arith.addi %168, %124 : vector<128x1xi32>
    %170 = vector.broadcast %169 : vector<128x1xi32> to vector<128x16xi32>
    %171 = arith.cmpi eq, %125, %170 : vector<128x16xi32>
    %172 = arith.extui %171 : vector<128x16xi1> to vector<128x16xi32>
    %173 = arith.sitofp %172 : vector<128x16xi32> to vector<128x16xf32>
    %174 = vector.broadcast %166 : vector<128x1xf32> to vector<128x16xf32>
    %175 = arith.mulf %173, %174 : vector<128x16xf32>
    %176 = arith.addf %165, %175 : vector<128x16xf32>
    %177 = arith.truncf %176 : vector<128x16xf32> to vector<128x16xbf16>
    %178 = math.floor %18 : vector<128x1xf32>
    %179 = math.floor %27 : vector<128x1xf32>
    %180 = arith.subf %18, %178 : vector<128x1xf32>
    %181 = arith.subf %27, %179 : vector<128x1xf32>
    %182 = arith.fptosi %178 : vector<128x1xf32> to vector<128x1xi32>
    %c0_i32_40 = arith.constant 0 : i32
    %c3_i32_41 = arith.constant 3 : i32
    %183 = vector.broadcast %c0_i32_40 : i32 to vector<128x1xi32>
    %184 = arith.maxsi %183, %182 : vector<128x1xi32>
    %185 = vector.broadcast %c3_i32_41 : i32 to vector<128x1xi32>
    %186 = arith.minsi %185, %184 : vector<128x1xi32>
    %187 = arith.fptosi %179 : vector<128x1xf32> to vector<128x1xi32>
    %c0_i32_42 = arith.constant 0 : i32
    %c3_i32_43 = arith.constant 3 : i32
    %188 = vector.broadcast %c0_i32_42 : i32 to vector<128x1xi32>
    %189 = arith.maxsi %188, %187 : vector<128x1xi32>
    %190 = vector.broadcast %c3_i32_43 : i32 to vector<128x1xi32>
    %191 = arith.minsi %190, %189 : vector<128x1xi32>
    %c1_i32_44 = arith.constant 1 : i32
    %192 = vector.broadcast %c1_i32_44 : i32 to vector<128x1xi32>
    %193 = arith.addi %186, %192 : vector<128x1xi32>
    %c3_i32_45 = arith.constant 3 : i32
    %194 = vector.broadcast %c3_i32_45 : i32 to vector<128x1xi32>
    %195 = arith.minsi %193, %194 : vector<128x1xi32>
    %c1_i32_46 = arith.constant 1 : i32
    %196 = vector.broadcast %c1_i32_46 : i32 to vector<128x1xi32>
    %197 = arith.addi %191, %196 : vector<128x1xi32>
    %c3_i32_47 = arith.constant 3 : i32
    %198 = vector.broadcast %c3_i32_47 : i32 to vector<128x1xi32>
    %199 = arith.minsi %197, %198 : vector<128x1xi32>
    %200 = tpu.iota {dimensions = array<i32: 1>} : vector<128x16xi32>
    %cst_48 = arith.constant 1.000000e+00 : f32
    %201 = vector.broadcast %cst_48 : f32 to vector<128x1xf32>
    %202 = arith.subf %201, %180 : vector<128x1xf32>
    %cst_49 = arith.constant 1.000000e+00 : f32
    %203 = vector.broadcast %cst_49 : f32 to vector<128x1xf32>
    %204 = arith.subf %203, %181 : vector<128x1xf32>
    %205 = arith.mulf %202, %204 : vector<128x1xf32>
    %c4_i32_50 = arith.constant 4 : i32
    %206 = vector.broadcast %c4_i32_50 : i32 to vector<128x1xi32>
    %207 = arith.muli %186, %206 : vector<128x1xi32>
    %208 = arith.addi %207, %191 : vector<128x1xi32>
    %209 = vector.broadcast %208 : vector<128x1xi32> to vector<128x16xi32>
    %210 = arith.cmpi eq, %200, %209 : vector<128x16xi32>
    %211 = arith.extui %210 : vector<128x16xi1> to vector<128x16xi32>
    %212 = arith.sitofp %211 : vector<128x16xi32> to vector<128x16xf32>
    %213 = vector.broadcast %205 : vector<128x1xf32> to vector<128x16xf32>
    %214 = arith.mulf %212, %213 : vector<128x16xf32>
    %cst_51 = arith.constant 1.000000e+00 : f32
    %215 = vector.broadcast %cst_51 : f32 to vector<128x1xf32>
    %216 = arith.subf %215, %180 : vector<128x1xf32>
    %217 = arith.mulf %216, %181 : vector<128x1xf32>
    %c4_i32_52 = arith.constant 4 : i32
    %218 = vector.broadcast %c4_i32_52 : i32 to vector<128x1xi32>
    %219 = arith.muli %186, %218 : vector<128x1xi32>
    %220 = arith.addi %219, %199 : vector<128x1xi32>
    %221 = vector.broadcast %220 : vector<128x1xi32> to vector<128x16xi32>
    %222 = arith.cmpi eq, %200, %221 : vector<128x16xi32>
    %223 = arith.extui %222 : vector<128x16xi1> to vector<128x16xi32>
    %224 = arith.sitofp %223 : vector<128x16xi32> to vector<128x16xf32>
    %225 = vector.broadcast %217 : vector<128x1xf32> to vector<128x16xf32>
    %226 = arith.mulf %224, %225 : vector<128x16xf32>
    %227 = arith.addf %214, %226 : vector<128x16xf32>
    %cst_53 = arith.constant 1.000000e+00 : f32
    %228 = vector.broadcast %cst_53 : f32 to vector<128x1xf32>
    %229 = arith.subf %228, %181 : vector<128x1xf32>
    %230 = arith.mulf %180, %229 : vector<128x1xf32>
    %c4_i32_54 = arith.constant 4 : i32
    %231 = vector.broadcast %c4_i32_54 : i32 to vector<128x1xi32>
    %232 = arith.muli %195, %231 : vector<128x1xi32>
    %233 = arith.addi %232, %191 : vector<128x1xi32>
    %234 = vector.broadcast %233 : vector<128x1xi32> to vector<128x16xi32>
    %235 = arith.cmpi eq, %200, %234 : vector<128x16xi32>
    %236 = arith.extui %235 : vector<128x16xi1> to vector<128x16xi32>
    %237 = arith.sitofp %236 : vector<128x16xi32> to vector<128x16xf32>
    %238 = vector.broadcast %230 : vector<128x1xf32> to vector<128x16xf32>
    %239 = arith.mulf %237, %238 : vector<128x16xf32>
    %240 = arith.addf %227, %239 : vector<128x16xf32>
    %241 = arith.mulf %180, %181 : vector<128x1xf32>
    %c4_i32_55 = arith.constant 4 : i32
    %242 = vector.broadcast %c4_i32_55 : i32 to vector<128x1xi32>
    %243 = arith.muli %195, %242 : vector<128x1xi32>
    %244 = arith.addi %243, %199 : vector<128x1xi32>
    %245 = vector.broadcast %244 : vector<128x1xi32> to vector<128x16xi32>
    %246 = arith.cmpi eq, %200, %245 : vector<128x16xi32>
    %247 = arith.extui %246 : vector<128x16xi1> to vector<128x16xi32>
    %248 = arith.sitofp %247 : vector<128x16xi32> to vector<128x16xf32>
    %249 = vector.broadcast %241 : vector<128x1xf32> to vector<128x16xf32>
    %250 = arith.mulf %248, %249 : vector<128x16xf32>
    %251 = arith.addf %240, %250 : vector<128x16xf32>
    %252 = arith.truncf %251 : vector<128x16xf32> to vector<128x16xbf16>
    %c0_56 = arith.constant 0 : index
    %c0_57 = arith.constant 0 : index
    %253 = vector.load %arg2[%c0_56, %c0_57] : memref<16x256xbf16, #tpu.memory_space<vmem>>, vector<16x256xbf16>
    %cst_58 = arith.constant dense<0.000000e+00> : vector<128x256xf32>
    %254 = tpu.matmul %102, %253, %cst_58 {dimension_numbers = #tpu.dot_dimension_numbers<[1], [0], [0], [1], [0, 0, 1, 1], [], []>} : vector<128x16xbf16>, vector<16x256xbf16>, vector<128x256xf32> -> vector<128x256xf32>
    %c0_59 = arith.constant 0 : index
    %c0_60 = arith.constant 0 : index
    %255 = vector.load %arg3[%c0_59, %c0_60] : memref<16x256xbf16, #tpu.memory_space<vmem>>, vector<16x256xbf16>
    %cst_61 = arith.constant dense<0.000000e+00> : vector<128x256xf32>
    %256 = tpu.matmul %177, %255, %cst_61 {dimension_numbers = #tpu.dot_dimension_numbers<[1], [0], [0], [1], [0, 0, 1, 1], [], []>} : vector<128x16xbf16>, vector<16x256xbf16>, vector<128x256xf32> -> vector<128x256xf32>
    %257 = arith.addf %254, %256 : vector<128x256xf32>
    %c0_62 = arith.constant 0 : index
    %c0_63 = arith.constant 0 : index
    %258 = vector.load %arg4[%c0_62, %c0_63] : memref<16x256xbf16, #tpu.memory_space<vmem>>, vector<16x256xbf16>
    %cst_64 = arith.constant dense<0.000000e+00> : vector<128x256xf32>
    %259 = tpu.matmul %252, %258, %cst_64 {dimension_numbers = #tpu.dot_dimension_numbers<[1], [0], [0], [1], [0, 0, 1, 1], [], []>} : vector<128x16xbf16>, vector<16x256xbf16>, vector<128x256xf32> -> vector<128x256xf32>
    %260 = arith.addf %257, %259 : vector<128x256xf32>
    %c0_65 = arith.constant 0 : index
    %c0_66 = arith.constant 0 : index
    %261 = vector.load %arg5[%c0_65, %c0_66] : memref<1x256xf32, #tpu.memory_space<vmem>>, vector<1x256xf32>
    %262 = vector.broadcast %261 : vector<1x256xf32> to vector<128x256xf32>
    %263 = arith.addf %260, %262 : vector<128x256xf32>
    %cst_67 = arith.constant 0.000000e+00 : f32
    %264 = vector.broadcast %cst_67 : f32 to vector<128x256xf32>
    %265 = arith.maximumf %263, %264 : vector<128x256xf32>
    %266 = arith.truncf %265 : vector<128x256xf32> to vector<128x256xbf16>
    %c0_68 = arith.constant 0 : index
    %c0_69 = arith.constant 0 : index
    %267 = vector.load %arg6[%c0_68, %c0_69] : memref<256x256xbf16, #tpu.memory_space<vmem>>, vector<256x256xbf16>
    %cst_70 = arith.constant dense<0.000000e+00> : vector<128x256xf32>
    %268 = tpu.matmul %266, %267, %cst_70 {dimension_numbers = #tpu.dot_dimension_numbers<[1], [0], [0], [1], [0, 0, 1, 1], [], []>} : vector<128x256xbf16>, vector<256x256xbf16>, vector<128x256xf32> -> vector<128x256xf32>
    %c0_71 = arith.constant 0 : index
    %c0_72 = arith.constant 0 : index
    %269 = vector.load %arg7[%c0_71, %c0_72] : memref<1x256xf32, #tpu.memory_space<vmem>>, vector<1x256xf32>
    %270 = vector.broadcast %269 : vector<1x256xf32> to vector<128x256xf32>
    %271 = arith.addf %268, %270 : vector<128x256xf32>
    %cst_73 = arith.constant 0.000000e+00 : f32
    %272 = vector.broadcast %cst_73 : f32 to vector<128x256xf32>
    %273 = arith.maximumf %271, %272 : vector<128x256xf32>
    %274 = arith.truncf %273 : vector<128x256xf32> to vector<128x256xbf16>
    %c0_74 = arith.constant 0 : index
    %c0_75 = arith.constant 0 : index
    %275 = vector.load %arg8[%c0_74, %c0_75] : memref<256x128xbf16, #tpu.memory_space<vmem>>, vector<256x128xbf16>
    %cst_76 = arith.constant dense<0.000000e+00> : vector<128x128xf32>
    %276 = tpu.matmul %274, %275, %cst_76 {dimension_numbers = #tpu.dot_dimension_numbers<[1], [0], [0], [1], [0, 0, 1, 1], [], []>} : vector<128x256xbf16>, vector<256x128xbf16>, vector<128x128xf32> -> vector<128x128xf32>
    %c0_77 = arith.constant 0 : index
    %c0_78 = arith.constant 0 : index
    %277 = vector.load %arg9[%c0_77, %c0_78] : memref<1x128xf32, #tpu.memory_space<vmem>>, vector<1x128xf32>
    %278 = vector.broadcast %277 : vector<1x128xf32> to vector<128x128xf32>
    %279 = arith.addf %276, %278 : vector<128x128xf32>
    %c0_79 = arith.constant 0 : index
    %c0_80 = arith.constant 0 : index
    %280 = vector.load %arg10[%c0_79, %c0_80] : memref<128x128xf32, #tpu.memory_space<vmem>>, vector<128x128xf32>
    tpu.vector_store %arg10[%c0_79, %c0_80], %279 {strides = array<i32>} : memref<128x128xf32, #tpu.memory_space<vmem>>, vector<128x128xf32>,
    return
  }
  func.func @transform_0(%arg0: i32) -> (i32, i32) {
    %c0_i32 = arith.constant 0 : i32
    %c0_i32_0 = arith.constant 0 : i32
    return %arg0, %c0_i32 : i32, i32
  }
  func.func @transform_1(%arg0: i32) -> (i32, i32) {
    %c0_i32 = arith.constant 0 : i32
    %c0_i32_0 = arith.constant 0 : i32
    %c0_i32_1 = arith.constant 0 : i32
    return %c0_i32, %c0_i32_0 : i32, i32
  }
  func.func @transform_2(%arg0: i32) -> (i32, i32) {
    %c0_i32 = arith.constant 0 : i32
    %c0_i32_0 = arith.constant 0 : i32
    %c0_i32_1 = arith.constant 0 : i32
    return %c0_i32, %c0_i32_0 : i32, i32
  }
  func.func @transform_3(%arg0: i32) -> (i32, i32) {
    %c0_i32 = arith.constant 0 : i32
    %c0_i32_0 = arith.constant 0 : i32
    %c0_i32_1 = arith.constant 0 : i32
    return %c0_i32, %c0_i32_0 : i32, i32
  }
  func.func @transform_4(%arg0: i32) -> (i32, i32) {
    %c0_i32 = arith.constant 0 : i32
    %c0_i32_0 = arith.constant 0 : i32
    %c0_i32_1 = arith.constant 0 : i32
    return %c0_i32, %c0_i32_0 : i32, i32
  }
  func.func @transform_5(%arg0: i32) -> (i32, i32) {
    %c0_i32 = arith.constant 0 : i32
    %c0_i32_0 = arith.constant 0 : i32
    %c0_i32_1 = arith.constant 0 : i32
    return %c0_i32, %c0_i32_0 : i32, i32
  }
  func.func @transform_6(%arg0: i32) -> (i32, i32) {
    %c0_i32 = arith.constant 0 : i32
    %c0_i32_0 = arith.constant 0 : i32
    %c0_i32_1 = arith.constant 0 : i32
    return %c0_i32, %c0_i32_0 : i32, i32
  }
  func.func @transform_7(%arg0: i32) -> (i32, i32) {
    %c0_i32 = arith.constant 0 : i32
    %c0_i32_0 = arith.constant 0 : i32
    %c0_i32_1 = arith.constant 0 : i32
    return %c0_i32, %c0_i32_0 : i32, i32
  }
  func.func @transform_8(%arg0: i32) -> (i32, i32) {
    %c0_i32 = arith.constant 0 : i32
    %c0_i32_0 = arith.constant 0 : i32
    %c0_i32_1 = arith.constant 0 : i32
    return %c0_i32, %c0_i32_0 : i32, i32
  }
  func.func @transform_9(%arg0: i32) -> (i32, i32) {
    %c0_i32 = arith.constant 0 : i32
    %c0_i32_0 = arith.constant 0 : i32
    return %arg0, %c0_i32 : i32, i32
  }
}

</mosaic_0001>

<llo_original>
// kernel: tpu_custom_call.1
$region0: #{tpu_custom_call.1}
  #allocation0 [shape = 'u32[]', space=smem, size = 0x4, offset = 0x4, fixed_abs, tag = 'smem constant byte address 0x4 - core index']
  #allocation1 [shape = 'u32[144,128]{1,0:T(1,128)}', space=vmem, size = 0x12000, scoped, tag = 'internal scratch']
  %s0 = inlined_call_operand.vmem [shape: f32[256,3], index: 0, kind: input, shape index: {}]
  %s1 = inlined_call_operand.vmem [shape: bf16[16,256], index: 1, kind: input, shape index: {}]
  %s2 = inlined_call_operand.hbm [shape: bf16[16,256], index: 2, kind: input, shape index: {}]
  %s3 = inlined_call_operand.hbm [shape: bf16[16,256], index: 3, kind: input, shape index: {}]
  %s4 = inlined_call_operand.vmem [shape: f32[1,256], index: 4, kind: input, shape index: {}]
  %s5 = inlined_call_operand.vmem [shape: bf16[256,256], index: 5, kind: input, shape index: {}]
  %s6 = inlined_call_operand.vmem [shape: f32[1,256], index: 6, kind: input, shape index: {}]
  %s7 = inlined_call_operand.hbm [shape: bf16[256,128], index: 7, kind: input, shape index: {}]
  %s8 = inlined_call_operand.vmem [shape: f32[1,128], index: 8, kind: input, shape index: {}]
  %s9 = inlined_call_operand.hbm [shape: f32[256,128], index: 9, kind: output, shape index: {}]
  %s10 = sld [smem:[#allocation0]]
  $region81: #{tpu_custom_call.1} parent=0
    _
  %s12 = ssub.s32 1, %s10
  %s13 = scalar_select 0, %s12, %s10
  $region1: #{tpu_custom_call.1} parent=0
    #allocation2 [shape = 'u8[8192]{0}', space=vmem, size = 0x2000, scoped, tag = 'input window, operand 2, single buffered']
    #allocation3 [shape = 's32[2]{0}', space=sflag, size = 0x8, scoped, tag = 'scoped memory for tpu_custom_call.1']
    #allocation4 [shape = 's32[2]{0}', space=sflag, size = 0x8, scoped, tag = 'scoped memory for tpu_custom_call.1']
    #allocation5 [shape = 'u8[8192]{0}', space=vmem, size = 0x2000, scoped, tag = 'input window, operand 3, single buffered']
    #allocation6 [shape = 's32[1]{0}', space=sflag, size = 0x4, scoped, tag = 'scoped memory for tpu_custom_call.1']
    #allocation7 [shape = 'u8[65536]{0}', space=vmem, size = 0x10000, scoped, tag = 'input window, operand 7, single buffered']
    #allocation8 [shape = 'u8[131072]{0}', space=vmem, size = 0x20000, scoped, tag = 'output window, operand 0']
    %14 = vsyncpa [#allocation3], 0
    %15 = vsyncpa [#allocation6], 0
    %16 = vsyncpa [#allocation4], 0
    %s17 = scalar_lea.sflag [#allocation4], 1
    %18 = vsyncpa %s17, 0
    loop: start=0, step=1, limit=4
    $region2: #{tpu_custom_call.1} parent=1 // loop_pre_header
      _
    $region3: #{tpu_custom_call.1} parent=1 // loop_header
      %s20 = sphi 0, %s24
      %p21 = scmp.ge.s32.totalorder %s20, 4
      %s30 = sphi 0, %s32
      %s33 = sphi 0, %s30
      %s34 = sphi 0, %s33
      %s50 = sphi 0, %s34
      %s54 = sphi 0, %s54
      %s56 = sphi 0, %s54
      %s57 = sphi 0, %s56
      %s71 = sphi 0, %s57
      %s75 = sphi 0, %s75
      %s77 = sphi 0, %s75
      %s78 = sphi 0, %s77
      %s92 = sphi 0, %s78
      %s96 = sphi 0, %s96
      %s98 = sphi 0, %s96
      %s99 = sphi 0, %s98
      %s113 = sphi 0, %s99
      %s117 = sphi 0, %s117
      %s119 = sphi 0, %s117
      %s120 = sphi 0, %s119
      %s134 = sphi 0, %s120
      %s138 = sphi 0, %s138
      %s140 = sphi 0, %s138
      %s141 = sphi 0, %s140
      %s155 = sphi 0, %s141
      %s159 = sphi 0, %s159
      %s161 = sphi 0, %s159
      %s162 = sphi 0, %s161
      %s176 = sphi 0, %s162
      %s180 = sphi 0, %s180
      %s182 = sphi 0, %s180
      %s183 = sphi 0, %s182
      %s197 = sphi 0, %s183
      %s201 = sphi 0, %s201
      %s203 = sphi 0, %s201
      %s204 = sphi 0, %s203
      %s218 = sphi 0, %s204
      %s224 = sphi 0, %s226
      %s227 = sphi 0, %s224
      %s228 = sphi 0, %s227
      %s244 = sphi 0, %s228
    $region4: #{tpu_custom_call.1} parent=1 // loop_header_branch
      %23 = sbr.rel (%p21) target = $region8
    $region5: #{tpu_custom_call.1} parent=1 // loop_body
      %s25 = ssub.s32 %s20, 1
      %s26 = ssub.s32 %s20, 2
      %s27 = sadd.s32 %s20, 1
      %s28 = ssub.s32 %s20, %s27
      %p29 = scmp.eq.s32.totalorder %s28, 0
      %s31 = sadd.s32 %s30, 1
      %s32 = scalar_select %p29, %s30, %s31
      %p35 = pneg %p29
      %p36 = scmp.eq.s32.totalorder %s20, 1
      %p37 = por %p35, %p36
      %p38 = scmp.ne.s32.totalorder %s30, %s33
      %p39 = scmp.eq.s32.totalorder %s20, 0
      %p40 = por %p38, %p39
      %p41 = scmp.ne.s32.totalorder %s30, %s33
      %p42 = scmp.eq.s32.totalorder %s25, 1
      %p43 = por %p41, %p42
      %p44 = scmp.ne.s32.totalorder %s33, %s34
      %p45 = scmp.eq.s32.totalorder %s25, 0
      %p46 = por %p44, %p45
      %p47 = scmp.ne.s32.totalorder %s33, %s34
      %p48 = scmp.eq.s32.totalorder %s26, 1
      %p49 = por %p47, %p48
      %p51 = scmp.ne.s32.totalorder %s34, %s50
      %p52 = scmp.eq.s32.totalorder %s26, 0
      %p53 = por %p51, %p52
      %s55 = sadd.s32 %s54, 1
      %p58 = scmp.eq.s32.totalorder %s20, 1
      %p59 = scmp.ne.s32.totalorder %s54, %s56
      %p60 = scmp.eq.s32.totalorder %s20, 0
      %p61 = por %p59, %p60
      %p62 = scmp.ne.s32.totalorder %s54, %s56
      %p63 = scmp.eq.s32.totalorder %s25, 1
      %p64 = por %p62, %p63
      %p65 = scmp.ne.s32.totalorder %s56, %s57
      %p66 = scmp.eq.s32.totalorder %s25, 0
      %p67 = por %p65, %p66
      %p68 = scmp.ne.s32.totalorder %s56, %s57
      %p69 = scmp.eq.s32.totalorder %s26, 1
      %p70 = por %p68, %p69
      %p72 = scmp.ne.s32.totalorder %s57, %s71
      %p73 = scmp.eq.s32.totalorder %s26, 0
      %p74 = por %p72, %p73
      %s76 = sadd.s32 %s75, 1
      %p79 = scmp.eq.s32.totalorder %s20, 1
      %p80 = scmp.ne.s32.totalorder %s75, %s77
      %p81 = scmp.eq.s32.totalorder %s20, 0
      %p82 = por %p80, %p81
      %p83 = scmp.ne.s32.totalorder %s75, %s77
      %p84 = scmp.eq.s32.totalorder %s25, 1
      %p85 = por %p83, %p84
      %p86 = scmp.ne.s32.totalorder %s77, %s78
      %p87 = scmp.eq.s32.totalorder %s25, 0
      %p88 = por %p86, %p87
      %p89 = scmp.ne.s32.totalorder %s77, %s78
      %p90 = scmp.eq.s32.totalorder %s26, 1
      %p91 = por %p89, %p90
      %p93 = scmp.ne.s32.totalorder %s78, %s92
      %p94 = scmp.eq.s32.totalorder %s26, 0
      %p95 = por %p93, %p94
      %s97 = sadd.s32 %s96, 1
      %p100 = scmp.eq.s32.totalorder %s20, 1
      %p101 = scmp.ne.s32.totalorder %s96, %s98
      %p102 = scmp.eq.s32.totalorder %s20, 0
      %p103 = por %p101, %p102
      %p104 = scmp.ne.s32.totalorder %s96, %s98
      %p105 = scmp.eq.s32.totalorder %s25, 1
      %p106 = por %p104, %p105
      %p107 = scmp.ne.s32.totalorder %s98, %s99
      %p108 = scmp.eq.s32.totalorder %s25, 0
      %p109 = por %p107, %p108
      %p110 = scmp.ne.s32.totalorder %s98, %s99
      %p111 = scmp.eq.s32.totalorder %s26, 1
      %p112 = por %p110, %p111
      %p114 = scmp.ne.s32.totalorder %s99, %s113
      %p115 = scmp.eq.s32.totalorder %s26, 0
      %p116 = por %p114, %p115
      %s118 = sadd.s32 %s117, 1
      %p121 = scmp.eq.s32.totalorder %s20, 1
      %p122 = scmp.ne.s32.totalorder %s117, %s119
      %p123 = scmp.eq.s32.totalorder %s20, 0
      %p124 = por %p122, %p123
      %p125 = scmp.ne.s32.totalorder %s117, %s119
      %p126 = scmp.eq.s32.totalorder %s25, 1
      %p127 = por %p125, %p126
      %p128 = scmp.ne.s32.totalorder %s119, %s120
      %p129 = scmp.eq.s32.totalorder %s25, 0
      %p130 = por %p128, %p129
      %p131 = scmp.ne.s32.totalorder %s119, %s120
      %p132 = scmp.eq.s32.totalorder %s26, 1
      %p133 = por %p131, %p132
      %p135 = scmp.ne.s32.totalorder %s120, %s134
      %p136 = scmp.eq.s32.totalorder %s26, 0
      %p137 = por %p135, %p136
      %s139 = sadd.s32 %s138, 1
      %p142 = scmp.eq.s32.totalorder %s20, 1
      %p143 = scmp.ne.s32.totalorder %s138, %s140
      %p144 = scmp.eq.s32.totalorder %s20, 0
      %p145 = por %p143, %p144
      %p146 = scmp.ne.s32.totalorder %s138, %s140
      %p147 = scmp.eq.s32.totalorder %s25, 1
      %p148 = por %p146, %p147
      %p149 = scmp.ne.s32.totalorder %s140, %s141
      %p150 = scmp.eq.s32.totalorder %s25, 0
      %p151 = por %p149, %p150
      %p152 = scmp.ne.s32.totalorder %s140, %s141
      %p153 = scmp.eq.s32.totalorder %s26, 1
      %p154 = por %p152, %p153
      %p156 = scmp.ne.s32.totalorder %s141, %s155
      %p157 = scmp.eq.s32.totalorder %s26, 0
      %p158 = por %p156, %p157
      %s160 = sadd.s32 %s159, 1
      %p163 = scmp.eq.s32.totalorder %s20, 1
      %p164 = scmp.ne.s32.totalorder %s159, %s161
      %p165 = scmp.eq.s32.totalorder %s20, 0
      %p166 = por %p164, %p165
      %p167 = scmp.ne.s32.totalorder %s159, %s161
      %p168 = scmp.eq.s32.totalorder %s25, 1
      %p169 = por %p167, %p168
      %p170 = scmp.ne.s32.totalorder %s161, %s162
      %p171 = scmp.eq.s32.totalorder %s25, 0
      %p172 = por %p170, %p171
      %p173 = scmp.ne.s32.totalorder %s161, %s162
      %p174 = scmp.eq.s32.totalorder %s26, 1
      %p175 = por %p173, %p174
      %p177 = scmp.ne.s32.totalorder %s162, %s176
      %p178 = scmp.eq.s32.totalorder %s26, 0
      %p179 = por %p177, %p178
      %s181 = sadd.s32 %s180, 1
      %p184 = scmp.eq.s32.totalorder %s20, 1
      %p185 = scmp.ne.s32.totalorder %s180, %s182
      %p186 = scmp.eq.s32.totalorder %s20, 0
      %p187 = por %p185, %p186
      %p188 = scmp.ne.s32.totalorder %s180, %s182
      %p189 = scmp.eq.s32.totalorder %s25, 1
      %p190 = por %p188, %p189
      %p191 = scmp.ne.s32.totalorder %s182, %s183
      %p192 = scmp.eq.s32.totalorder %s25, 0
      %p193 = por %p191, %p192
      %p194 = scmp.ne.s32.totalorder %s182, %s183
      %p195 = scmp.eq.s32.totalorder %s26, 1
      %p196 = por %p194, %p195
      %p198 = scmp.ne.s32.totalorder %s183, %s197
      %p199 = scmp.eq.s32.totalorder %s26, 0
      %p200 = por %p198, %p199
      %s202 = sadd.s32 %s201, 1
      %p205 = scmp.eq.s32.totalorder %s20, 1
      %p206 = scmp.ne.s32.totalorder %s201, %s203
      %p207 = scmp.eq.s32.totalorder %s20, 0
      %p208 = por %p206, %p207
      %p209 = scmp.ne.s32.totalorder %s201, %s203
      %p210 = scmp.eq.s32.totalorder %s25, 1
      %p211 = por %p209, %p210
      %p212 = scmp.ne.s32.totalorder %s203, %s204
      %p213 = scmp.eq.s32.totalorder %s25, 0
      %p214 = por %p212, %p213
      %p215 = scmp.ne.s32.totalorder %s203, %s204
      %p216 = scmp.eq.s32.totalorder %s26, 1
      %p217 = por %p215, %p216
      %p219 = scmp.ne.s32.totalorder %s204, %s218
      %p220 = scmp.eq.s32.totalorder %s26, 0
      %p221 = por %p219, %p220
      %s222 = ssub.s32 %s20, %s27
      %p223 = scmp.eq.s32.totalorder %s222, 0
      %s225 = sadd.s32 %s224, 1
      %s226 = scalar_select %p223, %s224, %s225
      %p229 = pneg %p223
      %p230 = scmp.eq.s32.totalorder %s20, 1
      %p231 = por %p229, %p230
      %p232 = scmp.ne.s32.totalorder %s224, %s227
      %p233 = scmp.eq.s32.totalorder %s20, 0
      %p234 = por %p232, %p233
      %p235 = scmp.ne.s32.totalorder %s224, %s227
      %p236 = scmp.eq.s32.totalorder %s25, 1
      %p237 = por %p235, %p236
      %p238 = scmp.ne.s32.totalorder %s227, %s228
      %p239 = scmp.eq.s32.totalorder %s25, 0
      %p240 = por %p238, %p239
      %p241 = scmp.ne.s32.totalorder %s227, %s228
      %p242 = scmp.eq.s32.totalorder %s26, 1
      %p243 = por %p241, %p242
      %p245 = scmp.ne.s32.totalorder %s228, %s244
      %p246 = scmp.eq.s32.totalorder %s26, 0
      %p247 = por %p245, %p246
      %p248 = scmp.le.s32.totalorder 1, %s20
      %p249 = scmp.lt.s32.totalorder %s20, 3
      %p250 = pnand %p248, %p249
      %p251 = pneg %p250
      // Predicated region
      $region9: #{tpu_custom_call.1} parent=5 // pred_check
        _
      $region10: #{tpu_custom_call.1} parent=5 // pred_check_branch
        %253 = sbr.rel (%p250) target = $region12
      $region11: #{tpu_custom_call.1} parent=5 // pred_region
        %s254 = ssub.s32 %s20, 1
        // Predicated region
        $region13: #{tpu_custom_call.1} parent=11 // pred_check
          %p255 = pneg %p67
        $region14: #{tpu_custom_call.1} parent=11 // pred_check_branch
          %257 = sbr.rel (%p255) target = $region16
        $region15: #{tpu_custom_call.1} parent=11 // pred_region
          _
        $region16: #{tpu_custom_call.1} parent=11 // pred_fallthru
          _
        // Predicated region
        $region17: #{tpu_custom_call.1} parent=11 // pred_check
          %p258 = pneg %p88
        $region18: #{tpu_custom_call.1} parent=11 // pred_check_branch
          %260 = sbr.rel (%p258) target = $region20
        $region19: #{tpu_custom_call.1} parent=11 // pred_region
          %s262 = ssub.s32 256, 256
          %263 = vsyncadd [#allocation3], %s262
          %s264 = sshll.u32 [#allocation2], 4
          %s265 = int_to_ptr.vmem [resolvable:$true] %s264
          %270 = dma.hbm_to_vmem [thread:$0]  %s2, 256, %s265, [#allocation3], 128, 128, 8
        $region20: #{tpu_custom_call.1} parent=11 // pred_fallthru
          _
        // Predicated region
        $region21: #{tpu_custom_call.1} parent=11 // pred_check
          %p271 = pneg %p109
        $region22: #{tpu_custom_call.1} parent=11 // pred_check_branch
          %273 = sbr.rel (%p271) target = $region24
        $region23: #{tpu_custom_call.1} parent=11 // pred_region
          %s275 = ssub.s32 256, 256
          %276 = vsyncadd [#allocation6], %s275
          %s277 = sshll.u32 [#allocation5], 4
          %s278 = int_to_ptr.vmem [resolvable:$true] %s277
          %283 = dma.hbm_to_vmem [thread:$0]  %s3, 256, %s278, [#allocation6], 128, 128, 8
        $region24: #{tpu_custom_call.1} parent=11 // pred_fallthru
          _
        // Predicated region
        $region25: #{tpu_custom_call.1} parent=11 // pred_check
          %p284 = pneg %p130
        $region26: #{tpu_custom_call.1} parent=11 // pred_check_branch
          %286 = sbr.rel (%p284) target = $region28
        $region27: #{tpu_custom_call.1} parent=11 // pred_region
          _
        $region28: #{tpu_custom_call.1} parent=11 // pred_fallthru
          _
        // Predicated region
        $region29: #{tpu_custom_call.1} parent=11 // pred_check
          %p287 = pneg %p151
        $region30: #{tpu_custom_call.1} parent=11 // pred_check_branch
          %289 = sbr.rel (%p287) target = $region32
        $region31: #{tpu_custom_call.1} parent=11 // pred_region
          _
        $region32: #{tpu_custom_call.1} parent=11 // pred_fallthru
          _
        // Predicated region
        $region33: #{tpu_custom_call.1} parent=11 // pred_check
          %p290 = pneg %p172
        $region34: #{tpu_custom_call.1} parent=11 // pred_check_branch
          %292 = sbr.rel (%p290) target = $region36
        $region35: #{tpu_custom_call.1} parent=11 // pred_region
          _
        $region36: #{tpu_custom_call.1} parent=11 // pred_fallthru
          _
        // Predicated region
        $region37: #{tpu_custom_call.1} parent=11 // pred_check
          %p293 = pneg %p193
        $region38: #{tpu_custom_call.1} parent=11 // pred_check_branch
          %295 = sbr.rel (%p293) target = $region40
        $region39: #{tpu_custom_call.1} parent=11 // pred_region
          %s297 = ssub.s32 2048, 2048
          %298 = vsyncadd [#allocation6], %s297
          %s299 = sshll.u32 [#allocation7], 4
          %s300 = int_to_ptr.vmem [resolvable:$true] %s299
          %305 = dma.hbm_to_vmem [thread:$0]  %s7, 2048, %s300, [#allocation6], 64, 64, 4
        $region40: #{tpu_custom_call.1} parent=11 // pred_fallthru
          _
        // Predicated region
        $region41: #{tpu_custom_call.1} parent=11 // pred_check
          %p306 = pneg %p214
        $region42: #{tpu_custom_call.1} parent=11 // pred_check_branch
          %308 = sbr.rel (%p306) target = $region44
        $region43: #{tpu_custom_call.1} parent=11 // pred_region
          _
        $region44: #{tpu_custom_call.1} parent=11 // pred_fallthru
          _
      $region12: #{tpu_custom_call.1} parent=5 // pred_fallthru
        _
      %p309 = scmp.lt.s32.totalorder %s20, 2
      // Predicated region
      $region45: #{tpu_custom_call.1} parent=5 // pred_check
        %p310 = pneg %p309
      $region46: #{tpu_custom_call.1} parent=5 // pred_check_branch
        %312 = sbr.rel (%p310) target = $region48
      $region47: #{tpu_custom_call.1} parent=5 // pred_region
        // Predicated region
        $region49: #{tpu_custom_call.1} parent=47 // pred_check
          %p313 = pneg %p40
        $region50: #{tpu_custom_call.1} parent=47 // pred_check_branch
          %315 = sbr.rel (%p313) target = $region52
        $region51: #{tpu_custom_call.1} parent=47 // pred_region
          %s316 = smul.u32 16, %s20
          %p317 = scmp.lt.s32.totalorder %s316, 31
          %s318 = scalar_select %p317, %s316, 31
          %s319 = smul.addr %s318, 8
          %s320 = scalar_lea.vmem %s0, %s319
          %s321 = smul.u32 16, %s20
        $region52: #{tpu_custom_call.1} parent=47 // pred_fallthru
          _
      $region48: #{tpu_custom_call.1} parent=5 // pred_fallthru
        _
      %p322 = scmp.le.s32.totalorder 1, %s20
      %p323 = scmp.lt.s32.totalorder %s20, 3
      %p324 = pnand %p322, %p323
      %p325 = pneg %p324
      // Predicated region
      $region53: #{tpu_custom_call.1} parent=5 // pred_check
        _
      $region54: #{tpu_custom_call.1} parent=5 // pred_check_branch
        %327 = sbr.rel (%p324) target = $region56
      $region55: #{tpu_custom_call.1} parent=5 // pred_region
        %s328 = ssub.s32 %s20, 1
        // Predicated region
        $region57: #{tpu_custom_call.1} parent=55 // pred_check
          %p329 = pneg %p88
        $region58: #{tpu_custom_call.1} parent=55 // pred_check_branch
          %331 = sbr.rel (%p329) target = $region60
        $region59: #{tpu_custom_call.1} parent=55 // pred_region
          %332 = dma.done [#allocation3], 256
        $region60: #{tpu_custom_call.1} parent=55 // pred_fallthru
          _
        // Predicated region
        $region61: #{tpu_custom_call.1} parent=55 // pred_check
          %p333 = pneg %p109
        $region62: #{tpu_custom_call.1} parent=55 // pred_check_branch
          %335 = sbr.rel (%p333) target = $region64
        $region63: #{tpu_custom_call.1} parent=55 // pred_region
          %336 = dma.done [#allocation6], 256
        $region64: #{tpu_custom_call.1} parent=55 // pred_fallthru
          _
        // Predicated region
        $region65: #{tpu_custom_call.1} parent=55 // pred_check
          %p337 = pneg %p193
        $region66: #{tpu_custom_call.1} parent=55 // pred_check_branch
          %339 = sbr.rel (%p337) target = $region68
        $region67: #{tpu_custom_call.1} parent=55 // pred_region
          %340 = dma.done [#allocation6], 2048
        $region68: #{tpu_custom_call.1} parent=55 // pred_fallthru
          _
        %s341 = smul.u32 16, %s25
        %p342 = scmp.lt.s32.totalorder %s341, 31
        %s343 = scalar_select %p342, %s341, 31
        %s344 = smul.addr %s343, 8
        %s345 = scalar_lea.vmem %s0, %s344
        %p346 = pneg %p46
        %p347 = pneg %p43
        %p348 = pneg %p67
        %p349 = pneg %p64
        %p350 = pneg %p88
        %p351 = pneg %p85
        %p352 = pneg %p109
        %p353 = pneg %p106
        %p354 = pneg %p130
        %p355 = pneg %p127
        %p356 = pneg %p151
        %p357 = pneg %p148
        %p358 = pneg %p172
        %p359 = pneg %p169
        %p360 = pneg %p193
        %p361 = pneg %p190
        %p362 = pneg %p214
        %p363 = pneg %p211
        %p364 = pneg %p240
        %p365 = pneg %p237
        %s366 = sand.u32 %s227, 1
        %s367 = scalar_lea.sflag [#allocation4], %s366
        %s368 = sand.u32 %s227, 1
        %s369 = smul.addr %s368, 128
        %s370 = scalar_lea.vmem [#allocation8], %s369
        %s371 = smul.u32 16, %s25
        %p372 = scmp.lt.s32.totalorder %s371, 31
        %s373 = scalar_select %p372, %s371, 31
        %s374 = smul.addr %s373, 8
        %s375 = scalar_lea.vmem %s0, %s374
        %s376 = smul.u32 16, %s25
        %s377 = smul.u32 16, %s25
        %v379 = vld [vmem:[%s375] sm:$0xff]
        %v380 = vld [vmem:[%s375 + $0x8] sm:$0xff]
        %v381 = vld [vmem:[%s375 + $0x10] sm:$0xff]
        %v382 = vld [vmem:[%s375 + $0x18] sm:$0xff]
        %v383 = vld [vmem:[%s375 + $0x20] sm:$0xff]
        %v384 = vld [vmem:[%s375 + $0x28] sm:$0xff]
        %v385 = vld [vmem:[%s375 + $0x30] sm:$0xff]
        %v386 = vld [vmem:[%s375 + $0x38] sm:$0xff]
        %v387 = vld [vmem:[%s375 + $0x40] sm:$0xff]
        %v388 = vld [vmem:[%s375 + $0x48] sm:$0xff]
        %v389 = vld [vmem:[%s375 + $0x50] sm:$0xff]
        %v390 = vld [vmem:[%s375 + $0x58] sm:$0xff]
        %v391 = vld [vmem:[%s375 + $0x60] sm:$0xff]
        %v392 = vld [vmem:[%s375 + $0x68] sm:$0xff]
        %v393 = vld [vmem:[%s375 + $0x70] sm:$0xff]
        %v394 = vld [vmem:[%s375 + $0x78] sm:$0xff]
        %v395 = vmul.f32 %v379, 1.5
        %v396 = vmul.f32 %v380, 1.5
        %v397 = vmul.f32 %v381, 1.5
        %v398 = vmul.f32 %v382, 1.5
        %v399 = vmul.f32 %v383, 1.5
        %v400 = vmul.f32 %v384, 1.5
        %v401 = vmul.f32 %v385, 1.5
        %v402 = vmul.f32 %v386, 1.5
        %v403 = vmul.f32 %v387, 1.5
        %v404 = vmul.f32 %v388, 1.5
        %v405 = vmul.f32 %v389, 1.5
        %v406 = vmul.f32 %v390, 1.5
        %v407 = vmul.f32 %v391, 1.5
        %v408 = vmul.f32 %v392, 1.5
        %v409 = vmul.f32 %v393, 1.5
        %v410 = vmul.f32 %v394, 1.5
        %v411 = vadd.f32 %v395, 1.5
        %v412 = vadd.f32 %v396, 1.5
        %v413 = vadd.f32 %v397, 1.5
        %v414 = vadd.f32 %v398, 1.5
        %v415 = vadd.f32 %v399, 1.5
        %v416 = vadd.f32 %v400, 1.5
        %v417 = vadd.f32 %v401, 1.5
        %v418 = vadd.f32 %v402, 1.5
        %v419 = vadd.f32 %v403, 1.5
        %v420 = vadd.f32 %v404, 1.5
        %v421 = vadd.f32 %v405, 1.5
        %v422 = vadd.f32 %v406, 1.5
        %v423 = vadd.f32 %v407, 1.5
        %v424 = vadd.f32 %v408, 1.5
        %v425 = vadd.f32 %v409, 1.5
        %v426 = vadd.f32 %v410, 1.5
        %v427 = vmax.f32 %v411, 0.0
        %v428 = vmax.f32 %v412, 0.0
        %v429 = vmax.f32 %v413, 0.0
        %v430 = vmax.f32 %v414, 0.0
        %v431 = vmax.f32 %v415, 0.0
        %v432 = vmax.f32 %v416, 0.0
        %v433 = vmax.f32 %v417, 0.0
        %v434 = vmax.f32 %v418, 0.0
        %v435 = vmax.f32 %v419, 0.0
        %v436 = vmax.f32 %v420, 0.0
        %v437 = vmax.f32 %v421, 0.0
        %v438 = vmax.f32 %v422, 0.0
        %v439 = vmax.f32 %v423, 0.0
        %v440 = vmax.f32 %v424, 0.0
        %v441 = vmax.f32 %v425, 0.0
        %v442 = vmax.f32 %v426, 0.0
        %v443 = vmin.f32 %v427, 3.0
        %v444 = vmin.f32 %v428, 3.0
        %v445 = vmin.f32 %v429, 3.0
        %v446 = vmin.f32 %v430, 3.0
        %v447 = vmin.f32 %v431, 3.0
        %v448 = vmin.f32 %v432, 3.0
        %v449 = vmin.f32 %v433, 3.0
        %v450 = vmin.f32 %v434, 3.0
        %v451 = vmin.f32 %v435, 3.0
        %v452 = vmin.f32 %v436, 3.0
        %v453 = vmin.f32 %v437, 3.0
        %v454 = vmin.f32 %v438, 3.0
        %v455 = vmin.f32 %v439, 3.0
        %v456 = vmin.f32 %v440, 3.0
        %v457 = vmin.f32 %v441, 3.0
        %v458 = vmin.f32 %v442, 3.0
        %v459 = vfloor.f32 %v443
        %v460 = vfloor.f32 %v444
        %v461 = vfloor.f32 %v445
        %v462 = vfloor.f32 %v446
        %v463 = vfloor.f32 %v447
        %v464 = vfloor.f32 %v448
        %v465 = vfloor.f32 %v449
        %v466 = vfloor.f32 %v450
        %v467 = vfloor.f32 %v451
        %v468 = vfloor.f32 %v452
        %v469 = vfloor.f32 %v453
        %v470 = vfloor.f32 %v454
        %v471 = vfloor.f32 %v455
        %v472 = vfloor.f32 %v456
        %v473 = vfloor.f32 %v457
        %v474 = vfloor.f32 %v458
        %v475 = vsub.f32 %v443, %v459
        %v476 = vsub.f32 %v444, %v460
        %v477 = vsub.f32 %v445, %v461
        %v478 = vsub.f32 %v446, %v462
        %v479 = vsub.f32 %v447, %v463
        %v480 = vsub.f32 %v448, %v464
        %v481 = vsub.f32 %v449, %v465
        %v482 = vsub.f32 %v450, %v466
        %v483 = vsub.f32 %v451, %v467
        %v484 = vsub.f32 %v452, %v468
        %v485 = vsub.f32 %v453, %v469
        %v486 = vsub.f32 %v454, %v470
        %v487 = vsub.f32 %v455, %v471
        %v488 = vsub.f32 %v456, %v472
        %v489 = vsub.f32 %v457, %v473
        %v490 = vsub.f32 %v458, %v474
        %v491 = vcvt.f32.s32.to.zero.pseudo %v459
        %v492 = vcvt.f32.s32.to.zero.pseudo %v460
        %v493 = vcvt.f32.s32.to.zero.pseudo %v461
        %v494 = vcvt.f32.s32.to.zero.pseudo %v462
        %v495 = vcvt.f32.s32.to.zero.pseudo %v463
        %v496 = vcvt.f32.s32.to.zero.pseudo %v464
        %v497 = vcvt.f32.s32.to.zero.pseudo %v465
        %v498 = vcvt.f32.s32.to.zero.pseudo %v466
        %v499 = vcvt.f32.s32.to.zero.pseudo %v467
        %v500 = vcvt.f32.s32.to.zero.pseudo %v468
        %v501 = vcvt.f32.s32.to.zero.pseudo %v469
        %v502 = vcvt.f32.s32.to.zero.pseudo %v470
        %v503 = vcvt.f32.s32.to.zero.pseudo %v471
        %v504 = vcvt.f32.s32.to.zero.pseudo %v472
        %v505 = vcvt.f32.s32.to.zero.pseudo %v473
        %v506 = vcvt.f32.s32.to.zero.pseudo %v474
        %vm507 = vcmp.gt.s32.totalorder %v491, 0
        %v508 = vsel %vm507, %v491, 0
        %vm509 = vcmp.gt.s32.totalorder %v492, 0
        %v510 = vsel %vm509, %v492, 0
        %vm511 = vcmp.gt.s32.totalorder %v493, 0
        %v512 = vsel %vm511, %v493, 0
        %vm513 = vcmp.gt.s32.totalorder %v494, 0
        %v514 = vsel %vm513, %v494, 0
        %vm515 = vcmp.gt.s32.totalorder %v495, 0
        %v516 = vsel %vm515, %v495, 0
        %vm517 = vcmp.gt.s32.totalorder %v496, 0
        %v518 = vsel %vm517, %v496, 0
        %vm519 = vcmp.gt.s32.totalorder %v497, 0
        %v520 = vsel %vm519, %v497, 0
        %vm521 = vcmp.gt.s32.totalorder %v498, 0
        %v522 = vsel %vm521, %v498, 0
        %vm523 = vcmp.gt.s32.totalorder %v499, 0
        %v524 = vsel %vm523, %v499, 0
        %vm525 = vcmp.gt.s32.totalorder %v500, 0
        %v526 = vsel %vm525, %v500, 0
        %vm527 = vcmp.gt.s32.totalorder %v501, 0
        %v528 = vsel %vm527, %v501, 0
        %vm529 = vcmp.gt.s32.totalorder %v502, 0
        %v530 = vsel %vm529, %v502, 0
        %vm531 = vcmp.gt.s32.totalorder %v503, 0
        %v532 = vsel %vm531, %v503, 0
        %vm533 = vcmp.gt.s32.totalorder %v504, 0
        %v534 = vsel %vm533, %v504, 0
        %vm535 = vcmp.gt.s32.totalorder %v505, 0
        %v536 = vsel %vm535, %v505, 0
        %vm537 = vcmp.gt.s32.totalorder %v506, 0
        %v538 = vsel %vm537, %v506, 0
        %vm539 = vcmp.lt.s32.totalorder %v508, 3
        %v540 = vsel %vm539, %v508, 3
        %vm541 = vcmp.lt.s32.totalorder %v510, 3
        %v542 = vsel %vm541, %v510, 3
        %vm543 = vcmp.lt.s32.totalorder %v512, 3
        %v544 = vsel %vm543, %v512, 3
        %vm545 = vcmp.lt.s32.totalorder %v514, 3
        %v546 = vsel %vm545, %v514, 3
        %vm547 = vcmp.lt.s32.totalorder %v516, 3
        %v548 = vsel %vm547, %v516, 3
        %vm549 = vcmp.lt.s32.totalorder %v518, 3
        %v550 = vsel %vm549, %v518, 3
        %vm551 = vcmp.lt.s32.totalorder %v520, 3
        %v552 = vsel %vm551, %v520, 3
        %vm553 = vcmp.lt.s32.totalorder %v522, 3
        %v554 = vsel %vm553, %v522, 3
        %vm555 = vcmp.lt.s32.totalorder %v524, 3
        %v556 = vsel %vm555, %v524, 3
        %vm557 = vcmp.lt.s32.totalorder %v526, 3
        %v558 = vsel %vm557, %v526, 3
        %vm559 = vcmp.lt.s32.totalorder %v528, 3
        %v560 = vsel %vm559, %v528, 3
        %vm561 = vcmp.lt.s32.totalorder %v530, 3
        %v562 = vsel %vm561, %v530, 3
        %vm563 = vcmp.lt.s32.totalorder %v532, 3
        %v564 = vsel %vm563, %v532, 3
        %vm565 = vcmp.lt.s32.totalorder %v534, 3
        %v566 = vsel %vm565, %v534, 3
        %vm567 = vcmp.lt.s32.totalorder %v536, 3
        %v568 = vsel %vm567, %v536, 3
        %vm569 = vcmp.lt.s32.totalorder %v538, 3
        %v570 = vsel %vm569, %v538, 3
        %v571 = vadd.s32 %v540, 1
        %v572 = vadd.s32 %v542, 1
        %v573 = vadd.s32 %v544, 1
        %v574 = vadd.s32 %v546, 1
        %v575 = vadd.s32 %v548, 1
        %v576 = vadd.s32 %v550, 1
        %v577 = vadd.s32 %v552, 1
        %v578 = vadd.s32 %v554, 1
        %v579 = vadd.s32 %v556, 1
        %v580 = vadd.s32 %v558, 1
        %v581 = vadd.s32 %v560, 1
        %v582 = vadd.s32 %v562, 1
        %v583 = vadd.s32 %v564, 1
        %v584 = vadd.s32 %v566, 1
        %v585 = vadd.s32 %v568, 1
        %v586 = vadd.s32 %v570, 1
        %vm587 = vcmp.lt.s32.totalorder %v571, 3
        %v588 = vsel %vm587, %v571, 3
        %vm589 = vcmp.lt.s32.totalorder %v572, 3
        %v590 = vsel %vm589, %v572, 3
        %vm591 = vcmp.lt.s32.totalorder %v573, 3
        %v592 = vsel %vm591, %v573, 3
        %vm593 = vcmp.lt.s32.totalorder %v574, 3
        %v594 = vsel %vm593, %v574, 3
        %vm595 = vcmp.lt.s32.totalorder %v575, 3
        %v596 = vsel %vm595, %v575, 3
        %vm597 = vcmp.lt.s32.totalorder %v576, 3
        %v598 = vsel %vm597, %v576, 3
        %vm599 = vcmp.lt.s32.totalorder %v577, 3
        %v600 = vsel %vm599, %v577, 3
        %vm601 = vcmp.lt.s32.totalorder %v578, 3
        %v602 = vsel %vm601, %v578, 3
        %vm603 = vcmp.lt.s32.totalorder %v579, 3
        %v604 = vsel %vm603, %v579, 3
        %vm605 = vcmp.lt.s32.totalorder %v580, 3
        %v606 = vsel %vm605, %v580, 3
        %vm607 = vcmp.lt.s32.totalorder %v581, 3
        %v608 = vsel %vm607, %v581, 3
        %vm609 = vcmp.lt.s32.totalorder %v582, 3
        %v610 = vsel %vm609, %v582, 3
        %vm611 = vcmp.lt.s32.totalorder %v583, 3
        %v612 = vsel %vm611, %v583, 3
        %vm613 = vcmp.lt.s32.totalorder %v584, 3
        %v614 = vsel %vm613, %v584, 3
        %vm615 = vcmp.lt.s32.totalorder %v585, 3
        %v616 = vsel %vm615, %v585, 3
        %vm617 = vcmp.lt.s32.totalorder %v586, 3
        %v618 = vsel %vm617, %v586, 3
        %v619 = vlaneseq
        %v620 = vand.u32 %v619, 127
        %v621 = vsub.f32 1.0, %v475
        %v622 = vsub.f32 1.0, %v476
        %v623 = vsub.f32 1.0, %v477
        %v624 = vsub.f32 1.0, %v478
        %v625 = vsub.f32 1.0, %v479
        %v626 = vsub.f32 1.0, %v480
        %v627 = vsub.f32 1.0, %v481
        %v628 = vsub.f32 1.0, %v482
        %v629 = vsub.f32 1.0, %v483
        %v630 = vsub.f32 1.0, %v484
        %v631 = vsub.f32 1.0, %v485
        %v632 = vsub.f32 1.0, %v486
        %v633 = vsub.f32 1.0, %v487
        %v634 = vsub.f32 1.0, %v488
        %v635 = vsub.f32 1.0, %v489
        %v636 = vsub.f32 1.0, %v490
        %653 = vrot.lane.b32.xlu0 %v621, 127
        %v654 = vpop.permute.xlu0 %653
        %655 = vrot.lane.b32.xlu0 %v622, 127
        %v656 = vpop.permute.xlu0 %655
        %657 = vrot.lane.b32.xlu0 %v623, 127
        %v658 = vpop.permute.xlu0 %657
        %659 = vrot.lane.b32.xlu0 %v624, 127
        %v660 = vpop.permute.xlu0 %659
        %661 = vrot.lane.b32.xlu0 %v625, 127
        %v662 = vpop.permute.xlu0 %661
        %663 = vrot.lane.b32.xlu0 %v626, 127
        %v664 = vpop.permute.xlu0 %663
        %665 = vrot.lane.b32.xlu0 %v627, 127
        %v666 = vpop.permute.xlu0 %665
        %667 = vrot.lane.b32.xlu0 %v628, 127
        %v668 = vpop.permute.xlu0 %667
        %669 = vrot.lane.b32.xlu0 %v629, 127
        %v670 = vpop.permute.xlu0 %669
        %671 = vrot.lane.b32.xlu0 %v630, 127
        %v672 = vpop.permute.xlu0 %671
        %673 = vrot.lane.b32.xlu0 %v631, 127
        %v674 = vpop.permute.xlu0 %673
        %675 = vrot.lane.b32.xlu0 %v632, 127
        %v676 = vpop.permute.xlu0 %675
        %677 = vrot.lane.b32.xlu0 %v633, 127
        %v678 = vpop.permute.xlu0 %677
        %679 = vrot.lane.b32.xlu0 %v634, 127
        %v680 = vpop.permute.xlu0 %679
        %681 = vrot.lane.b32.xlu0 %v635, 127
        %v682 = vpop.permute.xlu0 %681
        %683 = vrot.lane.b32.xlu0 %v636, 127
        %v684 = vpop.permute.xlu0 %683
        %v701 = vmul.f32 %v621, %v654
        %v702 = vmul.f32 %v622, %v656
        %v703 = vmul.f32 %v623, %v658
        %v704 = vmul.f32 %v624, %v660
        %v705 = vmul.f32 %v625, %v662
        %v706 = vmul.f32 %v626, %v664
        %v707 = vmul.f32 %v627, %v666
        %v708 = vmul.f32 %v628, %v668
        %v709 = vmul.f32 %v629, %v670
        %v710 = vmul.f32 %v630, %v672
        %v711 = vmul.f32 %v631, %v674
        %v712 = vmul.f32 %v632, %v676
        %v713 = vmul.f32 %v633, %v678
        %v714 = vmul.f32 %v634, %v680
        %v715 = vmul.f32 %v635, %v682
        %v716 = vmul.f32 %v636, %v684
        %v717 = vmul.u32 %v540, 4
        %v718 = vmul.u32 %v542, 4
        %v719 = vmul.u32 %v544, 4
        %v720 = vmul.u32 %v546, 4
        %v721 = vmul.u32 %v548, 4
        %v722 = vmul.u32 %v550, 4
        %v723 = vmul.u32 %v552, 4
        %v724 = vmul.u32 %v554, 4
        %v725 = vmul.u32 %v556, 4
        %v726 = vmul.u32 %v558, 4
        %v727 = vmul.u32 %v560, 4
        %v728 = vmul.u32 %v562, 4
        %v729 = vmul.u32 %v564, 4
        %v730 = vmul.u32 %v566, 4
        %v731 = vmul.u32 %v568, 4
        %v732 = vmul.u32 %v570, 4
        %733 = vrot.lane.b32.xlu0 %v540, 127
        %v734 = vpop.permute.xlu0 %733
        %735 = vrot.lane.b32.xlu0 %v542, 127
        %v736 = vpop.permute.xlu0 %735
        %737 = vrot.lane.b32.xlu0 %v544, 127
        %v738 = vpop.permute.xlu0 %737
        %739 = vrot.lane.b32.xlu0 %v546, 127
        %v740 = vpop.permute.xlu0 %739
        %741 = vrot.lane.b32.xlu0 %v548, 127
        %v742 = vpop.permute.xlu0 %741
        %743 = vrot.lane.b32.xlu0 %v550, 127
        %v744 = vpop.permute.xlu0 %743
        %745 = vrot.lane.b32.xlu0 %v552, 127
        %v746 = vpop.permute.xlu0 %745
        %747 = vrot.lane.b32.xlu0 %v554, 127
        %v748 = vpop.permute.xlu0 %747
        %749 = vrot.lane.b32.xlu0 %v556, 127
        %v750 = vpop.permute.xlu0 %749
        %751 = vrot.lane.b32.xlu0 %v558, 127
        %v752 = vpop.permute.xlu0 %751
        %753 = vrot.lane.b32.xlu0 %v560, 127
        %v754 = vpop.permute.xlu0 %753
        %755 = vrot.lane.b32.xlu0 %v562, 127
        %v756 = vpop.permute.xlu0 %755
        %757 = vrot.lane.b32.xlu0 %v564, 127
        %v758 = vpop.permute.xlu0 %757
        %759 = vrot.lane.b32.xlu0 %v566, 127
        %v760 = vpop.permute.xlu0 %759
        %761 = vrot.lane.b32.xlu0 %v568, 127
        %v762 = vpop.permute.xlu0 %761
        %763 = vrot.lane.b32.xlu0 %v570, 127
        %v764 = vpop.permute.xlu0 %763
        %v765 = vadd.s32 %v717, %v734
        %v766 = vadd.s32 %v718, %v736
        %v767 = vadd.s32 %v719, %v738
        %v768 = vadd.s32 %v720, %v740
        %v769 = vadd.s32 %v721, %v742
        %v770 = vadd.s32 %v722, %v744
        %v771 = vadd.s32 %v723, %v746
        %v772 = vadd.s32 %v724, %v748
        %v773 = vadd.s32 %v725, %v750
        %v774 = vadd.s32 %v726, %v752
        %v775 = vadd.s32 %v727, %v754
        %v776 = vadd.s32 %v728, %v756
        %v777 = vadd.s32 %v729, %v758
        %v778 = vadd.s32 %v730, %v760
        %v779 = vadd.s32 %v731, %v762
        %v780 = vadd.s32 %v732, %v764
        %781 = vset.pattern.permute.xlu0 0
        %782 = vperm.xlu0 %781, %v765
        %v783 = vpop.permute.xlu0 %782
        %784 = vset.pattern.permute.xlu0 0
        %785 = vperm.xlu0 %784, %v766
        %v786 = vpop.permute.xlu0 %785
        %787 = vset.pattern.permute.xlu0 0
        %788 = vperm.xlu0 %787, %v767
        %v789 = vpop.permute.xlu0 %788
        %790 = vset.pattern.permute.xlu0 0
        %791 = vperm.xlu0 %790, %v768
        %v792 = vpop.permute.xlu0 %791
        %793 = vset.pattern.permute.xlu0 0
        %794 = vperm.xlu0 %793, %v769
        %v795 = vpop.permute.xlu0 %794
        %796 = vset.pattern.permute.xlu0 0
        %797 = vperm.xlu0 %796, %v770
        %v798 = vpop.permute.xlu0 %797
        %799 = vset.pattern.permute.xlu0 0
        %800 = vperm.xlu0 %799, %v771
        %v801 = vpop.permute.xlu0 %800
        %802 = vset.pattern.permute.xlu0 0
        %803 = vperm.xlu0 %802, %v772
        %v804 = vpop.permute.xlu0 %803
        %805 = vset.pattern.permute.xlu0 0
        %806 = vperm.xlu0 %805, %v773
        %v807 = vpop.permute.xlu0 %806
        %808 = vset.pattern.permute.xlu0 0
        %809 = vperm.xlu0 %808, %v774
        %v810 = vpop.permute.xlu0 %809
        %811 = vset.pattern.permute.xlu0 0
        %812 = vperm.xlu0 %811, %v775
        %v813 = vpop.permute.xlu0 %812
        %814 = vset.pattern.permute.xlu0 0
        %815 = vperm.xlu0 %814, %v776
        %v816 = vpop.permute.xlu0 %815
        %817 = vset.pattern.permute.xlu0 0
        %818 = vperm.xlu0 %817, %v777
        %v819 = vpop.permute.xlu0 %818
        %820 = vset.pattern.permute.xlu0 0
        %821 = vperm.xlu0 %820, %v778
        %v822 = vpop.permute.xlu0 %821
        %823 = vset.pattern.permute.xlu0 0
        %824 = vperm.xlu0 %823, %v779
        %v825 = vpop.permute.xlu0 %824
        %826 = vset.pattern.permute.xlu0 0
        %827 = vperm.xlu0 %826, %v780
        %v828 = vpop.permute.xlu0 %827
        %vm829 = vcmp.eq.s32.totalorder %v620, %v783
        %vm830 = vcmp.eq.s32.totalorder %v620, %v786
        %vm831 = vcmp.eq.s32.totalorder %v620, %v789
        %vm832 = vcmp.eq.s32.totalorder %v620, %v792
        %vm833 = vcmp.eq.s32.totalorder %v620, %v795
        %vm834 = vcmp.eq.s32.totalorder %v620, %v798
        %vm835 = vcmp.eq.s32.totalorder %v620, %v801
        %vm836 = vcmp.eq.s32.totalorder %v620, %v804
        %vm837 = vcmp.eq.s32.totalorder %v620, %v807
        %vm838 = vcmp.eq.s32.totalorder %v620, %v810
        %vm839 = vcmp.eq.s32.totalorder %v620, %v813
        %vm840 = vcmp.eq.s32.totalorder %v620, %v816
        %vm841 = vcmp.eq.s32.totalorder %v620, %v819
        %vm842 = vcmp.eq.s32.totalorder %v620, %v822
        %vm843 = vcmp.eq.s32.totalorder %v620, %v825
        %vm844 = vcmp.eq.s32.totalorder %v620, %v828
        %v845 = vsel %vm829, 1, 0
        %v846 = vsel %vm830, 1, 0
        %v847 = vsel %vm831, 1, 0
        %v848 = vsel %vm832, 1, 0
        %v849 = vsel %vm833, 1, 0
        %v850 = vsel %vm834, 1, 0
        %v851 = vsel %vm835, 1, 0
        %v852 = vsel %vm836, 1, 0
        %v853 = vsel %vm837, 1, 0
        %v854 = vsel %vm838, 1, 0
        %v855 = vsel %vm839, 1, 0
        %v856 = vsel %vm840, 1, 0
        %v857 = vsel %vm841, 1, 0
        %v858 = vsel %vm842, 1, 0
        %v859 = vsel %vm843, 1, 0
        %v860 = vsel %vm844, 1, 0
        %v861 = vcvt.s32.f32 %v845
        %v862 = vcvt.s32.f32 %v846
        %v863 = vcvt.s32.f32 %v847
        %v864 = vcvt.s32.f32 %v848
        %v865 = vcvt.s32.f32 %v849
        %v866 = vcvt.s32.f32 %v850
        %v867 = vcvt.s32.f32 %v851
        %v868 = vcvt.s32.f32 %v852
        %v869 = vcvt.s32.f32 %v853
        %v870 = vcvt.s32.f32 %v854
        %v871 = vcvt.s32.f32 %v855
        %v872 = vcvt.s32.f32 %v856
        %v873 = vcvt.s32.f32 %v857
        %v874 = vcvt.s32.f32 %v858
        %v875 = vcvt.s32.f32 %v859
        %v876 = vcvt.s32.f32 %v860
        %878 = vset.pattern.permute.xlu0 0
        %879 = vperm.xlu0 %878, %v701
        %v880 = vpop.permute.xlu0 %879
        %883 = vset.pattern.permute.xlu0 0
        %884 = vperm.xlu0 %883, %v702
        %v885 = vpop.permute.xlu0 %884
        %888 = vset.pattern.permute.xlu0 0
        %889 = vperm.xlu0 %888, %v703
        %v890 = vpop.permute.xlu0 %889
        %893 = vset.pattern.permute.xlu0 0
        %894 = vperm.xlu0 %893, %v704
        %v895 = vpop.permute.xlu0 %894
        %898 = vset.pattern.permute.xlu0 0
        %899 = vperm.xlu0 %898, %v705
        %v900 = vpop.permute.xlu0 %899
        %903 = vset.pattern.permute.xlu0 0
        %904 = vperm.xlu0 %903, %v706
        %v905 = vpop.permute.xlu0 %904
        %908 = vset.pattern.permute.xlu0 0
        %909 = vperm.xlu0 %908, %v707
        %v910 = vpop.permute.xlu0 %909
        %913 = vset.pattern.permute.xlu0 0
        %914 = vperm.xlu0 %913, %v708
        %v915 = vpop.permute.xlu0 %914
        %918 = vset.pattern.permute.xlu0 0
        %919 = vperm.xlu0 %918, %v709
        %v920 = vpop.permute.xlu0 %919
        %923 = vset.pattern.permute.xlu0 0
        %924 = vperm.xlu0 %923, %v710
        %v925 = vpop.permute.xlu0 %924
        %928 = vset.pattern.permute.xlu0 0
        %929 = vperm.xlu0 %928, %v711
        %v930 = vpop.permute.xlu0 %929
        %933 = vset.pattern.permute.xlu0 0
        %934 = vperm.xlu0 %933, %v712
        %v935 = vpop.permute.xlu0 %934
        %938 = vset.pattern.permute.xlu0 0
        %939 = vperm.xlu0 %938, %v713
        %v940 = vpop.permute.xlu0 %939
        %943 = vset.pattern.permute.xlu0 0
        %944 = vperm.xlu0 %943, %v714
        %v945 = vpop.permute.xlu0 %944
        %948 = vset.pattern.permute.xlu0 0
        %949 = vperm.xlu0 %948, %v715
        %v950 = vpop.permute.xlu0 %949
        %953 = vset.pattern.permute.xlu0 0
        %954 = vperm.xlu0 %953, %v716
        %v955 = vpop.permute.xlu0 %954
        %v957 = vmul.f32 %v861, %v880
        %v958 = vmul.f32 %v862, %v885
        %v959 = vmul.f32 %v863, %v890
        %v960 = vmul.f32 %v864, %v895
        %v961 = vmul.f32 %v865, %v900
        %v962 = vmul.f32 %v866, %v905
        %v963 = vmul.f32 %v867, %v910
        %v964 = vmul.f32 %v868, %v915
        %v965 = vmul.f32 %v869, %v920
        %v966 = vmul.f32 %v870, %v925
        %v967 = vmul.f32 %v871, %v930
        %v968 = vmul.f32 %v872, %v935
        %v969 = vmul.f32 %v873, %v940
        %v970 = vmul.f32 %v874, %v945
        %v971 = vmul.f32 %v875, %v950
        %v972 = vmul.f32 %v876, %v955
        %989 = vrot.lane.b32.xlu0 %v475, 127
        %v990 = vpop.permute.xlu0 %989
        %991 = vrot.lane.b32.xlu0 %v476, 127
        %v992 = vpop.permute.xlu0 %991
        %993 = vrot.lane.b32.xlu0 %v477, 127
        %v994 = vpop.permute.xlu0 %993
        %995 = vrot.lane.b32.xlu0 %v478, 127
        %v996 = vpop.permute.xlu0 %995
        %997 = vrot.lane.b32.xlu0 %v479, 127
        %v998 = vpop.permute.xlu0 %997
        %999 = vrot.lane.b32.xlu0 %v480, 127
        %v1000 = vpop.permute.xlu0 %999
        %1001 = vrot.lane.b32.xlu0 %v481, 127
        %v1002 = vpop.permute.xlu0 %1001
        %1003 = vrot.lane.b32.xlu0 %v482, 127
        %v1004 = vpop.permute.xlu0 %1003
        %1005 = vrot.lane.b32.xlu0 %v483, 127
        %v1006 = vpop.permute.xlu0 %1005
        %1007 = vrot.lane.b32.xlu0 %v484, 127
        %v1008 = vpop.permute.xlu0 %1007
        %1009 = vrot.lane.b32.xlu0 %v485, 127
        %v1010 = vpop.permute.xlu0 %1009
        %1011 = vrot.lane.b32.xlu0 %v486, 127
        %v1012 = vpop.permute.xlu0 %1011
        %1013 = vrot.lane.b32.xlu0 %v487, 127
        %v1014 = vpop.permute.xlu0 %1013
        %1015 = vrot.lane.b32.xlu0 %v488, 127
        %v1016 = vpop.permute.xlu0 %1015
        %1017 = vrot.lane.b32.xlu0 %v489, 127
        %v1018 = vpop.permute.xlu0 %1017
        %1019 = vrot.lane.b32.xlu0 %v490, 127
        %v1020 = vpop.permute.xlu0 %1019
        %v1037 = vmul.f32 %v621, %v990
        %v1038 = vmul.f32 %v622, %v992
        %v1039 = vmul.f32 %v623, %v994
        %v1040 = vmul.f32 %v624, %v996
        %v1041 = vmul.f32 %v625, %v998
        %v1042 = vmul.f32 %v626, %v1000
        %v1043 = vmul.f32 %v627, %v1002
        %v1044 = vmul.f32 %v628, %v1004
        %v1045 = vmul.f32 %v629, %v1006
        %v1046 = vmul.f32 %v630, %v1008
        %v1047 = vmul.f32 %v631, %v1010
        %v1048 = vmul.f32 %v632, %v1012
        %v1049 = vmul.f32 %v633, %v1014
        %v1050 = vmul.f32 %v634, %v1016
        %v1051 = vmul.f32 %v635, %v1018
        %v1052 = vmul.f32 %v636, %v1020
        %1053 = vrot.lane.b32.xlu0 %v588, 127
        %v1054 = vpop.permute.xlu0 %1053
        %1055 = vrot.lane.b32.xlu0 %v590, 127
        %v1056 = vpop.permute.xlu0 %1055
        %1057 = vrot.lane.b32.xlu0 %v592, 127
        %v1058 = vpop.permute.xlu0 %1057
        %1059 = vrot.lane.b32.xlu0 %v594, 127
        %v1060 = vpop.permute.xlu0 %1059
        %1061 = vrot.lane.b32.xlu0 %v596, 127
        %v1062 = vpop.permute.xlu0 %1061
        %1063 = vrot.lane.b32.xlu0 %v598, 127
        %v1064 = vpop.permute.xlu0 %1063
        %1065 = vrot.lane.b32.xlu0 %v600, 127
        %v1066 = vpop.permute.xlu0 %1065
        %1067 = vrot.lane.b32.xlu0 %v602, 127
        %v1068 = vpop.permute.xlu0 %1067
        %1069 = vrot.lane.b32.xlu0 %v604, 127
        %v1070 = vpop.permute.xlu0 %1069
        %1071 = vrot.lane.b32.xlu0 %v606, 127
        %v1072 = vpop.permute.xlu0 %1071
        %1073 = vrot.lane.b32.xlu0 %v608, 127
        %v1074 = vpop.permute.xlu0 %1073
        %1075 = vrot.lane.b32.xlu0 %v610, 127
        %v1076 = vpop.permute.xlu0 %1075
        %1077 = vrot.lane.b32.xlu0 %v612, 127
        %v1078 = vpop.permute.xlu0 %1077
        %1079 = vrot.lane.b32.xlu0 %v614, 127
        %v1080 = vpop.permute.xlu0 %1079
        %1081 = vrot.lane.b32.xlu0 %v616, 127
        %v1082 = vpop.permute.xlu0 %1081
        %1083 = vrot.lane.b32.xlu0 %v618, 127
        %v1084 = vpop.permute.xlu0 %1083
        %v1085 = vadd.s32 %v717, %v1054
        %v1086 = vadd.s32 %v718, %v1056
        %v1087 = vadd.s32 %v719, %v1058
        %v1088 = vadd.s32 %v720, %v1060
        %v1089 = vadd.s32 %v721, %v1062
        %v1090 = vadd.s32 %v722, %v1064
        %v1091 = vadd.s32 %v723, %v1066
        %v1092 = vadd.s32 %v724, %v1068
        %v1093 = vadd.s32 %v725, %v1070
        %v1094 = vadd.s32 %v726, %v1072
        %v1095 = vadd.s32 %v727, %v1074
        %v1096 = vadd.s32 %v728, %v1076
        %v1097 = vadd.s32 %v729, %v1078
        %v1098 = vadd.s32 %v730, %v1080
        %v1099 = vadd.s32 %v731, %v1082
        %v1100 = vadd.s32 %v732, %v1084
        %1101 = vset.pattern.permute.xlu0 0
        %1102 = vperm.xlu0 %1101, %v1085
        %v1103 = vpop.permute.xlu0 %1102
        %1104 = vset.pattern.permute.xlu0 0
        %1105 = vperm.xlu0 %1104, %v1086
        %v1106 = vpop.permute.xlu0 %1105
        %1107 = vset.pattern.permute.xlu0 0
        %1108 = vperm.xlu0 %1107, %v1087
        %v1109 = vpop.permute.xlu0 %1108
        %1110 = vset.pattern.permute.xlu0 0
        %1111 = vperm.xlu0 %1110, %v1088
        %v1112 = vpop.permute.xlu0 %1111
        %1113 = vset.pattern.permute.xlu0 0
        %1114 = vperm.xlu0 %1113, %v1089
        %v1115 = vpop.permute.xlu0 %1114
        %1116 = vset.pattern.permute.xlu0 0
        %1117 = vperm.xlu0 %1116, %v1090
        %v1118 = vpop.permute.xlu0 %1117
        %1119 = vset.pattern.permute.xlu0 0
        %1120 = vperm.xlu0 %1119, %v1091
        %v1121 = vpop.permute.xlu0 %1120
        %1122 = vset.pattern.permute.xlu0 0
        %1123 = vperm.xlu0 %1122, %v1092
        %v1124 = vpop.permute.xlu0 %1123
        %1125 = vset.pattern.permute.xlu0 0
        %1126 = vperm.xlu0 %1125, %v1093
        %v1127 = vpop.permute.xlu0 %1126
        %1128 = vset.pattern.permute.xlu0 0
        %1129 = vperm.xlu0 %1128, %v1094
        %v1130 = vpop.permute.xlu0 %1129
        %1131 = vset.pattern.permute.xlu0 0
        %1132 = vperm.xlu0 %1131, %v1095
        %v1133 = vpop.permute.xlu0 %1132
        %1134 = vset.pattern.permute.xlu0 0
        %1135 = vperm.xlu0 %1134, %v1096
        %v1136 = vpop.permute.xlu0 %1135
        %1137 = vset.pattern.permute.xlu0 0
        %1138 = vperm.xlu0 %1137, %v1097
        %v1139 = vpop.permute.xlu0 %1138
        %1140 = vset.pattern.permute.xlu0 0
        %1141 = vperm.xlu0 %1140, %v1098
        %v1142 = vpop.permute.xlu0 %1141
        %1143 = vset.pattern.permute.xlu0 0
        %1144 = vperm.xlu0 %1143, %v1099
        %v1145 = vpop.permute.xlu0 %1144
        %1146 = vset.pattern.permute.xlu0 0
        %1147 = vperm.xlu0 %1146, %v1100
        %v1148 = vpop.permute.xlu0 %1147
        %vm1149 = vcmp.eq.s32.totalorder %v620, %v1103
        %vm1150 = vcmp.eq.s32.totalorder %v620, %v1106
        %vm1151 = vcmp.eq.s32.totalorder %v620, %v1109
        %vm1152 = vcmp.eq.s32.totalorder %v620, %v1112
        %vm1153 = vcmp.eq.s32.totalorder %v620, %v1115
        %vm1154 = vcmp.eq.s32.totalorder %v620, %v1118
        %vm1155 = vcmp.eq.s32.totalorder %v620, %v1121
        %vm1156 = vcmp.eq.s32.totalorder %v620, %v1124
        %vm1157 = vcmp.eq.s32.totalorder %v620, %v1127
        %vm1158 = vcmp.eq.s32.totalorder %v620, %v1130
        %vm1159 = vcmp.eq.s32.totalorder %v620, %v1133
        %vm1160 = vcmp.eq.s32.totalorder %v620, %v1136
        %vm1161 = vcmp.eq.s32.totalorder %v620, %v1139
        %vm1162 = vcmp.eq.s32.totalorder %v620, %v1142
        %vm1163 = vcmp.eq.s32.totalorder %v620, %v1145
        %vm1164 = vcmp.eq.s32.totalorder %v620, %v1148
        %v1165 = vsel %vm1149, 1, 0
        %v1166 = vsel %vm1150, 1, 0
        %v1167 = vsel %vm1151, 1, 0
        %v1168 = vsel %vm1152, 1, 0
        %v1169 = vsel %vm1153, 1, 0
        %v1170 = vsel %vm1154, 1, 0
        %v1171 = vsel %vm1155, 1, 0
        %v1172 = vsel %vm1156, 1, 0
        %v1173 = vsel %vm1157, 1, 0
        %v1174 = vsel %vm1158, 1, 0
        %v1175 = vsel %vm1159, 1, 0
        %v1176 = vsel %vm1160, 1, 0
        %v1177 = vsel %vm1161, 1, 0
        %v1178 = vsel %vm1162, 1, 0
        %v1179 = vsel %vm1163, 1, 0
        %v1180 = vsel %vm1164, 1, 0
        %v1181 = vcvt.s32.f32 %v1165
        %v1182 = vcvt.s32.f32 %v1166
        %v1183 = vcvt.s32.f32 %v1167
        %v1184 = vcvt.s32.f32 %v1168
        %v1185 = vcvt.s32.f32 %v1169
        %v1186 = vcvt.s32.f32 %v1170
        %v1187 = vcvt.s32.f32 %v1171
        %v1188 = vcvt.s32.f32 %v1172
        %v1189 = vcvt.s32.f32 %v1173
        %v1190 = vcvt.s32.f32 %v1174
        %v1191 = vcvt.s32.f32 %v1175
        %v1192 = vcvt.s32.f32 %v1176
        %v1193 = vcvt.s32.f32 %v1177
        %v1194 = vcvt.s32.f32 %v1178
        %v1195 = vcvt.s32.f32 %v1179
        %v1196 = vcvt.s32.f32 %v1180
        %1198 = vset.pattern.permute.xlu0 0
        %1199 = vperm.xlu0 %1198, %v1037
        %v1200 = vpop.permute.xlu0 %1199
        %1203 = vset.pattern.permute.xlu0 0
        %1204 = vperm.xlu0 %1203, %v1038
        %v1205 = vpop.permute.xlu0 %1204
        %1208 = vset.pattern.permute.xlu0 0
        %1209 = vperm.xlu0 %1208, %v1039
        %v1210 = vpop.permute.xlu0 %1209
        %1213 = vset.pattern.permute.xlu0 0
        %1214 = vperm.xlu0 %1213, %v1040
        %v1215 = vpop.permute.xlu0 %1214
        %1218 = vset.pattern.permute.xlu0 0
        %1219 = vperm.xlu0 %1218, %v1041
        %v1220 = vpop.permute.xlu0 %1219
        %1223 = vset.pattern.permute.xlu0 0
        %1224 = vperm.xlu0 %1223, %v1042
        %v1225 = vpop.permute.xlu0 %1224
        %1228 = vset.pattern.permute.xlu0 0
        %1229 = vperm.xlu0 %1228, %v1043
        %v1230 = vpop.permute.xlu0 %1229
        %1233 = vset.pattern.permute.xlu0 0
        %1234 = vperm.xlu0 %1233, %v1044
        %v1235 = vpop.permute.xlu0 %1234
        %1238 = vset.pattern.permute.xlu0 0
        %1239 = vperm.xlu0 %1238, %v1045
        %v1240 = vpop.permute.xlu0 %1239
        %1243 = vset.pattern.permute.xlu0 0
        %1244 = vperm.xlu0 %1243, %v1046
        %v1245 = vpop.permute.xlu0 %1244
        %1248 = vset.pattern.permute.xlu0 0
        %1249 = vperm.xlu0 %1248, %v1047
        %v1250 = vpop.permute.xlu0 %1249
        %1253 = vset.pattern.permute.xlu0 0
        %1254 = vperm.xlu0 %1253, %v1048
        %v1255 = vpop.permute.xlu0 %1254
        %1258 = vset.pattern.permute.xlu0 0
        %1259 = vperm.xlu0 %1258, %v1049
        %v1260 = vpop.permute.xlu0 %1259
        %1263 = vset.pattern.permute.xlu0 0
        %1264 = vperm.xlu0 %1263, %v1050
        %v1265 = vpop.permute.xlu0 %1264
        %1268 = vset.pattern.permute.xlu0 0
        %1269 = vperm.xlu0 %1268, %v1051
        %v1270 = vpop.permute.xlu0 %1269
        %1273 = vset.pattern.permute.xlu0 0
        %1274 = vperm.xlu0 %1273, %v1052
        %v1275 = vpop.permute.xlu0 %1274
        %v1277 = vmul.f32 %v1181, %v1200
        %v1278 = vmul.f32 %v1182, %v1205
        %v1279 = vmul.f32 %v1183, %v1210
        %v1280 = vmul.f32 %v1184, %v1215
        %v1281 = vmul.f32 %v1185, %v1220
        %v1282 = vmul.f32 %v1186, %v1225
        %v1283 = vmul.f32 %v1187, %v1230
        %v1284 = vmul.f32 %v1188, %v1235
        %v1285 = vmul.f32 %v1189, %v1240
        %v1286 = vmul.f32 %v1190, %v1245
        %v1287 = vmul.f32 %v1191, %v1250
        %v1288 = vmul.f32 %v1192, %v1255
        %v1289 = vmul.f32 %v1193, %v1260
        %v1290 = vmul.f32 %v1194, %v1265
        %v1291 = vmul.f32 %v1195, %v1270
        %v1292 = vmul.f32 %v1196, %v1275
        %v1293 = vadd.f32 %v957, %v1277
        %v1294 = vadd.f32 %v958, %v1278
        %v1295 = vadd.f32 %v959, %v1279
        %v1296 = vadd.f32 %v960, %v1280
        %v1297 = vadd.f32 %v961, %v1281
        %v1298 = vadd.f32 %v962, %v1282
        %v1299 = vadd.f32 %v963, %v1283
        %v1300 = vadd.f32 %v964, %v1284
        %v1301 = vadd.f32 %v965, %v1285
        %v1302 = vadd.f32 %v966, %v1286
        %v1303 = vadd.f32 %v967, %v1287
        %v1304 = vadd.f32 %v968, %v1288
        %v1305 = vadd.f32 %v969, %v1289
        %v1306 = vadd.f32 %v970, %v1290
        %v1307 = vadd.f32 %v971, %v1291
        %v1308 = vadd.f32 %v972, %v1292
        %v1309 = vmul.f32 %v475, %v654
        %v1310 = vmul.f32 %v476, %v656
        %v1311 = vmul.f32 %v477, %v658
        %v1312 = vmul.f32 %v478, %v660
        %v1313 = vmul.f32 %v479, %v662
        %v1314 = vmul.f32 %v480, %v664
        %v1315 = vmul.f32 %v481, %v666
        %v1316 = vmul.f32 %v482, %v668
        %v1317 = vmul.f32 %v483, %v670
        %v1318 = vmul.f32 %v484, %v672
        %v1319 = vmul.f32 %v485, %v674
        %v1320 = vmul.f32 %v486, %v676
        %v1321 = vmul.f32 %v487, %v678
        %v1322 = vmul.f32 %v488, %v680
        %v1323 = vmul.f32 %v489, %v682
        %v1324 = vmul.f32 %v490, %v684
        %v1325 = vmul.u32 %v588, 4
        %v1326 = vmul.u32 %v590, 4
        %v1327 = vmul.u32 %v592, 4
        %v1328 = vmul.u32 %v594, 4
        %v1329 = vmul.u32 %v596, 4
        %v1330 = vmul.u32 %v598, 4
        %v1331 = vmul.u32 %v600, 4
        %v1332 = vmul.u32 %v602, 4
        %v1333 = vmul.u32 %v604, 4
        %v1334 = vmul.u32 %v606, 4
        %v1335 = vmul.u32 %v608, 4
        %v1336 = vmul.u32 %v610, 4
        %v1337 = vmul.u32 %v612, 4
        %v1338 = vmul.u32 %v614, 4
        %v1339 = vmul.u32 %v616, 4
        %v1340 = vmul.u32 %v618, 4
        %v1341 = vadd.s32 %v1325, %v734
        %v1342 = vadd.s32 %v1326, %v736
        %v1343 = vadd.s32 %v1327, %v738
        %v1344 = vadd.s32 %v1328, %v740
        %v1345 = vadd.s32 %v1329, %v742
        %v1346 = vadd.s32 %v1330, %v744
        %v1347 = vadd.s32 %v1331, %v746
        %v1348 = vadd.s32 %v1332, %v748
        %v1349 = vadd.s32 %v1333, %v750
        %v1350 = vadd.s32 %v1334, %v752
        %v1351 = vadd.s32 %v1335, %v754
        %v1352 = vadd.s32 %v1336, %v756
        %v1353 = vadd.s32 %v1337, %v758
        %v1354 = vadd.s32 %v1338, %v760
        %v1355 = vadd.s32 %v1339, %v762
        %v1356 = vadd.s32 %v1340, %v764
        %1357 = vset.pattern.permute.xlu0 0
        %1358 = vperm.xlu0 %1357, %v1341
        %v1359 = vpop.permute.xlu0 %1358
        %1360 = vset.pattern.permute.xlu0 0
        %1361 = vperm.xlu0 %1360, %v1342
        %v1362 = vpop.permute.xlu0 %1361
        %1363 = vset.pattern.permute.xlu0 0
        %1364 = vperm.xlu0 %1363, %v1343
        %v1365 = vpop.permute.xlu0 %1364
        %1366 = vset.pattern.permute.xlu0 0
        %1367 = vperm.xlu0 %1366, %v1344
        %v1368 = vpop.permute.xlu0 %1367
        %1369 = vset.pattern.permute.xlu0 0
        %1370 = vperm.xlu0 %1369, %v1345
        %v1371 = vpop.permute.xlu0 %1370
        %1372 = vset.pattern.permute.xlu0 0
        %1373 = vperm.xlu0 %1372, %v1346
        %v1374 = vpop.permute.xlu0 %1373
        %1375 = vset.pattern.permute.xlu0 0
        %1376 = vperm.xlu0 %1375, %v1347
        %v1377 = vpop.permute.xlu0 %1376
        %1378 = vset.pattern.permute.xlu0 0
        %1379 = vperm.xlu0 %1378, %v1348
        %v1380 = vpop.permute.xlu0 %1379
        %1381 = vset.pattern.permute.xlu0 0
        %1382 = vperm.xlu0 %1381, %v1349
        %v1383 = vpop.permute.xlu0 %1382
        %1384 = vset.pattern.permute.xlu0 0
        %1385 = vperm.xlu0 %1384, %v1350
        %v1386 = vpop.permute.xlu0 %1385
        %1387 = vset.pattern.permute.xlu0 0
        %1388 = vperm.xlu0 %1387, %v1351
        %v1389 = vpop.permute.xlu0 %1388
        %1390 = vset.pattern.permute.xlu0 0
        %1391 = vperm.xlu0 %1390, %v1352
        %v1392 = vpop.permute.xlu0 %1391
        %1393 = vset.pattern.permute.xlu0 0
        %1394 = vperm.xlu0 %1393, %v1353
        %v1395 = vpop.permute.xlu0 %1394
        %1396 = vset.pattern.permute.xlu0 0
        %1397 = vperm.xlu0 %1396, %v1354
        %v1398 = vpop.permute.xlu0 %1397
        %1399 = vset.pattern.permute.xlu0 0
        %1400 = vperm.xlu0 %1399, %v1355
        %v1401 = vpop.permute.xlu0 %1400
        %1402 = vset.pattern.permute.xlu0 0
        %1403 = vperm.xlu0 %1402, %v1356
        %v1404 = vpop.permute.xlu0 %1403
        %vm1405 = vcmp.eq.s32.totalorder %v620, %v1359
        %vm1406 = vcmp.eq.s32.totalorder %v620, %v1362
        %vm1407 = vcmp.eq.s32.totalorder %v620, %v1365
        %vm1408 = vcmp.eq.s32.totalorder %v620, %v1368
        %vm1409 = vcmp.eq.s32.totalorder %v620, %v1371
        %vm1410 = vcmp.eq.s32.totalorder %v620, %v1374
        %vm1411 = vcmp.eq.s32.totalorder %v620, %v1377
        %vm1412 = vcmp.eq.s32.totalorder %v620, %v1380
        %vm1413 = vcmp.eq.s32.totalorder %v620, %v1383
        %vm1414 = vcmp.eq.s32.totalorder %v620, %v1386
        %vm1415 = vcmp.eq.s32.totalorder %v620, %v1389
        %vm1416 = vcmp.eq.s32.totalorder %v620, %v1392
        %vm1417 = vcmp.eq.s32.totalorder %v620, %v1395
        %vm1418 = vcmp.eq.s32.totalorder %v620, %v1398
        %vm1419 = vcmp.eq.s32.totalorder %v620, %v1401
        %vm1420 = vcmp.eq.s32.totalorder %v620, %v1404
        %v1421 = vsel %vm1405, 1, 0
        %v1422 = vsel %vm1406, 1, 0
        %v1423 = vsel %vm1407, 1, 0
        %v1424 = vsel %vm1408, 1, 0
        %v1425 = vsel %vm1409, 1, 0
        %v1426 = vsel %vm1410, 1, 0
        %v1427 = vsel %vm1411, 1, 0
        %v1428 = vsel %vm1412, 1, 0
        %v1429 = vsel %vm1413, 1, 0
        %v1430 = vsel %vm1414, 1, 0
        %v1431 = vsel %vm1415, 1, 0
        %v1432 = vsel %vm1416, 1, 0
        %v1433 = vsel %vm1417, 1, 0
        %v1434 = vsel %vm1418, 1, 0
        %v1435 = vsel %vm1419, 1, 0
        %v1436 = vsel %vm1420, 1, 0
        %v1437 = vcvt.s32.f32 %v1421
        %v1438 = vcvt.s32.f32 %v1422
        %v1439 = vcvt.s32.f32 %v1423
        %v1440 = vcvt.s32.f32 %v1424
        %v1441 = vcvt.s32.f32 %v1425
        %v1442 = vcvt.s32.f32 %v1426
        %v1443 = vcvt.s32.f32 %v1427
        %v1444 = vcvt.s32.f32 %v1428
        %v1445 = vcvt.s32.f32 %v1429
        %v1446 = vcvt.s32.f32 %v1430
        %v1447 = vcvt.s32.f32 %v1431
        %v1448 = vcvt.s32.f32 %v1432
        %v1449 = vcvt.s32.f32 %v1433
        %v1450 = vcvt.s32.f32 %v1434
        %v1451 = vcvt.s32.f32 %v1435
        %v1452 = vcvt.s32.f32 %v1436
        %1454 = vset.pattern.permute.xlu0 0
        %1455 = vperm.xlu0 %1454, %v1309
        %v1456 = vpop.permute.xlu0 %1455
        %1459 = vset.pattern.permute.xlu0 0
        %1460 = vperm.xlu0 %1459, %v1310
        %v1461 = vpop.permute.xlu0 %1460
        %1464 = vset.pattern.permute.xlu0 0
        %1465 = vperm.xlu0 %1464, %v1311
        %v1466 = vpop.permute.xlu0 %1465
        %1469 = vset.pattern.permute.xlu0 0
        %1470 = vperm.xlu0 %1469, %v1312
        %v1471 = vpop.permute.xlu0 %1470
        %1474 = vset.pattern.permute.xlu0 0
        %1475 = vperm.xlu0 %1474, %v1313
        %v1476 = vpop.permute.xlu0 %1475
        %1479 = vset.pattern.permute.xlu0 0
        %1480 = vperm.xlu0 %1479, %v1314
        %v1481 = vpop.permute.xlu0 %1480
        %1484 = vset.pattern.permute.xlu0 0
        %1485 = vperm.xlu0 %1484, %v1315
        %v1486 = vpop.permute.xlu0 %1485
        %1489 = vset.pattern.permute.xlu0 0
        %1490 = vperm.xlu0 %1489, %v1316
        %v1491 = vpop.permute.xlu0 %1490
        %1494 = vset.pattern.permute.xlu0 0
        %1495 = vperm.xlu0 %1494, %v1317
        %v1496 = vpop.permute.xlu0 %1495
        %1499 = vset.pattern.permute.xlu0 0
        %1500 = vperm.xlu0 %1499, %v1318
        %v1501 = vpop.permute.xlu0 %1500
        %1504 = vset.pattern.permute.xlu0 0
        %1505 = vperm.xlu0 %1504, %v1319
        %v1506 = vpop.permute.xlu0 %1505
        %1509 = vset.pattern.permute.xlu0 0
        %1510 = vperm.xlu0 %1509, %v1320
        %v1511 = vpop.permute.xlu0 %1510
        %1514 = vset.pattern.permute.xlu0 0
        %1515 = vperm.xlu0 %1514, %v1321
        %v1516 = vpop.permute.xlu0 %1515
        %1519 = vset.pattern.permute.xlu0 0
        %1520 = vperm.xlu0 %1519, %v1322
        %v1521 = vpop.permute.xlu0 %1520
        %1524 = vset.pattern.permute.xlu0 0
        %1525 = vperm.xlu0 %1524, %v1323
        %v1526 = vpop.permute.xlu0 %1525
        %1529 = vset.pattern.permute.xlu0 0
        %1530 = vperm.xlu0 %1529, %v1324
        %v1531 = vpop.permute.xlu0 %1530
        %v1533 = vmul.f32 %v1437, %v1456
        %v1534 = vmul.f32 %v1438, %v1461
        %v1535 = vmul.f32 %v1439, %v1466
        %v1536 = vmul.f32 %v1440, %v1471
        %v1537 = vmul.f32 %v1441, %v1476
        %v1538 = vmul.f32 %v1442, %v1481
        %v1539 = vmul.f32 %v1443, %v1486
        %v1540 = vmul.f32 %v1444, %v1491
        %v1541 = vmul.f32 %v1445, %v1496
        %v1542 = vmul.f32 %v1446, %v1501
        %v1543 = vmul.f32 %v1447, %v1506
        %v1544 = vmul.f32 %v1448, %v1511
        %v1545 = vmul.f32 %v1449, %v1516
        %v1546 = vmul.f32 %v1450, %v1521
        %v1547 = vmul.f32 %v1451, %v1526
        %v1548 = vmul.f32 %v1452, %v1531
        %v1549 = vadd.f32 %v1293, %v1533
        %v1550 = vadd.f32 %v1294, %v1534
        %v1551 = vadd.f32 %v1295, %v1535
        %v1552 = vadd.f32 %v1296, %v1536
        %v1553 = vadd.f32 %v1297, %v1537
        %v1554 = vadd.f32 %v1298, %v1538
        %v1555 = vadd.f32 %v1299, %v1539
        %v1556 = vadd.f32 %v1300, %v1540
        %v1557 = vadd.f32 %v1301, %v1541
        %v1558 = vadd.f32 %v1302, %v1542
        %v1559 = vadd.f32 %v1303, %v1543
        %v1560 = vadd.f32 %v1304, %v1544
        %v1561 = vadd.f32 %v1305, %v1545
        %v1562 = vadd.f32 %v1306, %v1546
        %v1563 = vadd.f32 %v1307, %v1547
        %v1564 = vadd.f32 %v1308, %v1548
        %v1565 = vmul.f32 %v475, %v990
        %v1566 = vmul.f32 %v476, %v992
        %v1567 = vmul.f32 %v477, %v994
        %v1568 = vmul.f32 %v478, %v996
        %v1569 = vmul.f32 %v479, %v998
        %v1570 = vmul.f32 %v480, %v1000
        %v1571 = vmul.f32 %v481, %v1002
        %v1572 = vmul.f32 %v482, %v1004
        %v1573 = vmul.f32 %v483, %v1006
        %v1574 = vmul.f32 %v484, %v1008
        %v1575 = vmul.f32 %v485, %v1010
        %v1576 = vmul.f32 %v486, %v1012
        %v1577 = vmul.f32 %v487, %v1014
        %v1578 = vmul.f32 %v488, %v1016
        %v1579 = vmul.f32 %v489, %v1018
        %v1580 = vmul.f32 %v490, %v1020
        %v1581 = vadd.s32 %v1325, %v1054
        %v1582 = vadd.s32 %v1326, %v1056
        %v1583 = vadd.s32 %v1327, %v1058
        %v1584 = vadd.s32 %v1328, %v1060
        %v1585 = vadd.s32 %v1329, %v1062
        %v1586 = vadd.s32 %v1330, %v1064
        %v1587 = vadd.s32 %v1331, %v1066
        %v1588 = vadd.s32 %v1332, %v1068
        %v1589 = vadd.s32 %v1333, %v1070
        %v1590 = vadd.s32 %v1334, %v1072
        %v1591 = vadd.s32 %v1335, %v1074
        %v1592 = vadd.s32 %v1336, %v1076
        %v1593 = vadd.s32 %v1337, %v1078
        %v1594 = vadd.s32 %v1338, %v1080
        %v1595 = vadd.s32 %v1339, %v1082
        %v1596 = vadd.s32 %v1340, %v1084
        %1597 = vset.pattern.permute.xlu0 0
        %1598 = vperm.xlu0 %1597, %v1581
        %v1599 = vpop.permute.xlu0 %1598
        %1600 = vset.pattern.permute.xlu0 0
        %1601 = vperm.xlu0 %1600, %v1582
        %v1602 = vpop.permute.xlu0 %1601
        %1603 = vset.pattern.permute.xlu0 0
        %1604 = vperm.xlu0 %1603, %v1583
        %v1605 = vpop.permute.xlu0 %1604
        %1606 = vset.pattern.permute.xlu0 0
        %1607 = vperm.xlu0 %1606, %v1584
        %v1608 = vpop.permute.xlu0 %1607
        %1609 = vset.pattern.permute.xlu0 0
        %1610 = vperm.xlu0 %1609, %v1585
        %v1611 = vpop.permute.xlu0 %1610
        %1612 = vset.pattern.permute.xlu0 0
        %1613 = vperm.xlu0 %1612, %v1586
        %v1614 = vpop.permute.xlu0 %1613
        %1615 = vset.pattern.permute.xlu0 0
        %1616 = vperm.xlu0 %1615, %v1587
        %v1617 = vpop.permute.xlu0 %1616
        %1618 = vset.pattern.permute.xlu0 0
        %1619 = vperm.xlu0 %1618, %v1588
        %v1620 = vpop.permute.xlu0 %1619
        %1621 = vset.pattern.permute.xlu0 0
        %1622 = vperm.xlu0 %1621, %v1589
        %v1623 = vpop.permute.xlu0 %1622
        %1624 = vset.pattern.permute.xlu0 0
        %1625 = vperm.xlu0 %1624, %v1590
        %v1626 = vpop.permute.xlu0 %1625
        %1627 = vset.pattern.permute.xlu0 0
        %1628 = vperm.xlu0 %1627, %v1591
        %v1629 = vpop.permute.xlu0 %1628
        %1630 = vset.pattern.permute.xlu0 0
        %1631 = vperm.xlu0 %1630, %v1592
        %v1632 = vpop.permute.xlu0 %1631
        %1633 = vset.pattern.permute.xlu0 0
        %1634 = vperm.xlu0 %1633, %v1593
        %v1635 = vpop.permute.xlu0 %1634
        %1636 = vset.pattern.permute.xlu0 0
        %1637 = vperm.xlu0 %1636, %v1594
        %v1638 = vpop.permute.xlu0 %1637
        %1639 = vset.pattern.permute.xlu0 0
        %1640 = vperm.xlu0 %1639, %v1595
        %v1641 = vpop.permute.xlu0 %1640
        %1642 = vset.pattern.permute.xlu0 0
        %1643 = vperm.xlu0 %1642, %v1596
        %v1644 = vpop.permute.xlu0 %1643
        %vm1645 = vcmp.eq.s32.totalorder %v620, %v1599
        %vm1646 = vcmp.eq.s32.totalorder %v620, %v1602
        %vm1647 = vcmp.eq.s32.totalorder %v620, %v1605
        %vm1648 = vcmp.eq.s32.totalorder %v620, %v1608
        %vm1649 = vcmp.eq.s32.totalorder %v620, %v1611
        %vm1650 = vcmp.eq.s32.totalorder %v620, %v1614
        %vm1651 = vcmp.eq.s32.totalorder %v620, %v1617
        %vm1652 = vcmp.eq.s32.totalorder %v620, %v1620
        %vm1653 = vcmp.eq.s32.totalorder %v620, %v1623
        %vm1654 = vcmp.eq.s32.totalorder %v620, %v1626
        %vm1655 = vcmp.eq.s32.totalorder %v620, %v1629
        %vm1656 = vcmp.eq.s32.totalorder %v620, %v1632
        %vm1657 = vcmp.eq.s32.totalorder %v620, %v1635
        %vm1658 = vcmp.eq.s32.totalorder %v620, %v1638
        %vm1659 = vcmp.eq.s32.totalorder %v620, %v1641
        %vm1660 = vcmp.eq.s32.totalorder %v620, %v1644
        %v1661 = vsel %vm1645, 1, 0
        %v1662 = vsel %vm1646, 1, 0
        %v1663 = vsel %vm1647, 1, 0
        %v1664 = vsel %vm1648, 1, 0
        %v1665 = vsel %vm1649, 1, 0
        %v1666 = vsel %vm1650, 1, 0
        %v1667 = vsel %vm1651, 1, 0
        %v1668 = vsel %vm1652, 1, 0
        %v1669 = vsel %vm1653, 1, 0
        %v1670 = vsel %vm1654, 1, 0
        %v1671 = vsel %vm1655, 1, 0
        %v1672 = vsel %vm1656, 1, 0
        %v1673 = vsel %vm1657, 1, 0
        %v1674 = vsel %vm1658, 1, 0
        %v1675 = vsel %vm1659, 1, 0
        %v1676 = vsel %vm1660, 1, 0
        %v1677 = vcvt.s32.f32 %v1661
        %v1678 = vcvt.s32.f32 %v1662
        %v1679 = vcvt.s32.f32 %v1663
        %v1680 = vcvt.s32.f32 %v1664
        %v1681 = vcvt.s32.f32 %v1665
        %v1682 = vcvt.s32.f32 %v1666
        %v1683 = vcvt.s32.f32 %v1667
        %v1684 = vcvt.s32.f32 %v1668
        %v1685 = vcvt.s32.f32 %v1669
        %v1686 = vcvt.s32.f32 %v1670
        %v1687 = vcvt.s32.f32 %v1671
        %v1688 = vcvt.s32.f32 %v1672
        %v1689 = vcvt.s32.f32 %v1673
        %v1690 = vcvt.s32.f32 %v1674
        %v1691 = vcvt.s32.f32 %v1675
        %v1692 = vcvt.s32.f32 %v1676
        %1694 = vset.pattern.permute.xlu0 0
        %1695 = vperm.xlu0 %1694, %v1565
        %v1696 = vpop.permute.xlu0 %1695
        %1699 = vset.pattern.permute.xlu0 0
        %1700 = vperm.xlu0 %1699, %v1566
        %v1701 = vpop.permute.xlu0 %1700
        %1704 = vset.pattern.permute.xlu0 0
        %1705 = vperm.xlu0 %1704, %v1567
        %v1706 = vpop.permute.xlu0 %1705
        %1709 = vset.pattern.permute.xlu0 0
        %1710 = vperm.xlu0 %1709, %v1568
        %v1711 = vpop.permute.xlu0 %1710
        %1714 = vset.pattern.permute.xlu0 0
        %1715 = vperm.xlu0 %1714, %v1569
        %v1716 = vpop.permute.xlu0 %1715
        %1719 = vset.pattern.permute.xlu0 0
        %1720 = vperm.xlu0 %1719, %v1570
        %v1721 = vpop.permute.xlu0 %1720
        %1724 = vset.pattern.permute.xlu0 0
        %1725 = vperm.xlu0 %1724, %v1571
        %v1726 = vpop.permute.xlu0 %1725
        %1729 = vset.pattern.permute.xlu0 0
        %1730 = vperm.xlu0 %1729, %v1572
        %v1731 = vpop.permute.xlu0 %1730
        %1734 = vset.pattern.permute.xlu0 0
        %1735 = vperm.xlu0 %1734, %v1573
        %v1736 = vpop.permute.xlu0 %1735
        %1739 = vset.pattern.permute.xlu0 0
        %1740 = vperm.xlu0 %1739, %v1574
        %v1741 = vpop.permute.xlu0 %1740
        %1744 = vset.pattern.permute.xlu0 0
        %1745 = vperm.xlu0 %1744, %v1575
        %v1746 = vpop.permute.xlu0 %1745
        %1749 = vset.pattern.permute.xlu0 0
        %1750 = vperm.xlu0 %1749, %v1576
        %v1751 = vpop.permute.xlu0 %1750
        %1754 = vset.pattern.permute.xlu0 0
        %1755 = vperm.xlu0 %1754, %v1577
        %v1756 = vpop.permute.xlu0 %1755
        %1759 = vset.pattern.permute.xlu0 0
        %1760 = vperm.xlu0 %1759, %v1578
        %v1761 = vpop.permute.xlu0 %1760
        %1764 = vset.pattern.permute.xlu0 0
        %1765 = vperm.xlu0 %1764, %v1579
        %v1766 = vpop.permute.xlu0 %1765
        %1769 = vset.pattern.permute.xlu0 0
        %1770 = vperm.xlu0 %1769, %v1580
        %v1771 = vpop.permute.xlu0 %1770
        %v1773 = vmul.f32 %v1677, %v1696
        %v1774 = vmul.f32 %v1678, %v1701
        %v1775 = vmul.f32 %v1679, %v1706
        %v1776 = vmul.f32 %v1680, %v1711
        %v1777 = vmul.f32 %v1681, %v1716
        %v1778 = vmul.f32 %v1682, %v1721
        %v1779 = vmul.f32 %v1683, %v1726
        %v1780 = vmul.f32 %v1684, %v1731
        %v1781 = vmul.f32 %v1685, %v1736
        %v1782 = vmul.f32 %v1686, %v1741
        %v1783 = vmul.f32 %v1687, %v1746
        %v1784 = vmul.f32 %v1688, %v1751
        %v1785 = vmul.f32 %v1689, %v1756
        %v1786 = vmul.f32 %v1690, %v1761
        %v1787 = vmul.f32 %v1691, %v1766
        %v1788 = vmul.f32 %v1692, %v1771
        %v1789 = vadd.f32 %v1549, %v1773
        %v1790 = vadd.f32 %v1550, %v1774
        %v1791 = vadd.f32 %v1551, %v1775
        %v1792 = vadd.f32 %v1552, %v1776
        %v1793 = vadd.f32 %v1553, %v1777
        %v1794 = vadd.f32 %v1554, %v1778
        %v1795 = vadd.f32 %v1555, %v1779
        %v1796 = vadd.f32 %v1556, %v1780
        %v1797 = vadd.f32 %v1557, %v1781
        %v1798 = vadd.f32 %v1558, %v1782
        %v1799 = vadd.f32 %v1559, %v1783
        %v1800 = vadd.f32 %v1560, %v1784
        %v1801 = vadd.f32 %v1561, %v1785
        %v1802 = vadd.f32 %v1562, %v1786
        %v1803 = vadd.f32 %v1563, %v1787
        %v1804 = vadd.f32 %v1564, %v1788
        %v1805 = vpack.c.bf16 %v1790, %v1789
        %v1806 = vpack.c.bf16 %v1792, %v1791
        %v1807 = vpack.c.bf16 %v1794, %v1793
        %v1808 = vpack.c.bf16 %v1796, %v1795
        %v1809 = vpack.c.bf16 %v1798, %v1797
        %v1810 = vpack.c.bf16 %v1800, %v1799
        %v1811 = vpack.c.bf16 %v1802, %v1801
        %v1812 = vpack.c.bf16 %v1804, %v1803
        %1813 = vrot.lane.b32.xlu0 %v621, 126
        %v1814 = vpop.permute.xlu0 %1813
        %1815 = vrot.lane.b32.xlu0 %v622, 126
        %v1816 = vpop.permute.xlu0 %1815
        %1817 = vrot.lane.b32.xlu0 %v623, 126
        %v1818 = vpop.permute.xlu0 %1817
        %1819 = vrot.lane.b32.xlu0 %v624, 126
        %v1820 = vpop.permute.xlu0 %1819
        %1821 = vrot.lane.b32.xlu0 %v625, 126
        %v1822 = vpop.permute.xlu0 %1821
        %1823 = vrot.lane.b32.xlu0 %v626, 126
        %v1824 = vpop.permute.xlu0 %1823
        %1825 = vrot.lane.b32.xlu0 %v627, 126
        %v1826 = vpop.permute.xlu0 %1825
        %1827 = vrot.lane.b32.xlu0 %v628, 126
        %v1828 = vpop.permute.xlu0 %1827
        %1829 = vrot.lane.b32.xlu0 %v629, 126
        %v1830 = vpop.permute.xlu0 %1829
        %1831 = vrot.lane.b32.xlu0 %v630, 126
        %v1832 = vpop.permute.xlu0 %1831
        %1833 = vrot.lane.b32.xlu0 %v631, 126
        %v1834 = vpop.permute.xlu0 %1833
        %1835 = vrot.lane.b32.xlu0 %v632, 126
        %v1836 = vpop.permute.xlu0 %1835
        %1837 = vrot.lane.b32.xlu0 %v633, 126
        %v1838 = vpop.permute.xlu0 %1837
        %1839 = vrot.lane.b32.xlu0 %v634, 126
        %v1840 = vpop.permute.xlu0 %1839
        %1841 = vrot.lane.b32.xlu0 %v635, 126
        %v1842 = vpop.permute.xlu0 %1841
        %1843 = vrot.lane.b32.xlu0 %v636, 126
        %v1844 = vpop.permute.xlu0 %1843
        %v1861 = vmul.f32 %v621, %v1814
        %v1862 = vmul.f32 %v622, %v1816
        %v1863 = vmul.f32 %v623, %v1818
        %v1864 = vmul.f32 %v624, %v1820
        %v1865 = vmul.f32 %v625, %v1822
        %v1866 = vmul.f32 %v626, %v1824
        %v1867 = vmul.f32 %v627, %v1826
        %v1868 = vmul.f32 %v628, %v1828
        %v1869 = vmul.f32 %v629, %v1830
        %v1870 = vmul.f32 %v630, %v1832
        %v1871 = vmul.f32 %v631, %v1834
        %v1872 = vmul.f32 %v632, %v1836
        %v1873 = vmul.f32 %v633, %v1838
        %v1874 = vmul.f32 %v634, %v1840
        %v1875 = vmul.f32 %v635, %v1842
        %v1876 = vmul.f32 %v636, %v1844
        %1877 = vrot.lane.b32.xlu0 %v540, 126
        %v1878 = vpop.permute.xlu0 %1877
        %1879 = vrot.lane.b32.xlu0 %v542, 126
        %v1880 = vpop.permute.xlu0 %1879
        %1881 = vrot.lane.b32.xlu0 %v544, 126
        %v1882 = vpop.permute.xlu0 %1881
        %1883 = vrot.lane.b32.xlu0 %v546, 126
        %v1884 = vpop.permute.xlu0 %1883
        %1885 = vrot.lane.b32.xlu0 %v548, 126
        %v1886 = vpop.permute.xlu0 %1885
        %1887 = vrot.lane.b32.xlu0 %v550, 126
        %v1888 = vpop.permute.xlu0 %1887
        %1889 = vrot.lane.b32.xlu0 %v552, 126
        %v1890 = vpop.permute.xlu0 %1889
        %1891 = vrot.lane.b32.xlu0 %v554, 126
        %v1892 = vpop.permute.xlu0 %1891
        %1893 = vrot.lane.b32.xlu0 %v556, 126
        %v1894 = vpop.permute.xlu0 %1893
        %1895 = vrot.lane.b32.xlu0 %v558, 126
        %v1896 = vpop.permute.xlu0 %1895
        %1897 = vrot.lane.b32.xlu0 %v560, 126
        %v1898 = vpop.permute.xlu0 %1897
        %1899 = vrot.lane.b32.xlu0 %v562, 126
        %v1900 = vpop.permute.xlu0 %1899
        %1901 = vrot.lane.b32.xlu0 %v564, 126
        %v1902 = vpop.permute.xlu0 %1901
        %1903 = vrot.lane.b32.xlu0 %v566, 126
        %v1904 = vpop.permute.xlu0 %1903
        %1905 = vrot.lane.b32.xlu0 %v568, 126
        %v1906 = vpop.permute.xlu0 %1905
        %1907 = vrot.lane.b32.xlu0 %v570, 126
        %v1908 = vpop.permute.xlu0 %1907
        %v1909 = vadd.s32 %v717, %v1878
        %v1910 = vadd.s32 %v718, %v1880
        %v1911 = vadd.s32 %v719, %v1882
        %v1912 = vadd.s32 %v720, %v1884
        %v1913 = vadd.s32 %v721, %v1886
        %v1914 = vadd.s32 %v722, %v1888
        %v1915 = vadd.s32 %v723, %v1890
        %v1916 = vadd.s32 %v724, %v1892
        %v1917 = vadd.s32 %v725, %v1894
        %v1918 = vadd.s32 %v726, %v1896
        %v1919 = vadd.s32 %v727, %v1898
        %v1920 = vadd.s32 %v728, %v1900
        %v1921 = vadd.s32 %v729, %v1902
        %v1922 = vadd.s32 %v730, %v1904
        %v1923 = vadd.s32 %v731, %v1906
        %v1924 = vadd.s32 %v732, %v1908
        %1925 = vset.pattern.permute.xlu0 0
        %1926 = vperm.xlu0 %1925, %v1909
        %v1927 = vpop.permute.xlu0 %1926
        %1928 = vset.pattern.permute.xlu0 0
        %1929 = vperm.xlu0 %1928, %v1910
        %v1930 = vpop.permute.xlu0 %1929
        %1931 = vset.pattern.permute.xlu0 0
        %1932 = vperm.xlu0 %1931, %v1911
        %v1933 = vpop.permute.xlu0 %1932
        %1934 = vset.pattern.permute.xlu0 0
        %1935 = vperm.xlu0 %1934, %v1912
        %v1936 = vpop.permute.xlu0 %1935
        %1937 = vset.pattern.permute.xlu0 0
        %1938 = vperm.xlu0 %1937, %v1913
        %v1939 = vpop.permute.xlu0 %1938
        %1940 = vset.pattern.permute.xlu0 0
        %1941 = vperm.xlu0 %1940, %v1914
        %v1942 = vpop.permute.xlu0 %1941
        %1943 = vset.pattern.permute.xlu0 0
        %1944 = vperm.xlu0 %1943, %v1915
        %v1945 = vpop.permute.xlu0 %1944
        %1946 = vset.pattern.permute.xlu0 0
        %1947 = vperm.xlu0 %1946, %v1916
        %v1948 = vpop.permute.xlu0 %1947
        %1949 = vset.pattern.permute.xlu0 0
        %1950 = vperm.xlu0 %1949, %v1917
        %v1951 = vpop.permute.xlu0 %1950
        %1952 = vset.pattern.permute.xlu0 0
        %1953 = vperm.xlu0 %1952, %v1918
        %v1954 = vpop.permute.xlu0 %1953
        %1955 = vset.pattern.permute.xlu0 0
        %1956 = vperm.xlu0 %1955, %v1919
        %v1957 = vpop.permute.xlu0 %1956
        %1958 = vset.pattern.permute.xlu0 0
        %1959 = vperm.xlu0 %1958, %v1920
        %v1960 = vpop.permute.xlu0 %1959
        %1961 = vset.pattern.permute.xlu0 0
        %1962 = vperm.xlu0 %1961, %v1921
        %v1963 = vpop.permute.xlu0 %1962
        %1964 = vset.pattern.permute.xlu0 0
        %1965 = vperm.xlu0 %1964, %v1922
        %v1966 = vpop.permute.xlu0 %1965
        %1967 = vset.pattern.permute.xlu0 0
        %1968 = vperm.xlu0 %1967, %v1923
        %v1969 = vpop.permute.xlu0 %1968
        %1970 = vset.pattern.permute.xlu0 0
        %1971 = vperm.xlu0 %1970, %v1924
        %v1972 = vpop.permute.xlu0 %1971
        %vm1973 = vcmp.eq.s32.totalorder %v620, %v1927
        %vm1974 = vcmp.eq.s32.totalorder %v620, %v1930
        %vm1975 = vcmp.eq.s32.totalorder %v620, %v1933
        %vm1976 = vcmp.eq.s32.totalorder %v620, %v1936
        %vm1977 = vcmp.eq.s32.totalorder %v620, %v1939
        %vm1978 = vcmp.eq.s32.totalorder %v620, %v1942
        %vm1979 = vcmp.eq.s32.totalorder %v620, %v1945
        %vm1980 = vcmp.eq.s32.totalorder %v620, %v1948
        %vm1981 = vcmp.eq.s32.totalorder %v620, %v1951
        %vm1982 = vcmp.eq.s32.totalorder %v620, %v1954
        %vm1983 = vcmp.eq.s32.totalorder %v620, %v1957
        %vm1984 = vcmp.eq.s32.totalorder %v620, %v1960
        %vm1985 = vcmp.eq.s32.totalorder %v620, %v1963
        %vm1986 = vcmp.eq.s32.totalorder %v620, %v1966
        %vm1987 = vcmp.eq.s32.totalorder %v620, %v1969
        %vm1988 = vcmp.eq.s32.totalorder %v620, %v1972
        %v1989 = vsel %vm1973, 1, 0
        %v1990 = vsel %vm1974, 1, 0
        %v1991 = vsel %vm1975, 1, 0
        %v1992 = vsel %vm1976, 1, 0
        %v1993 = vsel %vm1977, 1, 0
        %v1994 = vsel %vm1978, 1, 0
        %v1995 = vsel %vm1979, 1, 0
        %v1996 = vsel %vm1980, 1, 0
        %v1997 = vsel %vm1981, 1, 0
        %v1998 = vsel %vm1982, 1, 0
        %v1999 = vsel %vm1983, 1, 0
        %v2000 = vsel %vm1984, 1, 0
        %v2001 = vsel %vm1985, 1, 0
        %v2002 = vsel %vm1986, 1, 0
        %v2003 = vsel %vm1987, 1, 0
        %v2004 = vsel %vm1988, 1, 0
        %v2005 = vcvt.s32.f32 %v1989
        %v2006 = vcvt.s32.f32 %v1990
        %v2007 = vcvt.s32.f32 %v1991
        %v2008 = vcvt.s32.f32 %v1992
        %v2009 = vcvt.s32.f32 %v1993
        %v2010 = vcvt.s32.f32 %v1994
        %v2011 = vcvt.s32.f32 %v1995
        %v2012 = vcvt.s32.f32 %v1996
        %v2013 = vcvt.s32.f32 %v1997
        %v2014 = vcvt.s32.f32 %v1998
        %v2015 = vcvt.s32.f32 %v1999
        %v2016 = vcvt.s32.f32 %v2000
        %v2017 = vcvt.s32.f32 %v2001
        %v2018 = vcvt.s32.f32 %v2002
        %v2019 = vcvt.s32.f32 %v2003
        %v2020 = vcvt.s32.f32 %v2004
        %2022 = vset.pattern.permute.xlu0 0
        %2023 = vperm.xlu0 %2022, %v1861
        %v2024 = vpop.permute.xlu0 %2023
        %2027 = vset.pattern.permute.xlu0 0
        %2028 = vperm.xlu0 %2027, %v1862
        %v2029 = vpop.permute.xlu0 %2028
        %2032 = vset.pattern.permute.xlu0 0
        %2033 = vperm.xlu0 %2032, %v1863
        %v2034 = vpop.permute.xlu0 %2033
        %2037 = vset.pattern.permute.xlu0 0
        %2038 = vperm.xlu0 %2037, %v1864
        %v2039 = vpop.permute.xlu0 %2038
        %2042 = vset.pattern.permute.xlu0 0
        %2043 = vperm.xlu0 %2042, %v1865
        %v2044 = vpop.permute.xlu0 %2043
        %2047 = vset.pattern.permute.xlu0 0
        %2048 = vperm.xlu0 %2047, %v1866
        %v2049 = vpop.permute.xlu0 %2048
        %2052 = vset.pattern.permute.xlu0 0
        %2053 = vperm.xlu0 %2052, %v1867
        %v2054 = vpop.permute.xlu0 %2053
        %2057 = vset.pattern.permute.xlu0 0
        %2058 = vperm.xlu0 %2057, %v1868
        %v2059 = vpop.permute.xlu0 %2058
        %2062 = vset.pattern.permute.xlu0 0
        %2063 = vperm.xlu0 %2062, %v1869
        %v2064 = vpop.permute.xlu0 %2063
        %2067 = vset.pattern.permute.xlu0 0
        %2068 = vperm.xlu0 %2067, %v1870
        %v2069 = vpop.permute.xlu0 %2068
        %2072 = vset.pattern.permute.xlu0 0
        %2073 = vperm.xlu0 %2072, %v1871
        %v2074 = vpop.permute.xlu0 %2073
        %2077 = vset.pattern.permute.xlu0 0
        %2078 = vperm.xlu0 %2077, %v1872
        %v2079 = vpop.permute.xlu0 %2078
        %2082 = vset.pattern.permute.xlu0 0
        %2083 = vperm.xlu0 %2082, %v1873
        %v2084 = vpop.permute.xlu0 %2083
        %2087 = vset.pattern.permute.xlu0 0
        %2088 = vperm.xlu0 %2087, %v1874
        %v2089 = vpop.permute.xlu0 %2088
        %2092 = vset.pattern.permute.xlu0 0
        %2093 = vperm.xlu0 %2092, %v1875
        %v2094 = vpop.permute.xlu0 %2093
        %2097 = vset.pattern.permute.xlu0 0
        %2098 = vperm.xlu0 %2097, %v1876
        %v2099 = vpop.permute.xlu0 %2098
        %v2101 = vmul.f32 %v2005, %v2024
        %v2102 = vmul.f32 %v2006, %v2029
        %v2103 = vmul.f32 %v2007, %v2034
        %v2104 = vmul.f32 %v2008, %v2039
        %v2105 = vmul.f32 %v2009, %v2044
        %v2106 = vmul.f32 %v2010, %v2049
        %v2107 = vmul.f32 %v2011, %v2054
        %v2108 = vmul.f32 %v2012, %v2059
        %v2109 = vmul.f32 %v2013, %v2064
        %v2110 = vmul.f32 %v2014, %v2069
        %v2111 = vmul.f32 %v2015, %v2074
        %v2112 = vmul.f32 %v2016, %v2079
        %v2113 = vmul.f32 %v2017, %v2084
        %v2114 = vmul.f32 %v2018, %v2089
        %v2115 = vmul.f32 %v2019, %v2094
        %v2116 = vmul.f32 %v2020, %v2099
        %2117 = vrot.lane.b32.xlu0 %v475, 126
        %v2118 = vpop.permute.xlu0 %2117
        %2119 = vrot.lane.b32.xlu0 %v476, 126
        %v2120 = vpop.permute.xlu0 %2119
        %2121 = vrot.lane.b32.xlu0 %v477, 126
        %v2122 = vpop.permute.xlu0 %2121
        %2123 = vrot.lane.b32.xlu0 %v478, 126
        %v2124 = vpop.permute.xlu0 %2123
        %2125 = vrot.lane.b32.xlu0 %v479, 126
        %v2126 = vpop.permute.xlu0 %2125
        %2127 = vrot.lane.b32.xlu0 %v480, 126
        %v2128 = vpop.permute.xlu0 %2127
        %2129 = vrot.lane.b32.xlu0 %v481, 126
        %v2130 = vpop.permute.xlu0 %2129
        %2131 = vrot.lane.b32.xlu0 %v482, 126
        %v2132 = vpop.permute.xlu0 %2131
        %2133 = vrot.lane.b32.xlu0 %v483, 126
        %v2134 = vpop.permute.xlu0 %2133
        %2135 = vrot.lane.b32.xlu0 %v484, 126
        %v2136 = vpop.permute.xlu0 %2135
        %2137 = vrot.lane.b32.xlu0 %v485, 126
        %v2138 = vpop.permute.xlu0 %2137
        %2139 = vrot.lane.b32.xlu0 %v486, 126
        %v2140 = vpop.permute.xlu0 %2139
        %2141 = vrot.lane.b32.xlu0 %v487, 126
        %v2142 = vpop.permute.xlu0 %2141
        %2143 = vrot.lane.b32.xlu0 %v488, 126
        %v2144 = vpop.permute.xlu0 %2143
        %2145 = vrot.lane.b32.xlu0 %v489, 126
        %v2146 = vpop.permute.xlu0 %2145
        %2147 = vrot.lane.b32.xlu0 %v490, 126
        %v2148 = vpop.permute.xlu0 %2147
        %v2165 = vmul.f32 %v621, %v2118
        %v2166 = vmul.f32 %v622, %v2120
        %v2167 = vmul.f32 %v623, %v2122
        %v2168 = vmul.f32 %v624, %v2124
        %v2169 = vmul.f32 %v625, %v2126
        %v2170 = vmul.f32 %v626, %v2128
        %v2171 = vmul.f32 %v627, %v2130
        %v2172 = vmul.f32 %v628, %v2132
        %v2173 = vmul.f32 %v629, %v2134
        %v2174 = vmul.f32 %v630, %v2136
        %v2175 = vmul.f32 %v631, %v2138
        %v2176 = vmul.f32 %v632, %v2140
        %v2177 = vmul.f32 %v633, %v2142
        %v2178 = vmul.f32 %v634, %v2144
        %v2179 = vmul.f32 %v635, %v2146
        %v2180 = vmul.f32 %v636, %v2148
        %2181 = vrot.lane.b32.xlu0 %v588, 126
        %v2182 = vpop.permute.xlu0 %2181
        %2183 = vrot.lane.b32.xlu0 %v590, 126
        %v2184 = vpop.permute.xlu0 %2183
        %2185 = vrot.lane.b32.xlu0 %v592, 126
        %v2186 = vpop.permute.xlu0 %2185
        %2187 = vrot.lane.b32.xlu0 %v594, 126
        %v2188 = vpop.permute.xlu0 %2187
        %2189 = vrot.lane.b32.xlu0 %v596, 126
        %v2190 = vpop.permute.xlu0 %2189
        %2191 = vrot.lane.b32.xlu0 %v598, 126
        %v2192 = vpop.permute.xlu0 %2191
        %2193 = vrot.lane.b32.xlu0 %v600, 126
        %v2194 = vpop.permute.xlu0 %2193
        %2195 = vrot.lane.b32.xlu0 %v602, 126
        %v2196 = vpop.permute.xlu0 %2195
        %2197 = vrot.lane.b32.xlu0 %v604, 126
        %v2198 = vpop.permute.xlu0 %2197
        %2199 = vrot.lane.b32.xlu0 %v606, 126
        %v2200 = vpop.permute.xlu0 %2199
        %2201 = vrot.lane.b32.xlu0 %v608, 126
        %v2202 = vpop.permute.xlu0 %2201
        %2203 = vrot.lane.b32.xlu0 %v610, 126
        %v2204 = vpop.permute.xlu0 %2203
        %2205 = vrot.lane.b32.xlu0 %v612, 126
        %v2206 = vpop.permute.xlu0 %2205
        %2207 = vrot.lane.b32.xlu0 %v614, 126
        %v2208 = vpop.permute.xlu0 %2207
        %2209 = vrot.lane.b32.xlu0 %v616, 126
        %v2210 = vpop.permute.xlu0 %2209
        %2211 = vrot.lane.b32.xlu0 %v618, 126
        %v2212 = vpop.permute.xlu0 %2211
        %v2213 = vadd.s32 %v717, %v2182
        %v2214 = vadd.s32 %v718, %v2184
        %v2215 = vadd.s32 %v719, %v2186
        %v2216 = vadd.s32 %v720, %v2188
        %v2217 = vadd.s32 %v721, %v2190
        %v2218 = vadd.s32 %v722, %v2192
        %v2219 = vadd.s32 %v723, %v2194
        %v2220 = vadd.s32 %v724, %v2196
        %v2221 = vadd.s32 %v725, %v2198
        %v2222 = vadd.s32 %v726, %v2200
        %v2223 = vadd.s32 %v727, %v2202
        %v2224 = vadd.s32 %v728, %v2204
        %v2225 = vadd.s32 %v729, %v2206
        %v2226 = vadd.s32 %v730, %v2208
        %v2227 = vadd.s32 %v731, %v2210
        %v2228 = vadd.s32 %v732, %v2212
        %2229 = vset.pattern.permute.xlu0 0
        %2230 = vperm.xlu0 %2229, %v2213
        %v2231 = vpop.permute.xlu0 %2230
        %2232 = vset.pattern.permute.xlu0 0
        %2233 = vperm.xlu0 %2232, %v2214
        %v2234 = vpop.permute.xlu0 %2233
        %2235 = vset.pattern.permute.xlu0 0
        %2236 = vperm.xlu0 %2235, %v2215
        %v2237 = vpop.permute.xlu0 %2236
        %2238 = vset.pattern.permute.xlu0 0
        %2239 = vperm.xlu0 %2238, %v2216
        %v2240 = vpop.permute.xlu0 %2239
        %2241 = vset.pattern.permute.xlu0 0
        %2242 = vperm.xlu0 %2241, %v2217
        %v2243 = vpop.permute.xlu0 %2242
        %2244 = vset.pattern.permute.xlu0 0
        %2245 = vperm.xlu0 %2244, %v2218
        %v2246 = vpop.permute.xlu0 %2245
        %2247 = vset.pattern.permute.xlu0 0
        %2248 = vperm.xlu0 %2247, %v2219
        %v2249 = vpop.permute.xlu0 %2248
        %2250 = vset.pattern.permute.xlu0 0
        %2251 = vperm.xlu0 %2250, %v2220
        %v2252 = vpop.permute.xlu0 %2251
        %2253 = vset.pattern.permute.xlu0 0
        %2254 = vperm.xlu0 %2253, %v2221
        %v2255 = vpop.permute.xlu0 %2254
        %2256 = vset.pattern.permute.xlu0 0
        %2257 = vperm.xlu0 %2256, %v2222
        %v2258 = vpop.permute.xlu0 %2257
        %2259 = vset.pattern.permute.xlu0 0
        %2260 = vperm.xlu0 %2259, %v2223
        %v2261 = vpop.permute.xlu0 %2260
        %2262 = vset.pattern.permute.xlu0 0
        %2263 = vperm.xlu0 %2262, %v2224
        %v2264 = vpop.permute.xlu0 %2263
        %2265 = vset.pattern.permute.xlu0 0
        %2266 = vperm.xlu0 %2265, %v2225
        %v2267 = vpop.permute.xlu0 %2266
        %2268 = vset.pattern.permute.xlu0 0
        %2269 = vperm.xlu0 %2268, %v2226
        %v2270 = vpop.permute.xlu0 %2269
        %2271 = vset.pattern.permute.xlu0 0
        %2272 = vperm.xlu0 %2271, %v2227
        %v2273 = vpop.permute.xlu0 %2272
        %2274 = vset.pattern.permute.xlu0 0
        %2275 = vperm.xlu0 %2274, %v2228
        %v2276 = vpop.permute.xlu0 %2275
        %vm2277 = vcmp.eq.s32.totalorder %v620, %v2231
        %vm2278 = vcmp.eq.s32.totalorder %v620, %v2234
        %vm2279 = vcmp.eq.s32.totalorder %v620, %v2237
        %vm2280 = vcmp.eq.s32.totalorder %v620, %v2240
        %vm2281 = vcmp.eq.s32.totalorder %v620, %v2243
        %vm2282 = vcmp.eq.s32.totalorder %v620, %v2246
        %vm2283 = vcmp.eq.s32.totalorder %v620, %v2249
        %vm2284 = vcmp.eq.s32.totalorder %v620, %v2252
        %vm2285 = vcmp.eq.s32.totalorder %v620, %v2255
        %vm2286 = vcmp.eq.s32.totalorder %v620, %v2258
        %vm2287 = vcmp.eq.s32.totalorder %v620, %v2261
        %vm2288 = vcmp.eq.s32.totalorder %v620, %v2264
        %vm2289 = vcmp.eq.s32.totalorder %v620, %v2267
        %vm2290 = vcmp.eq.s32.totalorder %v620, %v2270
        %vm2291 = vcmp.eq.s32.totalorder %v620, %v2273
        %vm2292 = vcmp.eq.s32.totalorder %v620, %v2276
        %v2293 = vsel %vm2277, 1, 0
        %v2294 = vsel %vm2278, 1, 0
        %v2295 = vsel %vm2279, 1, 0
        %v2296 = vsel %vm2280, 1, 0
        %v2297 = vsel %vm2281, 1, 0
        %v2298 = vsel %vm2282, 1, 0
        %v2299 = vsel %vm2283, 1, 0
        %v2300 = vsel %vm2284, 1, 0
        %v2301 = vsel %vm2285, 1, 0
        %v2302 = vsel %vm2286, 1, 0
        %v2303 = vsel %vm2287, 1, 0
        %v2304 = vsel %vm2288, 1, 0
        %v2305 = vsel %vm2289, 1, 0
        %v2306 = vsel %vm2290, 1, 0
        %v2307 = vsel %vm2291, 1, 0
        %v2308 = vsel %vm2292, 1, 0
        %v2309 = vcvt.s32.f32 %v2293
        %v2310 = vcvt.s32.f32 %v2294
        %v2311 = vcvt.s32.f32 %v2295
        %v2312 = vcvt.s32.f32 %v2296
        %v2313 = vcvt.s32.f32 %v2297
        %v2314 = vcvt.s32.f32 %v2298
        %v2315 = vcvt.s32.f32 %v2299
        %v2316 = vcvt.s32.f32 %v2300
        %v2317 = vcvt.s32.f32 %v2301
        %v2318 = vcvt.s32.f32 %v2302
        %v2319 = vcvt.s32.f32 %v2303
        %v2320 = vcvt.s32.f32 %v2304
        %v2321 = vcvt.s32.f32 %v2305
        %v2322 = vcvt.s32.f32 %v2306
        %v2323 = vcvt.s32.f32 %v2307
        %v2324 = vcvt.s32.f32 %v2308
        %2326 = vset.pattern.permute.xlu0 0
        %2327 = vperm.xlu0 %2326, %v2165
        %v2328 = vpop.permute.xlu0 %2327
        %2331 = vset.pattern.permute.xlu0 0
        %2332 = vperm.xlu0 %2331, %v2166
        %v2333 = vpop.permute.xlu0 %2332
        %2336 = vset.pattern.permute.xlu0 0
        %2337 = vperm.xlu0 %2336, %v2167
        %v2338 = vpop.permute.xlu0 %2337
        %2341 = vset.pattern.permute.xlu0 0
        %2342 = vperm.xlu0 %2341, %v2168
        %v2343 = vpop.permute.xlu0 %2342
        %2346 = vset.pattern.permute.xlu0 0
        %2347 = vperm.xlu0 %2346, %v2169
        %v2348 = vpop.permute.xlu0 %2347
        %2351 = vset.pattern.permute.xlu0 0
        %2352 = vperm.xlu0 %2351, %v2170
        %v2353 = vpop.permute.xlu0 %2352
        %2356 = vset.pattern.permute.xlu0 0
        %2357 = vperm.xlu0 %2356, %v2171
        %v2358 = vpop.permute.xlu0 %2357
        %2361 = vset.pattern.permute.xlu0 0
        %2362 = vperm.xlu0 %2361, %v2172
        %v2363 = vpop.permute.xlu0 %2362
        %2366 = vset.pattern.permute.xlu0 0
        %2367 = vperm.xlu0 %2366, %v2173
        %v2368 = vpop.permute.xlu0 %2367
        %2371 = vset.pattern.permute.xlu0 0
        %2372 = vperm.xlu0 %2371, %v2174
        %v2373 = vpop.permute.xlu0 %2372
        %2376 = vset.pattern.permute.xlu0 0
        %2377 = vperm.xlu0 %2376, %v2175
        %v2378 = vpop.permute.xlu0 %2377
        %2381 = vset.pattern.permute.xlu0 0
        %2382 = vperm.xlu0 %2381, %v2176
        %v2383 = vpop.permute.xlu0 %2382
        %2386 = vset.pattern.permute.xlu0 0
        %2387 = vperm.xlu0 %2386, %v2177
        %v2388 = vpop.permute.xlu0 %2387
        %2391 = vset.pattern.permute.xlu0 0
        %2392 = vperm.xlu0 %2391, %v2178
        %v2393 = vpop.permute.xlu0 %2392
        %2396 = vset.pattern.permute.xlu0 0
        %2397 = vperm.xlu0 %2396, %v2179
        %v2398 = vpop.permute.xlu0 %2397
        %2401 = vset.pattern.permute.xlu0 0
        %2402 = vperm.xlu0 %2401, %v2180
        %v2403 = vpop.permute.xlu0 %2402
        %v2405 = vmul.f32 %v2309, %v2328
        %v2406 = vmul.f32 %v2310, %v2333
        %v2407 = vmul.f32 %v2311, %v2338
        %v2408 = vmul.f32 %v2312, %v2343
        %v2409 = vmul.f32 %v2313, %v2348
        %v2410 = vmul.f32 %v2314, %v2353
        %v2411 = vmul.f32 %v2315, %v2358
        %v2412 = vmul.f32 %v2316, %v2363
        %v2413 = vmul.f32 %v2317, %v2368
        %v2414 = vmul.f32 %v2318, %v2373
        %v2415 = vmul.f32 %v2319, %v2378
        %v2416 = vmul.f32 %v2320, %v2383
        %v2417 = vmul.f32 %v2321, %v2388
        %v2418 = vmul.f32 %v2322, %v2393
        %v2419 = vmul.f32 %v2323, %v2398
        %v2420 = vmul.f32 %v2324, %v2403
        %v2421 = vadd.f32 %v2101, %v2405
        %v2422 = vadd.f32 %v2102, %v2406
        %v2423 = vadd.f32 %v2103, %v2407
        %v2424 = vadd.f32 %v2104, %v2408
        %v2425 = vadd.f32 %v2105, %v2409
        %v2426 = vadd.f32 %v2106, %v2410
        %v2427 = vadd.f32 %v2107, %v2411
        %v2428 = vadd.f32 %v2108, %v2412
        %v2429 = vadd.f32 %v2109, %v2413
        %v2430 = vadd.f32 %v2110, %v2414
        %v2431 = vadd.f32 %v2111, %v2415
        %v2432 = vadd.f32 %v2112, %v2416
        %v2433 = vadd.f32 %v2113, %v2417
        %v2434 = vadd.f32 %v2114, %v2418
        %v2435 = vadd.f32 %v2115, %v2419
        %v2436 = vadd.f32 %v2116, %v2420
        %v2437 = vmul.f32 %v475, %v1814
        %v2438 = vmul.f32 %v476, %v1816
        %v2439 = vmul.f32 %v477, %v1818
        %v2440 = vmul.f32 %v478, %v1820
        %v2441 = vmul.f32 %v479, %v1822
        %v2442 = vmul.f32 %v480, %v1824
        %v2443 = vmul.f32 %v481, %v1826
        %v2444 = vmul.f32 %v482, %v1828
        %v2445 = vmul.f32 %v483, %v1830
        %v2446 = vmul.f32 %v484, %v1832
        %v2447 = vmul.f32 %v485, %v1834
        %v2448 = vmul.f32 %v486, %v1836
        %v2449 = vmul.f32 %v487, %v1838
        %v2450 = vmul.f32 %v488, %v1840
        %v2451 = vmul.f32 %v489, %v1842
        %v2452 = vmul.f32 %v490, %v1844
        %v2453 = vadd.s32 %v1325, %v1878
        %v2454 = vadd.s32 %v1326, %v1880
        %v2455 = vadd.s32 %v1327, %v1882
        %v2456 = vadd.s32 %v1328, %v1884
        %v2457 = vadd.s32 %v1329, %v1886
        %v2458 = vadd.s32 %v1330, %v1888
        %v2459 = vadd.s32 %v1331, %v1890
        %v2460 = vadd.s32 %v1332, %v1892
        %v2461 = vadd.s32 %v1333, %v1894
        %v2462 = vadd.s32 %v1334, %v1896
        %v2463 = vadd.s32 %v1335, %v1898
        %v2464 = vadd.s32 %v1336, %v1900
        %v2465 = vadd.s32 %v1337, %v1902
        %v2466 = vadd.s32 %v1338, %v1904
        %v2467 = vadd.s32 %v1339, %v1906
        %v2468 = vadd.s32 %v1340, %v1908
        %2469 = vset.pattern.permute.xlu0 0
        %2470 = vperm.xlu0 %2469, %v2453
        %v2471 = vpop.permute.xlu0 %2470
        %2472 = vset.pattern.permute.xlu0 0
        %2473 = vperm.xlu0 %2472, %v2454
        %v2474 = vpop.permute.xlu0 %2473
        %2475 = vset.pattern.permute.xlu0 0
        %2476 = vperm.xlu0 %2475, %v2455
        %v2477 = vpop.permute.xlu0 %2476
        %2478 = vset.pattern.permute.xlu0 0
        %2479 = vperm.xlu0 %2478, %v2456
        %v2480 = vpop.permute.xlu0 %2479
        %2481 = vset.pattern.permute.xlu0 0
        %2482 = vperm.xlu0 %2481, %v2457
        %v2483 = vpop.permute.xlu0 %2482
        %2484 = vset.pattern.permute.xlu0 0
        %2485 = vperm.xlu0 %2484, %v2458
        %v2486 = vpop.permute.xlu0 %2485
        %2487 = vset.pattern.permute.xlu0 0
        %2488 = vperm.xlu0 %2487, %v2459
        %v2489 = vpop.permute.xlu0 %2488
        %2490 = vset.pattern.permute.xlu0 0
        %2491 = vperm.xlu0 %2490, %v2460
        %v2492 = vpop.permute.xlu0 %2491
        %2493 = vset.pattern.permute.xlu0 0
        %2494 = vperm.xlu0 %2493, %v2461
        %v2495 = vpop.permute.xlu0 %2494
        %2496 = vset.pattern.permute.xlu0 0
        %2497 = vperm.xlu0 %2496, %v2462
        %v2498 = vpop.permute.xlu0 %2497
        %2499 = vset.pattern.permute.xlu0 0
        %2500 = vperm.xlu0 %2499, %v2463
        %v2501 = vpop.permute.xlu0 %2500
        %2502 = vset.pattern.permute.xlu0 0
        %2503 = vperm.xlu0 %2502, %v2464
        %v2504 = vpop.permute.xlu0 %2503
        %2505 = vset.pattern.permute.xlu0 0
        %2506 = vperm.xlu0 %2505, %v2465
        %v2507 = vpop.permute.xlu0 %2506
        %2508 = vset.pattern.permute.xlu0 0
        %2509 = vperm.xlu0 %2508, %v2466
        %v2510 = vpop.permute.xlu0 %2509
        %2511 = vset.pattern.permute.xlu0 0
        %2512 = vperm.xlu0 %2511, %v2467
        %v2513 = vpop.permute.xlu0 %2512
        %2514 = vset.pattern.permute.xlu0 0
        %2515 = vperm.xlu0 %2514, %v2468
        %v2516 = vpop.permute.xlu0 %2515
        %vm2517 = vcmp.eq.s32.totalorder %v620, %v2471
        %vm2518 = vcmp.eq.s32.totalorder %v620, %v2474
        %vm2519 = vcmp.eq.s32.totalorder %v620, %v2477
        %vm2520 = vcmp.eq.s32.totalorder %v620, %v2480
        %vm2521 = vcmp.eq.s32.totalorder %v620, %v2483
        %vm2522 = vcmp.eq.s32.totalorder %v620, %v2486
        %vm2523 = vcmp.eq.s32.totalorder %v620, %v2489
        %vm2524 = vcmp.eq.s32.totalorder %v620, %v2492
        %vm2525 = vcmp.eq.s32.totalorder %v620, %v2495
        %vm2526 = vcmp.eq.s32.totalorder %v620, %v2498
        %vm2527 = vcmp.eq.s32.totalorder %v620, %v2501
        %vm2528 = vcmp.eq.s32.totalorder %v620, %v2504
        %vm2529 = vcmp.eq.s32.totalorder %v620, %v2507
        %vm2530 = vcmp.eq.s32.totalorder %v620, %v2510
        %vm2531 = vcmp.eq.s32.totalorder %v620, %v2513
        %vm2532 = vcmp.eq.s32.totalorder %v620, %v2516
        %v2533 = vsel %vm2517, 1, 0
        %v2534 = vsel %vm2518, 1, 0
        %v2535 = vsel %vm2519, 1, 0
        %v2536 = vsel %vm2520, 1, 0
        %v2537 = vsel %vm2521, 1, 0
        %v2538 = vsel %vm2522, 1, 0
        %v2539 = vsel %vm2523, 1, 0
        %v2540 = vsel %vm2524, 1, 0
        %v2541 = vsel %vm2525, 1, 0
        %v2542 = vsel %vm2526, 1, 0
        %v2543 = vsel %vm2527, 1, 0
        %v2544 = vsel %vm2528, 1, 0
        %v2545 = vsel %vm2529, 1, 0
        %v2546 = vsel %vm2530, 1, 0
        %v2547 = vsel %vm2531, 1, 0
        %v2548 = vsel %vm2532, 1, 0
        %v2549 = vcvt.s32.f32 %v2533
        %v2550 = vcvt.s32.f32 %v2534
        %v2551 = vcvt.s32.f32 %v2535
        %v2552 = vcvt.s32.f32 %v2536
        %v2553 = vcvt.s32.f32 %v2537
        %v2554 = vcvt.s32.f32 %v2538
        %v2555 = vcvt.s32.f32 %v2539
        %v2556 = vcvt.s32.f32 %v2540
        %v2557 = vcvt.s32.f32 %v2541
        %v2558 = vcvt.s32.f32 %v2542
        %v2559 = vcvt.s32.f32 %v2543
        %v2560 = vcvt.s32.f32 %v2544
        %v2561 = vcvt.s32.f32 %v2545
        %v2562 = vcvt.s32.f32 %v2546
        %v2563 = vcvt.s32.f32 %v2547
        %v2564 = vcvt.s32.f32 %v2548
        %2566 = vset.pattern.permute.xlu0 0
        %2567 = vperm.xlu0 %2566, %v2437
        %v2568 = vpop.permute.xlu0 %2567
        %2571 = vset.pattern.permute.xlu0 0
        %2572 = vperm.xlu0 %2571, %v2438
        %v2573 = vpop.permute.xlu0 %2572
        %2576 = vset.pattern.permute.xlu0 0
        %2577 = vperm.xlu0 %2576, %v2439
        %v2578 = vpop.permute.xlu0 %2577
        %2581 = vset.pattern.permute.xlu0 0
        %2582 = vperm.xlu0 %2581, %v2440
        %v2583 = vpop.permute.xlu0 %2582
        %2586 = vset.pattern.permute.xlu0 0
        %2587 = vperm.xlu0 %2586, %v2441
        %v2588 = vpop.permute.xlu0 %2587
        %2591 = vset.pattern.permute.xlu0 0
        %2592 = vperm.xlu0 %2591, %v2442
        %v2593 = vpop.permute.xlu0 %2592
        %2596 = vset.pattern.permute.xlu0 0
        %2597 = vperm.xlu0 %2596, %v2443
        %v2598 = vpop.permute.xlu0 %2597
        %2601 = vset.pattern.permute.xlu0 0
        %2602 = vperm.xlu0 %2601, %v2444
        %v2603 = vpop.permute.xlu0 %2602
        %2606 = vset.pattern.permute.xlu0 0
        %2607 = vperm.xlu0 %2606, %v2445
        %v2608 = vpop.permute.xlu0 %2607
        %2611 = vset.pattern.permute.xlu0 0
        %2612 = vperm.xlu0 %2611, %v2446
        %v2613 = vpop.permute.xlu0 %2612
        %2616 = vset.pattern.permute.xlu0 0
        %2617 = vperm.xlu0 %2616, %v2447
        %v2618 = vpop.permute.xlu0 %2617
        %2621 = vset.pattern.permute.xlu0 0
        %2622 = vperm.xlu0 %2621, %v2448
        %v2623 = vpop.permute.xlu0 %2622
        %2626 = vset.pattern.permute.xlu0 0
        %2627 = vperm.xlu0 %2626, %v2449
        %v2628 = vpop.permute.xlu0 %2627
        %2631 = vset.pattern.permute.xlu0 0
        %2632 = vperm.xlu0 %2631, %v2450
        %v2633 = vpop.permute.xlu0 %2632
        %2636 = vset.pattern.permute.xlu0 0
        %2637 = vperm.xlu0 %2636, %v2451
        %v2638 = vpop.permute.xlu0 %2637
        %2641 = vset.pattern.permute.xlu0 0
        %2642 = vperm.xlu0 %2641, %v2452
        %v2643 = vpop.permute.xlu0 %2642
        %v2645 = vmul.f32 %v2549, %v2568
        %v2646 = vmul.f32 %v2550, %v2573
        %v2647 = vmul.f32 %v2551, %v2578
        %v2648 = vmul.f32 %v2552, %v2583
        %v2649 = vmul.f32 %v2553, %v2588
        %v2650 = vmul.f32 %v2554, %v2593
        %v2651 = vmul.f32 %v2555, %v2598
        %v2652 = vmul.f32 %v2556, %v2603
        %v2653 = vmul.f32 %v2557, %v2608
        %v2654 = vmul.f32 %v2558, %v2613
        %v2655 = vmul.f32 %v2559, %v2618
        %v2656 = vmul.f32 %v2560, %v2623
        %v2657 = vmul.f32 %v2561, %v2628
        %v2658 = vmul.f32 %v2562, %v2633
        %v2659 = vmul.f32 %v2563, %v2638
        %v2660 = vmul.f32 %v2564, %v2643
        %v2661 = vadd.f32 %v2421, %v2645
        %v2662 = vadd.f32 %v2422, %v2646
        %v2663 = vadd.f32 %v2423, %v2647
        %v2664 = vadd.f32 %v2424, %v2648
        %v2665 = vadd.f32 %v2425, %v2649
        %v2666 = vadd.f32 %v2426, %v2650
        %v2667 = vadd.f32 %v2427, %v2651
        %v2668 = vadd.f32 %v2428, %v2652
        %v2669 = vadd.f32 %v2429, %v2653
        %v2670 = vadd.f32 %v2430, %v2654
        %v2671 = vadd.f32 %v2431, %v2655
        %v2672 = vadd.f32 %v2432, %v2656
        %v2673 = vadd.f32 %v2433, %v2657
        %v2674 = vadd.f32 %v2434, %v2658
        %v2675 = vadd.f32 %v2435, %v2659
        %v2676 = vadd.f32 %v2436, %v2660
        %v2677 = vmul.f32 %v475, %v2118
        %v2678 = vmul.f32 %v476, %v2120
        %v2679 = vmul.f32 %v477, %v2122
        %v2680 = vmul.f32 %v478, %v2124
        %v2681 = vmul.f32 %v479, %v2126
        %v2682 = vmul.f32 %v480, %v2128
        %v2683 = vmul.f32 %v481, %v2130
        %v2684 = vmul.f32 %v482, %v2132
        %v2685 = vmul.f32 %v483, %v2134
        %v2686 = vmul.f32 %v484, %v2136
        %v2687 = vmul.f32 %v485, %v2138
        %v2688 = vmul.f32 %v486, %v2140
        %v2689 = vmul.f32 %v487, %v2142
        %v2690 = vmul.f32 %v488, %v2144
        %v2691 = vmul.f32 %v489, %v2146
        %v2692 = vmul.f32 %v490, %v2148
        %v2693 = vadd.s32 %v1325, %v2182
        %v2694 = vadd.s32 %v1326, %v2184
        %v2695 = vadd.s32 %v1327, %v2186
        %v2696 = vadd.s32 %v1328, %v2188
        %v2697 = vadd.s32 %v1329, %v2190
        %v2698 = vadd.s32 %v1330, %v2192
        %v2699 = vadd.s32 %v1331, %v2194
        %v2700 = vadd.s32 %v1332, %v2196
        %v2701 = vadd.s32 %v1333, %v2198
        %v2702 = vadd.s32 %v1334, %v2200
        %v2703 = vadd.s32 %v1335, %v2202
        %v2704 = vadd.s32 %v1336, %v2204
        %v2705 = vadd.s32 %v1337, %v2206
        %v2706 = vadd.s32 %v1338, %v2208
        %v2707 = vadd.s32 %v1339, %v2210
        %v2708 = vadd.s32 %v1340, %v2212
        %2709 = vset.pattern.permute.xlu0 0
        %2710 = vperm.xlu0 %2709, %v2693
        %v2711 = vpop.permute.xlu0 %2710
        %2712 = vset.pattern.permute.xlu0 0
        %2713 = vperm.xlu0 %2712, %v2694
        %v2714 = vpop.permute.xlu0 %2713
        %2715 = vset.pattern.permute.xlu0 0
        %2716 = vperm.xlu0 %2715, %v2695
        %v2717 = vpop.permute.xlu0 %2716
        %2718 = vset.pattern.permute.xlu0 0
        %2719 = vperm.xlu0 %2718, %v2696
        %v2720 = vpop.permute.xlu0 %2719
        %2721 = vset.pattern.permute.xlu0 0
        %2722 = vperm.xlu0 %2721, %v2697
        %v2723 = vpop.permute.xlu0 %2722
        %2724 = vset.pattern.permute.xlu0 0
        %2725 = vperm.xlu0 %2724, %v2698
        %v2726 = vpop.permute.xlu0 %2725
        %2727 = vset.pattern.permute.xlu0 0
        %2728 = vperm.xlu0 %2727, %v2699
        %v2729 = vpop.permute.xlu0 %2728
        %2730 = vset.pattern.permute.xlu0 0
        %2731 = vperm.xlu0 %2730, %v2700
        %v2732 = vpop.permute.xlu0 %2731
        %2733 = vset.pattern.permute.xlu0 0
        %2734 = vperm.xlu0 %2733, %v2701
        %v2735 = vpop.permute.xlu0 %2734
        %2736 = vset.pattern.permute.xlu0 0
        %2737 = vperm.xlu0 %2736, %v2702
        %v2738 = vpop.permute.xlu0 %2737
        %2739 = vset.pattern.permute.xlu0 0
        %2740 = vperm.xlu0 %2739, %v2703
        %v2741 = vpop.permute.xlu0 %2740
        %2742 = vset.pattern.permute.xlu0 0
        %2743 = vperm.xlu0 %2742, %v2704
        %v2744 = vpop.permute.xlu0 %2743
        %2745 = vset.pattern.permute.xlu0 0
        %2746 = vperm.xlu0 %2745, %v2705
        %v2747 = vpop.permute.xlu0 %2746
        %2748 = vset.pattern.permute.xlu0 0
        %2749 = vperm.xlu0 %2748, %v2706
        %v2750 = vpop.permute.xlu0 %2749
        %2751 = vset.pattern.permute.xlu0 0
        %2752 = vperm.xlu0 %2751, %v2707
        %v2753 = vpop.permute.xlu0 %2752
        %2754 = vset.pattern.permute.xlu0 0
        %2755 = vperm.xlu0 %2754, %v2708
        %v2756 = vpop.permute.xlu0 %2755
        %vm2757 = vcmp.eq.s32.totalorder %v620, %v2711
        %vm2758 = vcmp.eq.s32.totalorder %v620, %v2714
        %vm2759 = vcmp.eq.s32.totalorder %v620, %v2717
        %vm2760 = vcmp.eq.s32.totalorder %v620, %v2720
        %vm2761 = vcmp.eq.s32.totalorder %v620, %v2723
        %vm2762 = vcmp.eq.s32.totalorder %v620, %v2726
        %vm2763 = vcmp.eq.s32.totalorder %v620, %v2729
        %vm2764 = vcmp.eq.s32.totalorder %v620, %v2732
        %vm2765 = vcmp.eq.s32.totalorder %v620, %v2735
        %vm2766 = vcmp.eq.s32.totalorder %v620, %v2738
        %vm2767 = vcmp.eq.s32.totalorder %v620, %v2741
        %vm2768 = vcmp.eq.s32.totalorder %v620, %v2744
        %vm2769 = vcmp.eq.s32.totalorder %v620, %v2747
        %vm2770 = vcmp.eq.s32.totalorder %v620, %v2750
        %vm2771 = vcmp.eq.s32.totalorder %v620, %v2753
        %vm2772 = vcmp.eq.s32.totalorder %v620, %v2756
        %v2773 = vsel %vm2757, 1, 0
        %v2774 = vsel %vm2758, 1, 0
        %v2775 = vsel %vm2759, 1, 0
        %v2776 = vsel %vm2760, 1, 0
        %v2777 = vsel %vm2761, 1, 0
        %v2778 = vsel %vm2762, 1, 0
        %v2779 = vsel %vm2763, 1, 0
        %v2780 = vsel %vm2764, 1, 0
        %v2781 = vsel %vm2765, 1, 0
        %v2782 = vsel %vm2766, 1, 0
        %v2783 = vsel %vm2767, 1, 0
        %v2784 = vsel %vm2768, 1, 0
        %v2785 = vsel %vm2769, 1, 0
        %v2786 = vsel %vm2770, 1, 0
        %v2787 = vsel %vm2771, 1, 0
        %v2788 = vsel %vm2772, 1, 0
        %v2789 = vcvt.s32.f32 %v2773
        %v2790 = vcvt.s32.f32 %v2774
        %v2791 = vcvt.s32.f32 %v2775
        %v2792 = vcvt.s32.f32 %v2776
        %v2793 = vcvt.s32.f32 %v2777
        %v2794 = vcvt.s32.f32 %v2778
        %v2795 = vcvt.s32.f32 %v2779
        %v2796 = vcvt.s32.f32 %v2780
        %v2797 = vcvt.s32.f32 %v2781
        %v2798 = vcvt.s32.f32 %v2782
        %v2799 = vcvt.s32.f32 %v2783
        %v2800 = vcvt.s32.f32 %v2784
        %v2801 = vcvt.s32.f32 %v2785
        %v2802 = vcvt.s32.f32 %v2786
        %v2803 = vcvt.s32.f32 %v2787
        %v2804 = vcvt.s32.f32 %v2788
        %2806 = vset.pattern.permute.xlu0 0
        %2807 = vperm.xlu0 %2806, %v2677
        %v2808 = vpop.permute.xlu0 %2807
        %2811 = vset.pattern.permute.xlu0 0
        %2812 = vperm.xlu0 %2811, %v2678
        %v2813 = vpop.permute.xlu0 %2812
        %2816 = vset.pattern.permute.xlu0 0
        %2817 = vperm.xlu0 %2816, %v2679
        %v2818 = vpop.permute.xlu0 %2817
        %2821 = vset.pattern.permute.xlu0 0
        %2822 = vperm.xlu0 %2821, %v2680
        %v2823 = vpop.permute.xlu0 %2822
        %2826 = vset.pattern.permute.xlu0 0
        %2827 = vperm.xlu0 %2826, %v2681
        %v2828 = vpop.permute.xlu0 %2827
        %2831 = vset.pattern.permute.xlu0 0
        %2832 = vperm.xlu0 %2831, %v2682
        %v2833 = vpop.permute.xlu0 %2832
        %2836 = vset.pattern.permute.xlu0 0
        %2837 = vperm.xlu0 %2836, %v2683
        %v2838 = vpop.permute.xlu0 %2837
        %2841 = vset.pattern.permute.xlu0 0
        %2842 = vperm.xlu0 %2841, %v2684
        %v2843 = vpop.permute.xlu0 %2842
        %2846 = vset.pattern.permute.xlu0 0
        %2847 = vperm.xlu0 %2846, %v2685
        %v2848 = vpop.permute.xlu0 %2847
        %2851 = vset.pattern.permute.xlu0 0
        %2852 = vperm.xlu0 %2851, %v2686
        %v2853 = vpop.permute.xlu0 %2852
        %2856 = vset.pattern.permute.xlu0 0
        %2857 = vperm.xlu0 %2856, %v2687
        %v2858 = vpop.permute.xlu0 %2857
        %2861 = vset.pattern.permute.xlu0 0
        %2862 = vperm.xlu0 %2861, %v2688
        %v2863 = vpop.permute.xlu0 %2862
        %2866 = vset.pattern.permute.xlu0 0
        %2867 = vperm.xlu0 %2866, %v2689
        %v2868 = vpop.permute.xlu0 %2867
        %2871 = vset.pattern.permute.xlu0 0
        %2872 = vperm.xlu0 %2871, %v2690
        %v2873 = vpop.permute.xlu0 %2872
        %2876 = vset.pattern.permute.xlu0 0
        %2877 = vperm.xlu0 %2876, %v2691
        %v2878 = vpop.permute.xlu0 %2877
        %2881 = vset.pattern.permute.xlu0 0
        %2882 = vperm.xlu0 %2881, %v2692
        %v2883 = vpop.permute.xlu0 %2882
        %v2885 = vmul.f32 %v2789, %v2808
        %v2886 = vmul.f32 %v2790, %v2813
        %v2887 = vmul.f32 %v2791, %v2818
        %v2888 = vmul.f32 %v2792, %v2823
        %v2889 = vmul.f32 %v2793, %v2828
        %v2890 = vmul.f32 %v2794, %v2833
        %v2891 = vmul.f32 %v2795, %v2838
        %v2892 = vmul.f32 %v2796, %v2843
        %v2893 = vmul.f32 %v2797, %v2848
        %v2894 = vmul.f32 %v2798, %v2853
        %v2895 = vmul.f32 %v2799, %v2858
        %v2896 = vmul.f32 %v2800, %v2863
        %v2897 = vmul.f32 %v2801, %v2868
        %v2898 = vmul.f32 %v2802, %v2873
        %v2899 = vmul.f32 %v2803, %v2878
        %v2900 = vmul.f32 %v2804, %v2883
        %v2901 = vadd.f32 %v2661, %v2885
        %v2902 = vadd.f32 %v2662, %v2886
        %v2903 = vadd.f32 %v2663, %v2887
        %v2904 = vadd.f32 %v2664, %v2888
        %v2905 = vadd.f32 %v2665, %v2889
        %v2906 = vadd.f32 %v2666, %v2890
        %v2907 = vadd.f32 %v2667, %v2891
        %v2908 = vadd.f32 %v2668, %v2892
        %v2909 = vadd.f32 %v2669, %v2893
        %v2910 = vadd.f32 %v2670, %v2894
        %v2911 = vadd.f32 %v2671, %v2895
        %v2912 = vadd.f32 %v2672, %v2896
        %v2913 = vadd.f32 %v2673, %v2897
        %v2914 = vadd.f32 %v2674, %v2898
        %v2915 = vadd.f32 %v2675, %v2899
        %v2916 = vadd.f32 %v2676, %v2900
        %v2917 = vpack.c.bf16 %v2902, %v2901
        %v2918 = vpack.c.bf16 %v2904, %v2903
        %v2919 = vpack.c.bf16 %v2906, %v2905
        %v2920 = vpack.c.bf16 %v2908, %v2907
        %v2921 = vpack.c.bf16 %v2910, %v2909
        %v2922 = vpack.c.bf16 %v2912, %v2911
        %v2923 = vpack.c.bf16 %v2914, %v2913
        %v2924 = vpack.c.bf16 %v2916, %v2915
        %2925 = vset.pattern.permute.xlu0 1
        %2926 = vperm.xlu0 %2925, %v765
        %v2927 = vpop.permute.xlu0 %2926
        %2928 = vset.pattern.permute.xlu0 1
        %2929 = vperm.xlu0 %2928, %v766
        %v2930 = vpop.permute.xlu0 %2929
        %2931 = vset.pattern.permute.xlu0 1
        %2932 = vperm.xlu0 %2931, %v767
        %v2933 = vpop.permute.xlu0 %2932
        %2934 = vset.pattern.permute.xlu0 1
        %2935 = vperm.xlu0 %2934, %v768
        %v2936 = vpop.permute.xlu0 %2935
        %2937 = vset.pattern.permute.xlu0 1
        %2938 = vperm.xlu0 %2937, %v769
        %v2939 = vpop.permute.xlu0 %2938
        %2940 = vset.pattern.permute.xlu0 1
        %2941 = vperm.xlu0 %2940, %v770
        %v2942 = vpop.permute.xlu0 %2941
        %2943 = vset.pattern.permute.xlu0 1
        %2944 = vperm.xlu0 %2943, %v771
        %v2945 = vpop.permute.xlu0 %2944
        %2946 = vset.pattern.permute.xlu0 1
        %2947 = vperm.xlu0 %2946, %v772
        %v2948 = vpop.permute.xlu0 %2947
        %2949 = vset.pattern.permute.xlu0 1
        %2950 = vperm.xlu0 %2949, %v773
        %v2951 = vpop.permute.xlu0 %2950
        %2952 = vset.pattern.permute.xlu0 1
        %2953 = vperm.xlu0 %2952, %v774
        %v2954 = vpop.permute.xlu0 %2953
        %2955 = vset.pattern.permute.xlu0 1
        %2956 = vperm.xlu0 %2955, %v775
        %v2957 = vpop.permute.xlu0 %2956
        %2958 = vset.pattern.permute.xlu0 1
        %2959 = vperm.xlu0 %2958, %v776
        %v2960 = vpop.permute.xlu0 %2959
        %2961 = vset.pattern.permute.xlu0 1
        %2962 = vperm.xlu0 %2961, %v777
        %v2963 = vpop.permute.xlu0 %2962
        %2964 = vset.pattern.permute.xlu0 1
        %2965 = vperm.xlu0 %2964, %v778
        %v2966 = vpop.permute.xlu0 %2965
        %2967 = vset.pattern.permute.xlu0 1
        %2968 = vperm.xlu0 %2967, %v779
        %v2969 = vpop.permute.xlu0 %2968
        %2970 = vset.pattern.permute.xlu0 1
        %2971 = vperm.xlu0 %2970, %v780
        %v2972 = vpop.permute.xlu0 %2971
        %vm2973 = vcmp.eq.s32.totalorder %v620, %v2927
        %vm2974 = vcmp.eq.s32.totalorder %v620, %v2930
        %vm2975 = vcmp.eq.s32.totalorder %v620, %v2933
        %vm2976 = vcmp.eq.s32.totalorder %v620, %v2936
        %vm2977 = vcmp.eq.s32.totalorder %v620, %v2939
        %vm2978 = vcmp.eq.s32.totalorder %v620, %v2942
        %vm2979 = vcmp.eq.s32.totalorder %v620, %v2945
        %vm2980 = vcmp.eq.s32.totalorder %v620, %v2948
        %vm2981 = vcmp.eq.s32.totalorder %v620, %v2951
        %vm2982 = vcmp.eq.s32.totalorder %v620, %v2954
        %vm2983 = vcmp.eq.s32.totalorder %v620, %v2957
        %vm2984 = vcmp.eq.s32.totalorder %v620, %v2960
        %vm2985 = vcmp.eq.s32.totalorder %v620, %v2963
        %vm2986 = vcmp.eq.s32.totalorder %v620, %v2966
        %vm2987 = vcmp.eq.s32.totalorder %v620, %v2969
        %vm2988 = vcmp.eq.s32.totalorder %v620, %v2972
        %v2989 = vsel %vm2973, 1, 0
        %v2990 = vsel %vm2974, 1, 0
        %v2991 = vsel %vm2975, 1, 0
        %v2992 = vsel %vm2976, 1, 0
        %v2993 = vsel %vm2977, 1, 0
        %v2994 = vsel %vm2978, 1, 0
        %v2995 = vsel %vm2979, 1, 0
        %v2996 = vsel %vm2980, 1, 0
        %v2997 = vsel %vm2981, 1, 0
        %v2998 = vsel %vm2982, 1, 0
        %v2999 = vsel %vm2983, 1, 0
        %v3000 = vsel %vm2984, 1, 0
        %v3001 = vsel %vm2985, 1, 0
        %v3002 = vsel %vm2986, 1, 0
        %v3003 = vsel %vm2987, 1, 0
        %v3004 = vsel %vm2988, 1, 0
        %v3005 = vcvt.s32.f32 %v2989
        %v3006 = vcvt.s32.f32 %v2990
        %v3007 = vcvt.s32.f32 %v2991
        %v3008 = vcvt.s32.f32 %v2992
        %v3009 = vcvt.s32.f32 %v2993
        %v3010 = vcvt.s32.f32 %v2994
        %v3011 = vcvt.s32.f32 %v2995
        %v3012 = vcvt.s32.f32 %v2996
        %v3013 = vcvt.s32.f32 %v2997
        %v3014 = vcvt.s32.f32 %v2998
        %v3015 = vcvt.s32.f32 %v2999
        %v3016 = vcvt.s32.f32 %v3000
        %v3017 = vcvt.s32.f32 %v3001
        %v3018 = vcvt.s32.f32 %v3002
        %v3019 = vcvt.s32.f32 %v3003
        %v3020 = vcvt.s32.f32 %v3004
        %3021 = vset.pattern.permute.xlu0 1
        %3022 = vperm.xlu0 %3021, %v701
        %v3023 = vpop.permute.xlu0 %3022
        %3025 = vset.pattern.permute.xlu0 1
        %3026 = vperm.xlu0 %3025, %v702
        %v3027 = vpop.permute.xlu0 %3026
        %3029 = vset.pattern.permute.xlu0 1
        %3030 = vperm.xlu0 %3029, %v703
        %v3031 = vpop.permute.xlu0 %3030
        %3033 = vset.pattern.permute.xlu0 1
        %3034 = vperm.xlu0 %3033, %v704
        %v3035 = vpop.permute.xlu0 %3034
        %3037 = vset.pattern.permute.xlu0 1
        %3038 = vperm.xlu0 %3037, %v705
        %v3039 = vpop.permute.xlu0 %3038
        %3041 = vset.pattern.permute.xlu0 1
        %3042 = vperm.xlu0 %3041, %v706
        %v3043 = vpop.permute.xlu0 %3042
        %3045 = vset.pattern.permute.xlu0 1
        %3046 = vperm.xlu0 %3045, %v707
        %v3047 = vpop.permute.xlu0 %3046
        %3049 = vset.pattern.permute.xlu0 1
        %3050 = vperm.xlu0 %3049, %v708
        %v3051 = vpop.permute.xlu0 %3050
        %3053 = vset.pattern.permute.xlu0 1
        %3054 = vperm.xlu0 %3053, %v709
        %v3055 = vpop.permute.xlu0 %3054
        %3057 = vset.pattern.permute.xlu0 1
        %3058 = vperm.xlu0 %3057, %v710
        %v3059 = vpop.permute.xlu0 %3058
        %3061 = vset.pattern.permute.xlu0 1
        %3062 = vperm.xlu0 %3061, %v711
        %v3063 = vpop.permute.xlu0 %3062
        %3065 = vset.pattern.permute.xlu0 1
        %3066 = vperm.xlu0 %3065, %v712
        %v3067 = vpop.permute.xlu0 %3066
        %3069 = vset.pattern.permute.xlu0 1
        %3070 = vperm.xlu0 %3069, %v713
        %v3071 = vpop.permute.xlu0 %3070
        %3073 = vset.pattern.permute.xlu0 1
        %3074 = vperm.xlu0 %3073, %v714
        %v3075 = vpop.permute.xlu0 %3074
        %3077 = vset.pattern.permute.xlu0 1
        %3078 = vperm.xlu0 %3077, %v715
        %v3079 = vpop.permute.xlu0 %3078
        %3081 = vset.pattern.permute.xlu0 1
        %3082 = vperm.xlu0 %3081, %v716
        %v3083 = vpop.permute.xlu0 %3082
        %v3085 = vmul.f32 %v3005, %v3023
        %v3086 = vmul.f32 %v3006, %v3027
        %v3087 = vmul.f32 %v3007, %v3031
        %v3088 = vmul.f32 %v3008, %v3035
        %v3089 = vmul.f32 %v3009, %v3039
        %v3090 = vmul.f32 %v3010, %v3043
        %v3091 = vmul.f32 %v3011, %v3047
        %v3092 = vmul.f32 %v3012, %v3051
        %v3093 = vmul.f32 %v3013, %v3055
        %v3094 = vmul.f32 %v3014, %v3059
        %v3095 = vmul.f32 %v3015, %v3063
        %v3096 = vmul.f32 %v3016, %v3067
        %v3097 = vmul.f32 %v3017, %v3071
        %v3098 = vmul.f32 %v3018, %v3075
        %v3099 = vmul.f32 %v3019, %v3079
        %v3100 = vmul.f32 %v3020, %v3083
        %3101 = vset.pattern.permute.xlu0 1
        %3102 = vperm.xlu0 %3101, %v1085
        %v3103 = vpop.permute.xlu0 %3102
        %3104 = vset.pattern.permute.xlu0 1
        %3105 = vperm.xlu0 %3104, %v1086
        %v3106 = vpop.permute.xlu0 %3105
        %3107 = vset.pattern.permute.xlu0 1
        %3108 = vperm.xlu0 %3107, %v1087
        %v3109 = vpop.permute.xlu0 %3108
        %3110 = vset.pattern.permute.xlu0 1
        %3111 = vperm.xlu0 %3110, %v1088
        %v3112 = vpop.permute.xlu0 %3111
        %3113 = vset.pattern.permute.xlu0 1
        %3114 = vperm.xlu0 %3113, %v1089
        %v3115 = vpop.permute.xlu0 %3114
        %3116 = vset.pattern.permute.xlu0 1
        %3117 = vperm.xlu0 %3116, %v1090
        %v3118 = vpop.permute.xlu0 %3117
        %3119 = vset.pattern.permute.xlu0 1
        %3120 = vperm.xlu0 %3119, %v1091
        %v3121 = vpop.permute.xlu0 %3120
        %3122 = vset.pattern.permute.xlu0 1
        %3123 = vperm.xlu0 %3122, %v1092
        %v3124 = vpop.permute.xlu0 %3123
        %3125 = vset.pattern.permute.xlu0 1
        %3126 = vperm.xlu0 %3125, %v1093
        %v3127 = vpop.permute.xlu0 %3126
        %3128 = vset.pattern.permute.xlu0 1
        %3129 = vperm.xlu0 %3128, %v1094
        %v3130 = vpop.permute.xlu0 %3129
        %3131 = vset.pattern.permute.xlu0 1
        %3132 = vperm.xlu0 %3131, %v1095
        %v3133 = vpop.permute.xlu0 %3132
        %3134 = vset.pattern.permute.xlu0 1
        %3135 = vperm.xlu0 %3134, %v1096
        %v3136 = vpop.permute.xlu0 %3135
        %3137 = vset.pattern.permute.xlu0 1
        %3138 = vperm.xlu0 %3137, %v1097
        %v3139 = vpop.permute.xlu0 %3138
        %3140 = vset.pattern.permute.xlu0 1
        %3141 = vperm.xlu0 %3140, %v1098
        %v3142 = vpop.permute.xlu0 %3141
        %3143 = vset.pattern.permute.xlu0 1
        %3144 = vperm.xlu0 %3143, %v1099
        %v3145 = vpop.permute.xlu0 %3144
        %3146 = vset.pattern.permute.xlu0 1
        %3147 = vperm.xlu0 %3146, %v1100
        %v3148 = vpop.permute.xlu0 %3147
        %vm3149 = vcmp.eq.s32.totalorder %v620, %v3103
        %vm3150 = vcmp.eq.s32.totalorder %v620, %v3106
        %vm3151 = vcmp.eq.s32.totalorder %v620, %v3109
        %vm3152 = vcmp.eq.s32.totalorder %v620, %v3112
        %vm3153 = vcmp.eq.s32.totalorder %v620, %v3115
        %vm3154 = vcmp.eq.s32.totalorder %v620, %v3118
        %vm3155 = vcmp.eq.s32.totalorder %v620, %v3121
        %vm3156 = vcmp.eq.s32.totalorder %v620, %v3124
        %vm3157 = vcmp.eq.s32.totalorder %v620, %v3127
        %vm3158 = vcmp.eq.s32.totalorder %v620, %v3130
        %vm3159 = vcmp.eq.s32.totalorder %v620, %v3133
        %vm3160 = vcmp.eq.s32.totalorder %v620, %v3136
        %vm3161 = vcmp.eq.s32.totalorder %v620, %v3139
        %vm3162 = vcmp.eq.s32.totalorder %v620, %v3142
        %vm3163 = vcmp.eq.s32.totalorder %v620, %v3145
        %vm3164 = vcmp.eq.s32.totalorder %v620, %v3148
        %v3165 = vsel %vm3149, 1, 0
        %v3166 = vsel %vm3150, 1, 0
        %v3167 = vsel %vm3151, 1, 0
        %v3168 = vsel %vm3152, 1, 0
        %v3169 = vsel %vm3153, 1, 0
        %v3170 = vsel %vm3154, 1, 0
        %v3171 = vsel %vm3155, 1, 0
        %v3172 = vsel %vm3156, 1, 0
        %v3173 = vsel %vm3157, 1, 0
        %v3174 = vsel %vm3158, 1, 0
        %v3175 = vsel %vm3159, 1, 0
        %v3176 = vsel %vm3160, 1, 0
        %v3177 = vsel %vm3161, 1, 0
        %v3178 = vsel %vm3162, 1, 0
        %v3179 = vsel %vm3163, 1, 0
        %v3180 = vsel %vm3164, 1, 0
        %v3181 = vcvt.s32.f32 %v3165
        %v3182 = vcvt.s32.f32 %v3166
        %v3183 = vcvt.s32.f32 %v3167
        %v3184 = vcvt.s32.f32 %v3168
        %v3185 = vcvt.s32.f32 %v3169
        %v3186 = vcvt.s32.f32 %v3170
        %v3187 = vcvt.s32.f32 %v3171
        %v3188 = vcvt.s32.f32 %v3172
        %v3189 = vcvt.s32.f32 %v3173
        %v3190 = vcvt.s32.f32 %v3174
        %v3191 = vcvt.s32.f32 %v3175
        %v3192 = vcvt.s32.f32 %v3176
        %v3193 = vcvt.s32.f32 %v3177
        %v3194 = vcvt.s32.f32 %v3178
        %v3195 = vcvt.s32.f32 %v3179
        %v3196 = vcvt.s32.f32 %v3180
        %3197 = vset.pattern.permute.xlu0 1
        %3198 = vperm.xlu0 %3197, %v1037
        %v3199 = vpop.permute.xlu0 %3198
        %3201 = vset.pattern.permute.xlu0 1
        %3202 = vperm.xlu0 %3201, %v1038
        %v3203 = vpop.permute.xlu0 %3202
        %3205 = vset.pattern.permute.xlu0 1
        %3206 = vperm.xlu0 %3205, %v1039
        %v3207 = vpop.permute.xlu0 %3206
        %3209 = vset.pattern.permute.xlu0 1
        %3210 = vperm.xlu0 %3209, %v1040
        %v3211 = vpop.permute.xlu0 %3210
        %3213 = vset.pattern.permute.xlu0 1
        %3214 = vperm.xlu0 %3213, %v1041
        %v3215 = vpop.permute.xlu0 %3214
        %3217 = vset.pattern.permute.xlu0 1
        %3218 = vperm.xlu0 %3217, %v1042
        %v3219 = vpop.permute.xlu0 %3218
        %3221 = vset.pattern.permute.xlu0 1
        %3222 = vperm.xlu0 %3221, %v1043
        %v3223 = vpop.permute.xlu0 %3222
        %3225 = vset.pattern.permute.xlu0 1
        %3226 = vperm.xlu0 %3225, %v1044
        %v3227 = vpop.permute.xlu0 %3226
        %3229 = vset.pattern.permute.xlu0 1
        %3230 = vperm.xlu0 %3229, %v1045
        %v3231 = vpop.permute.xlu0 %3230
        %3233 = vset.pattern.permute.xlu0 1
        %3234 = vperm.xlu0 %3233, %v1046
        %v3235 = vpop.permute.xlu0 %3234
        %3237 = vset.pattern.permute.xlu0 1
        %3238 = vperm.xlu0 %3237, %v1047
        %v3239 = vpop.permute.xlu0 %3238
        %3241 = vset.pattern.permute.xlu0 1
        %3242 = vperm.xlu0 %3241, %v1048
        %v3243 = vpop.permute.xlu0 %3242
        %3245 = vset.pattern.permute.xlu0 1
        %3246 = vperm.xlu0 %3245, %v1049
        %v3247 = vpop.permute.xlu0 %3246
        %3249 = vset.pattern.permute.xlu0 1
        %3250 = vperm.xlu0 %3249, %v1050
        %v3251 = vpop.permute.xlu0 %3250
        %3253 = vset.pattern.permute.xlu0 1
        %3254 = vperm.xlu0 %3253, %v1051
        %v3255 = vpop.permute.xlu0 %3254
        %3257 = vset.pattern.permute.xlu0 1
        %3258 = vperm.xlu0 %3257, %v1052
        %v3259 = vpop.permute.xlu0 %3258
        %v3261 = vmul.f32 %v3181, %v3199
        %v3262 = vmul.f32 %v3182, %v3203
        %v3263 = vmul.f32 %v3183, %v3207
        %v3264 = vmul.f32 %v3184, %v3211
        %v3265 = vmul.f32 %v3185, %v3215
        %v3266 = vmul.f32 %v3186, %v3219
        %v3267 = vmul.f32 %v3187, %v3223
        %v3268 = vmul.f32 %v3188, %v3227
        %v3269 = vmul.f32 %v3189, %v3231
        %v3270 = vmul.f32 %v3190, %v3235
        %v3271 = vmul.f32 %v3191, %v3239
        %v3272 = vmul.f32 %v3192, %v3243
        %v3273 = vmul.f32 %v3193, %v3247
        %v3274 = vmul.f32 %v3194, %v3251
        %v3275 = vmul.f32 %v3195, %v3255
        %v3276 = vmul.f32 %v3196, %v3259
        %v3277 = vadd.f32 %v3085, %v3261
        %v3278 = vadd.f32 %v3086, %v3262
        %v3279 = vadd.f32 %v3087, %v3263
        %v3280 = vadd.f32 %v3088, %v3264
        %v3281 = vadd.f32 %v3089, %v3265
        %v3282 = vadd.f32 %v3090, %v3266
        %v3283 = vadd.f32 %v3091, %v3267
        %v3284 = vadd.f32 %v3092, %v3268
        %v3285 = vadd.f32 %v3093, %v3269
        %v3286 = vadd.f32 %v3094, %v3270
        %v3287 = vadd.f32 %v3095, %v3271
        %v3288 = vadd.f32 %v3096, %v3272
        %v3289 = vadd.f32 %v3097, %v3273
        %v3290 = vadd.f32 %v3098, %v3274
        %v3291 = vadd.f32 %v3099, %v3275
        %v3292 = vadd.f32 %v3100, %v3276
        %3293 = vset.pattern.permute.xlu0 1
        %3294 = vperm.xlu0 %3293, %v1341
        %v3295 = vpop.permute.xlu0 %3294
        %3296 = vset.pattern.permute.xlu0 1
        %3297 = vperm.xlu0 %3296, %v1342
        %v3298 = vpop.permute.xlu0 %3297
        %3299 = vset.pattern.permute.xlu0 1
        %3300 = vperm.xlu0 %3299, %v1343
        %v3301 = vpop.permute.xlu0 %3300
        %3302 = vset.pattern.permute.xlu0 1
        %3303 = vperm.xlu0 %3302, %v1344
        %v3304 = vpop.permute.xlu0 %3303
        %3305 = vset.pattern.permute.xlu0 1
        %3306 = vperm.xlu0 %3305, %v1345
        %v3307 = vpop.permute.xlu0 %3306
        %3308 = vset.pattern.permute.xlu0 1
        %3309 = vperm.xlu0 %3308, %v1346
        %v3310 = vpop.permute.xlu0 %3309
        %3311 = vset.pattern.permute.xlu0 1
        %3312 = vperm.xlu0 %3311, %v1347
        %v3313 = vpop.permute.xlu0 %3312
        %3314 = vset.pattern.permute.xlu0 1
        %3315 = vperm.xlu0 %3314, %v1348
        %v3316 = vpop.permute.xlu0 %3315
        %3317 = vset.pattern.permute.xlu0 1
        %3318 = vperm.xlu0 %3317, %v1349
        %v3319 = vpop.permute.xlu0 %3318
        %3320 = vset.pattern.permute.xlu0 1
        %3321 = vperm.xlu0 %3320, %v1350
        %v3322 = vpop.permute.xlu0 %3321
        %3323 = vset.pattern.permute.xlu0 1
        %3324 = vperm.xlu0 %3323, %v1351
        %v3325 = vpop.permute.xlu0 %3324
        %3326 = vset.pattern.permute.xlu0 1
        %3327 = vperm.xlu0 %3326, %v1352
        %v3328 = vpop.permute.xlu0 %3327
        %3329 = vset.pattern.permute.xlu0 1
        %3330 = vperm.xlu0 %3329, %v1353
        %v3331 = vpop.permute.xlu0 %3330
        %3332 = vset.pattern.permute.xlu0 1
        %3333 = vperm.xlu0 %3332, %v1354
        %v3334 = vpop.permute.xlu0 %3333
        %3335 = vset.pattern.permute.xlu0 1
        %3336 = vperm.xlu0 %3335, %v1355
        %v3337 = vpop.permute.xlu0 %3336
        %3338 = vset.pattern.permute.xlu0 1
        %3339 = vperm.xlu0 %3338, %v1356
        %v3340 = vpop.permute.xlu0 %3339
        %vm3341 = vcmp.eq.s32.totalorder %v620, %v3295
        %vm3342 = vcmp.eq.s32.totalorder %v620, %v3298
        %vm3343 = vcmp.eq.s32.totalorder %v620, %v3301
        %vm3344 = vcmp.eq.s32.totalorder %v620, %v3304
        %vm3345 = vcmp.eq.s32.totalorder %v620, %v3307
        %vm3346 = vcmp.eq.s32.totalorder %v620, %v3310
        %vm3347 = vcmp.eq.s32.totalorder %v620, %v3313
        %vm3348 = vcmp.eq.s32.totalorder %v620, %v3316
        %vm3349 = vcmp.eq.s32.totalorder %v620, %v3319
        %vm3350 = vcmp.eq.s32.totalorder %v620, %v3322
        %vm3351 = vcmp.eq.s32.totalorder %v620, %v3325
        %vm3352 = vcmp.eq.s32.totalorder %v620, %v3328
        %vm3353 = vcmp.eq.s32.totalorder %v620, %v3331
        %vm3354 = vcmp.eq.s32.totalorder %v620, %v3334
        %vm3355 = vcmp.eq.s32.totalorder %v620, %v3337
        %vm3356 = vcmp.eq.s32.totalorder %v620, %v3340
        %v3357 = vsel %vm3341, 1, 0
        %v3358 = vsel %vm3342, 1, 0
        %v3359 = vsel %vm3343, 1, 0
        %v3360 = vsel %vm3344, 1, 0
        %v3361 = vsel %vm3345, 1, 0
        %v3362 = vsel %vm3346, 1, 0
        %v3363 = vsel %vm3347, 1, 0
        %v3364 = vsel %vm3348, 1, 0
        %v3365 = vsel %vm3349, 1, 0
        %v3366 = vsel %vm3350, 1, 0
        %v3367 = vsel %vm3351, 1, 0
        %v3368 = vsel %vm3352, 1, 0
        %v3369 = vsel %vm3353, 1, 0
        %v3370 = vsel %vm3354, 1, 0
        %v3371 = vsel %vm3355, 1, 0
        %v3372 = vsel %vm3356, 1, 0
        %v3373 = vcvt.s32.f32 %v3357
        %v3374 = vcvt.s32.f32 %v3358
        %v3375 = vcvt.s32.f32 %v3359
        %v3376 = vcvt.s32.f32 %v3360
        %v3377 = vcvt.s32.f32 %v3361
        %v3378 = vcvt.s32.f32 %v3362
        %v3379 = vcvt.s32.f32 %v3363
        %v3380 = vcvt.s32.f32 %v3364
        %v3381 = vcvt.s32.f32 %v3365
        %v3382 = vcvt.s32.f32 %v3366
        %v3383 = vcvt.s32.f32 %v3367
        %v3384 = vcvt.s32.f32 %v3368
        %v3385 = vcvt.s32.f32 %v3369
        %v3386 = vcvt.s32.f32 %v3370
        %v3387 = vcvt.s32.f32 %v3371
        %v3388 = vcvt.s32.f32 %v3372
        %3389 = vset.pattern.permute.xlu0 1
        %3390 = vperm.xlu0 %3389, %v1309
        %v3391 = vpop.permute.xlu0 %3390
        %3393 = vset.pattern.permute.xlu0 1
        %3394 = vperm.xlu0 %3393, %v1310
        %v3395 = vpop.permute.xlu0 %3394
        %3397 = vset.pattern.permute.xlu0 1
        %3398 = vperm.xlu0 %3397, %v1311
        %v3399 = vpop.permute.xlu0 %3398
        %3401 = vset.pattern.permute.xlu0 1
        %3402 = vperm.xlu0 %3401, %v1312
        %v3403 = vpop.permute.xlu0 %3402
        %3405 = vset.pattern.permute.xlu0 1
        %3406 = vperm.xlu0 %3405, %v1313
        %v3407 = vpop.permute.xlu0 %3406
        %3409 = vset.pattern.permute.xlu0 1
        %3410 = vperm.xlu0 %3409, %v1314
        %v3411 = vpop.permute.xlu0 %3410
        %3413 = vset.pattern.permute.xlu0 1
        %3414 = vperm.xlu0 %3413, %v1315
        %v3415 = vpop.permute.xlu0 %3414
        %3417 = vset.pattern.permute.xlu0 1
        %3418 = vperm.xlu0 %3417, %v1316
        %v3419 = vpop.permute.xlu0 %3418
        %3421 = vset.pattern.permute.xlu0 1
        %3422 = vperm.xlu0 %3421, %v1317
        %v3423 = vpop.permute.xlu0 %3422
        %3425 = vset.pattern.permute.xlu0 1
        %3426 = vperm.xlu0 %3425, %v1318
        %v3427 = vpop.permute.xlu0 %3426
        %3429 = vset.pattern.permute.xlu0 1
        %3430 = vperm.xlu0 %3429, %v1319
        %v3431 = vpop.permute.xlu0 %3430
        %3433 = vset.pattern.permute.xlu0 1
        %3434 = vperm.xlu0 %3433, %v1320
        %v3435 = vpop.permute.xlu0 %3434
        %3437 = vset.pattern.permute.xlu0 1
        %3438 = vperm.xlu0 %3437, %v1321
        %v3439 = vpop.permute.xlu0 %3438
        %3441 = vset.pattern.permute.xlu0 1
        %3442 = vperm.xlu0 %3441, %v1322
        %v3443 = vpop.permute.xlu0 %3442
        %3445 = vset.pattern.permute.xlu0 1
        %3446 = vperm.xlu0 %3445, %v1323
        %v3447 = vpop.permute.xlu0 %3446
        %3449 = vset.pattern.permute.xlu0 1
        %3450 = vperm.xlu0 %3449, %v1324
        %v3451 = vpop.permute.xlu0 %3450
        %v3453 = vmul.f32 %v3373, %v3391
        %v3454 = vmul.f32 %v3374, %v3395
        %v3455 = vmul.f32 %v3375, %v3399
        %v3456 = vmul.f32 %v3376, %v3403
        %v3457 = vmul.f32 %v3377, %v3407
        %v3458 = vmul.f32 %v3378, %v3411
        %v3459 = vmul.f32 %v3379, %v3415
        %v3460 = vmul.f32 %v3380, %v3419
        %v3461 = vmul.f32 %v3381, %v3423
        %v3462 = vmul.f32 %v3382, %v3427
        %v3463 = vmul.f32 %v3383, %v3431
        %v3464 = vmul.f32 %v3384, %v3435
        %v3465 = vmul.f32 %v3385, %v3439
        %v3466 = vmul.f32 %v3386, %v3443
        %v3467 = vmul.f32 %v3387, %v3447
        %v3468 = vmul.f32 %v3388, %v3451
        %v3469 = vadd.f32 %v3277, %v3453
        %v3470 = vadd.f32 %v3278, %v3454
        %v3471 = vadd.f32 %v3279, %v3455
        %v3472 = vadd.f32 %v3280, %v3456
        %v3473 = vadd.f32 %v3281, %v3457
        %v3474 = vadd.f32 %v3282, %v3458
        %v3475 = vadd.f32 %v3283, %v3459
        %v3476 = vadd.f32 %v3284, %v3460
        %v3477 = vadd.f32 %v3285, %v3461
        %v3478 = vadd.f32 %v3286, %v3462
        %v3479 = vadd.f32 %v3287, %v3463
        %v3480 = vadd.f32 %v3288, %v3464
        %v3481 = vadd.f32 %v3289, %v3465
        %v3482 = vadd.f32 %v3290, %v3466
        %v3483 = vadd.f32 %v3291, %v3467
        %v3484 = vadd.f32 %v3292, %v3468
        %3485 = vset.pattern.permute.xlu0 1
        %3486 = vperm.xlu0 %3485, %v1581
        %v3487 = vpop.permute.xlu0 %3486
        %3488 = vset.pattern.permute.xlu0 1
        %3489 = vperm.xlu0 %3488, %v1582
        %v3490 = vpop.permute.xlu0 %3489
        %3491 = vset.pattern.permute.xlu0 1
        %3492 = vperm.xlu0 %3491, %v1583
        %v3493 = vpop.permute.xlu0 %3492
        %3494 = vset.pattern.permute.xlu0 1
        %3495 = vperm.xlu0 %3494, %v1584
        %v3496 = vpop.permute.xlu0 %3495
        %3497 = vset.pattern.permute.xlu0 1
        %3498 = vperm.xlu0 %3497, %v1585
        %v3499 = vpop.permute.xlu0 %3498
        %3500 = vset.pattern.permute.xlu0 1
        %3501 = vperm.xlu0 %3500, %v1586
        %v3502 = vpop.permute.xlu0 %3501
        %3503 = vset.pattern.permute.xlu0 1
        %3504 = vperm.xlu0 %3503, %v1587
        %v3505 = vpop.permute.xlu0 %3504
        %3506 = vset.pattern.permute.xlu0 1
        %3507 = vperm.xlu0 %3506, %v1588
        %v3508 = vpop.permute.xlu0 %3507
        %3509 = vset.pattern.permute.xlu0 1
        %3510 = vperm.xlu0 %3509, %v1589
        %v3511 = vpop.permute.xlu0 %3510
        %3512 = vset.pattern.permute.xlu0 1
        %3513 = vperm.xlu0 %3512, %v1590
        %v3514 = vpop.permute.xlu0 %3513
        %3515 = vset.pattern.permute.xlu0 1
        %3516 = vperm.xlu0 %3515, %v1591
        %v3517 = vpop.permute.xlu0 %3516
        %3518 = vset.pattern.permute.xlu0 1
        %3519 = vperm.xlu0 %3518, %v1592
        %v3520 = vpop.permute.xlu0 %3519
        %3521 = vset.pattern.permute.xlu0 1
        %3522 = vperm.xlu0 %3521, %v1593
        %v3523 = vpop.permute.xlu0 %3522
        %3524 = vset.pattern.permute.xlu0 1
        %3525 = vperm.xlu0 %3524, %v1594
        %v3526 = vpop.permute.xlu0 %3525
        %3527 = vset.pattern.permute.xlu0 1
        %3528 = vperm.xlu0 %3527, %v1595
        %v3529 = vpop.permute.xlu0 %3528
        %3530 = vset.pattern.permute.xlu0 1
        %3531 = vperm.xlu0 %3530, %v1596
        %v3532 = vpop.permute.xlu0 %3531
        %vm3533 = vcmp.eq.s32.totalorder %v620, %v3487
        %vm3534 = vcmp.eq.s32.totalorder %v620, %v3490
        %vm3535 = vcmp.eq.s32.totalorder %v620, %v3493
        %vm3536 = vcmp.eq.s32.totalorder %v620, %v3496
        %vm3537 = vcmp.eq.s32.totalorder %v620, %v3499
        %vm3538 = vcmp.eq.s32.totalorder %v620, %v3502
        %vm3539 = vcmp.eq.s32.totalorder %v620, %v3505
        %vm3540 = vcmp.eq.s32.totalorder %v620, %v3508
        %vm3541 = vcmp.eq.s32.totalorder %v620, %v3511
        %vm3542 = vcmp.eq.s32.totalorder %v620, %v3514
        %vm3543 = vcmp.eq.s32.totalorder %v620, %v3517
        %vm3544 = vcmp.eq.s32.totalorder %v620, %v3520
        %vm3545 = vcmp.eq.s32.totalorder %v620, %v3523
        %vm3546 = vcmp.eq.s32.totalorder %v620, %v3526
        %vm3547 = vcmp.eq.s32.totalorder %v620, %v3529
        %vm3548 = vcmp.eq.s32.totalorder %v620, %v3532
        %v3549 = vsel %vm3533, 1, 0
        %v3550 = vsel %vm3534, 1, 0
        %v3551 = vsel %vm3535, 1, 0
        %v3552 = vsel %vm3536, 1, 0
        %v3553 = vsel %vm3537, 1, 0
        %v3554 = vsel %vm3538, 1, 0
        %v3555 = vsel %vm3539, 1, 0
        %v3556 = vsel %vm3540, 1, 0
        %v3557 = vsel %vm3541, 1, 0
        %v3558 = vsel %vm3542, 1, 0
        %v3559 = vsel %vm3543, 1, 0
        %v3560 = vsel %vm3544, 1, 0
        %v3561 = vsel %vm3545, 1, 0
        %v3562 = vsel %vm3546, 1, 0
        %v3563 = vsel %vm3547, 1, 0
        %v3564 = vsel %vm3548, 1, 0
        %v3565 = vcvt.s32.f32 %v3549
        %v3566 = vcvt.s32.f32 %v3550
        %v3567 = vcvt.s32.f32 %v3551
        %v3568 = vcvt.s32.f32 %v3552
        %v3569 = vcvt.s32.f32 %v3553
        %v3570 = vcvt.s32.f32 %v3554
        %v3571 = vcvt.s32.f32 %v3555
        %v3572 = vcvt.s32.f32 %v3556
        %v3573 = vcvt.s32.f32 %v3557
        %v3574 = vcvt.s32.f32 %v3558
        %v3575 = vcvt.s32.f32 %v3559
        %v3576 = vcvt.s32.f32 %v3560
        %v3577 = vcvt.s32.f32 %v3561
        %v3578 = vcvt.s32.f32 %v3562
        %v3579 = vcvt.s32.f32 %v3563
        %v3580 = vcvt.s32.f32 %v3564
        %3581 = vset.pattern.permute.xlu0 1
        %3582 = vperm.xlu0 %3581, %v1565
        %v3583 = vpop.permute.xlu0 %3582
        %3585 = vset.pattern.permute.xlu0 1
        %3586 = vperm.xlu0 %3585, %v1566
        %v3587 = vpop.permute.xlu0 %3586
        %3589 = vset.pattern.permute.xlu0 1
        %3590 = vperm.xlu0 %3589, %v1567
        %v3591 = vpop.permute.xlu0 %3590
        %3593 = vset.pattern.permute.xlu0 1
        %3594 = vperm.xlu0 %3593, %v1568
        %v3595 = vpop.permute.xlu0 %3594
        %3597 = vset.pattern.permute.xlu0 1
        %3598 = vperm.xlu0 %3597, %v1569
        %v3599 = vpop.permute.xlu0 %3598
        %3601 = vset.pattern.permute.xlu0 1
        %3602 = vperm.xlu0 %3601, %v1570
        %v3603 = vpop.permute.xlu0 %3602
        %3605 = vset.pattern.permute.xlu0 1
        %3606 = vperm.xlu0 %3605, %v1571
        %v3607 = vpop.permute.xlu0 %3606
        %3609 = vset.pattern.permute.xlu0 1
        %3610 = vperm.xlu0 %3609, %v1572
        %v3611 = vpop.permute.xlu0 %3610
        %3613 = vset.pattern.permute.xlu0 1
        %3614 = vperm.xlu0 %3613, %v1573
        %v3615 = vpop.permute.xlu0 %3614
        %3617 = vset.pattern.permute.xlu0 1
        %3618 = vperm.xlu0 %3617, %v1574
        %v3619 = vpop.permute.xlu0 %3618
        %3621 = vset.pattern.permute.xlu0 1
        %3622 = vperm.xlu0 %3621, %v1575
        %v3623 = vpop.permute.xlu0 %3622
        %3625 = vset.pattern.permute.xlu0 1
        %3626 = vperm.xlu0 %3625, %v1576
        %v3627 = vpop.permute.xlu0 %3626
        %3629 = vset.pattern.permute.xlu0 1
        %3630 = vperm.xlu0 %3629, %v1577
        %v3631 = vpop.permute.xlu0 %3630
        %3633 = vset.pattern.permute.xlu0 1
        %3634 = vperm.xlu0 %3633, %v1578
        %v3635 = vpop.permute.xlu0 %3634
        %3637 = vset.pattern.permute.xlu0 1
        %3638 = vperm.xlu0 %3637, %v1579
        %v3639 = vpop.permute.xlu0 %3638
        %3641 = vset.pattern.permute.xlu0 1
        %3642 = vperm.xlu0 %3641, %v1580
        %v3643 = vpop.permute.xlu0 %3642
        %v3645 = vmul.f32 %v3565, %v3583
        %v3646 = vmul.f32 %v3566, %v3587
        %v3647 = vmul.f32 %v3567, %v3591
        %v3648 = vmul.f32 %v3568, %v3595
        %v3649 = vmul.f32 %v3569, %v3599
        %v3650 = vmul.f32 %v3570, %v3603
        %v3651 = vmul.f32 %v3571, %v3607
        %v3652 = vmul.f32 %v3572, %v3611
        %v3653 = vmul.f32 %v3573, %v3615
        %v3654 = vmul.f32 %v3574, %v3619
        %v3655 = vmul.f32 %v3575, %v3623
        %v3656 = vmul.f32 %v3576, %v3627
        %v3657 = vmul.f32 %v3577, %v3631
        %v3658 = vmul.f32 %v3578, %v3635
        %v3659 = vmul.f32 %v3579, %v3639
        %v3660 = vmul.f32 %v3580, %v3643
        %v3661 = vadd.f32 %v3469, %v3645
        %v3662 = vadd.f32 %v3470, %v3646
        %v3663 = vadd.f32 %v3471, %v3647
        %v3664 = vadd.f32 %v3472, %v3648
        %v3665 = vadd.f32 %v3473, %v3649
        %v3666 = vadd.f32 %v3474, %v3650
        %v3667 = vadd.f32 %v3475, %v3651
        %v3668 = vadd.f32 %v3476, %v3652
        %v3669 = vadd.f32 %v3477, %v3653
        %v3670 = vadd.f32 %v3478, %v3654
        %v3671 = vadd.f32 %v3479, %v3655
        %v3672 = vadd.f32 %v3480, %v3656
        %v3673 = vadd.f32 %v3481, %v3657
        %v3674 = vadd.f32 %v3482, %v3658
        %v3675 = vadd.f32 %v3483, %v3659
        %v3676 = vadd.f32 %v3484, %v3660
        %v3677 = vpack.c.bf16 %v3662, %v3661
        %v3678 = vpack.c.bf16 %v3664, %v3663
        %v3679 = vpack.c.bf16 %v3666, %v3665
        %v3680 = vpack.c.bf16 %v3668, %v3667
        %v3681 = vpack.c.bf16 %v3670, %v3669
        %v3682 = vpack.c.bf16 %v3672, %v3671
        %v3683 = vpack.c.bf16 %v3674, %v3673
        %v3684 = vpack.c.bf16 %v3676, %v3675
        %v3685 = vld [vmem:[%s1] sm:$0xff]
        %v3686 = vld [vmem:[%s1 + $0x8] sm:$0xff]
        %v3687 = vld [vmem:[#allocation2] sm:$0xff]
        %v3688 = vld [vmem:[#allocation2 + $0x8] sm:$0xff]
        %v3691 = vunpack.c.l.b16 %v3687
        %v3692 = vunpack.c.h.b16 %v3687
        %v3693 = vunpack.c.l.b16 %v3688
        %v3694 = vunpack.c.h.b16 %v3688
        %v3695 = vpack.c.b16 %v3693, %v3691
        %v3696 = vpack.c.b16 %v3694, %v3692
        %vm3699 = vcmask 130048
        %v3701 = vsel %vm3699, %v2917, 0
        %v3704 = vsel %vm3699, %v2918, 0
        %v3707 = vsel %vm3699, %v2919, 0
        %v3710 = vsel %vm3699, %v2920, 0
        %v3713 = vsel %vm3699, %v2921, 0
        %v3716 = vsel %vm3699, %v2922, 0
        %v3719 = vsel %vm3699, %v2923, 0
        %v3722 = vsel %vm3699, %v2924, 0
        %3724 = vmatprep.subr.bf16.mxu0 %v3696
        %3725 = vmatpush1.bf16.msra.mxu0 %v3695
        %3726 = vmatprep.subr.bf16.mxu0 0
        %3727 = vmatpush1.bf16.msra.mxu0 0
        %3728 = vmatprep.subr.bf16.mxu0 0
        %3729 = vmatpush1.bf16.msra.mxu0 0
        %3730 = vmatprep.subr.bf16.mxu0 0
        %3731 = vmatpush1.bf16.msra.mxu0 0
        %3732 = vmatprep.subr.bf16.mxu0 0
        %3733 = vmatpush1.bf16.msra.mxu0 0
        %3734 = vmatprep.subr.bf16.mxu0 0
        %3735 = vmatpush1.bf16.msra.mxu0 0
        %3736 = vmatprep.subr.bf16.mxu0 0
        %3737 = vmatpush1.bf16.msra.mxu0 0
        %3738 = vmatprep.subr.bf16.mxu0 0
        %3739 = vmatpush1.bf16.msra.mxu0 0
        %3740 = vmatprep.subr.bf16.mxu0 0
        %3741 = vmatpush1.bf16.msra.mxu0 0
        %3742 = vmatprep.subr.bf16.mxu0 0
        %3743 = vmatpush1.bf16.msra.mxu0 0
        %3744 = vmatprep.subr.bf16.mxu0 0
        %3745 = vmatpush1.bf16.msra.mxu0 0
        %3746 = vmatprep.subr.bf16.mxu0 0
        %3747 = vmatpush1.bf16.msra.mxu0 0
        %3748 = vmatprep.subr.bf16.mxu0 0
        %3749 = vmatpush1.bf16.msra.mxu0 0
        %3750 = vmatprep.subr.bf16.mxu0 0
        %3751 = vmatpush1.bf16.msra.mxu0 0
        %3752 = vmatprep.subr.bf16.mxu0 0
        %3753 = vmatpush1.bf16.msra.mxu0 0
        %3754 = vmatprep.subr.bf16.mxu0 0
        %3755 = vmatpush1.bf16.msra.mxu0 0
        %3756 = vmatprep.mubr.bf16.mxu0 0
        %3757 = vmatmul.mubr.bf16.gmra.mrb[0].mxu0 %v3701
        %v3758 = vpop.f32.mrb[0].mxu0
        %v3759 = vadd.f32 0.0, %v3758
        %v3760 = vpop.f32.mrb[0].mxu0
        %v3761 = vadd.f32 0.0, %v3760
        %v3762 = vpop.f32.mrb[0].mxu0
        %v3763 = vadd.f32 0.0, %v3762
        %v3764 = vpop.f32.mrb[0].mxu0
        %v3765 = vadd.f32 0.0, %v3764
        %3766 = vmatprep.mubr.bf16.mxu0 0
        %3767 = vmatmul.mubr.bf16.gmra.mrb[0].mxu0 %v3704
        %v3768 = vpop.f32.mrb[0].mxu0
        %v3769 = vadd.f32 0.0, %v3768
        %v3770 = vpop.f32.mrb[0].mxu0
        %v3771 = vadd.f32 0.0, %v3770
        %v3772 = vpop.f32.mrb[0].mxu0
        %v3773 = vadd.f32 0.0, %v3772
        %v3774 = vpop.f32.mrb[0].mxu0
        %v3775 = vadd.f32 0.0, %v3774
        %3776 = vmatprep.mubr.bf16.mxu0 0
        %3777 = vmatmul.mubr.bf16.gmra.mrb[0].mxu0 %v3707
        %v3778 = vpop.f32.mrb[0].mxu0
        %v3779 = vadd.f32 0.0, %v3778
        %v3780 = vpop.f32.mrb[0].mxu0
        %v3781 = vadd.f32 0.0, %v3780
        %v3782 = vpop.f32.mrb[0].mxu0
        %v3783 = vadd.f32 0.0, %v3782
        %v3784 = vpop.f32.mrb[0].mxu0
        %v3785 = vadd.f32 0.0, %v3784
        %3786 = vmatprep.mubr.bf16.mxu0 0
        %3787 = vmatmul.mubr.bf16.gmra.mrb[0].mxu0 %v3710
        %v3788 = vpop.f32.mrb[0].mxu0
        %v3789 = vadd.f32 0.0, %v3788
        %v3790 = vpop.f32.mrb[0].mxu0
        %v3791 = vadd.f32 0.0, %v3790
        %v3792 = vpop.f32.mrb[0].mxu0
        %v3793 = vadd.f32 0.0, %v3792
        %v3794 = vpop.f32.mrb[0].mxu0
        %v3795 = vadd.f32 0.0, %v3794
        %3796 = vmatprep.mubr.bf16.mxu0 0
        %3797 = vmatmul.mubr.bf16.gmra.mrb[0].mxu0 %v3713
        %v3798 = vpop.f32.mrb[0].mxu0
        %v3799 = vadd.f32 0.0, %v3798
        %v3800 = vpop.f32.mrb[0].mxu0
        %v3801 = vadd.f32 0.0, %v3800
        %v3802 = vpop.f32.mrb[0].mxu0
        %v3803 = vadd.f32 0.0, %v3802
        %v3804 = vpop.f32.mrb[0].mxu0
        %v3805 = vadd.f32 0.0, %v3804
        %3806 = vmatprep.mubr.bf16.mxu0 0
        %3807 = vmatmul.mubr.bf16.gmra.mrb[0].mxu0 %v3716
        %v3808 = vpop.f32.mrb[0].mxu0
        %v3809 = vadd.f32 0.0, %v3808
        %v3810 = vpop.f32.mrb[0].mxu0
        %v3811 = vadd.f32 0.0, %v3810
        %v3812 = vpop.f32.mrb[0].mxu0
        %v3813 = vadd.f32 0.0, %v3812
        %v3814 = vpop.f32.mrb[0].mxu0
        %v3815 = vadd.f32 0.0, %v3814
        %3816 = vmatprep.mubr.bf16.mxu0 0
        %3817 = vmatmul.mubr.bf16.gmra.mrb[0].mxu0 %v3719
        %v3818 = vpop.f32.mrb[0].mxu0
        %v3819 = vadd.f32 0.0, %v3818
        %v3820 = vpop.f32.mrb[0].mxu0
        %v3821 = vadd.f32 0.0, %v3820
        %v3822 = vpop.f32.mrb[0].mxu0
        %v3823 = vadd.f32 0.0, %v3822
        %v3824 = vpop.f32.mrb[0].mxu0
        %v3825 = vadd.f32 0.0, %v3824
        %3826 = vmatprep.mubr.bf16.mxu0 0
        %3827 = vmatmul.mubr.bf16.gmra.mrb[0].mxu0 %v3722
        %v3828 = vpop.f32.mrb[0].mxu0
        %v3829 = vadd.f32 0.0, %v3828
        %v3830 = vpop.f32.mrb[0].mxu0
        %v3831 = vadd.f32 0.0, %v3830
        %v3832 = vpop.f32.mrb[0].mxu0
        %v3833 = vadd.f32 0.0, %v3832
        %v3834 = vpop.f32.mrb[0].mxu0
        %v3835 = vadd.f32 0.0, %v3834
        %3836 = vdwg.mxu0
        %v3839 = vunpack.c.l.b16 %v3685
        %v3840 = vunpack.c.h.b16 %v3685
        %v3841 = vunpack.c.l.b16 %v3686
        %v3842 = vunpack.c.h.b16 %v3686
        %v3843 = vpack.c.b16 %v3841, %v3839
        %v3844 = vpack.c.b16 %v3842, %v3840
        %v3848 = vsel %vm3699, %v1805, 0
        %v3851 = vsel %vm3699, %v1806, 0
        %v3854 = vsel %vm3699, %v1807, 0
        %v3857 = vsel %vm3699, %v1808, 0
        %v3860 = vsel %vm3699, %v1809, 0
        %v3863 = vsel %vm3699, %v1810, 0
        %v3866 = vsel %vm3699, %v1811, 0
        %v3869 = vsel %vm3699, %v1812, 0
        %3871 = vmatprep.subr.bf16.mxu0 %v3844
        %3872 = vmatpush1.bf16.msra.mxu0 %v3843
        %3873 = vmatprep.subr.bf16.mxu0 0
        %3874 = vmatpush1.bf16.msra.mxu0 0
        %3875 = vmatprep.subr.bf16.mxu0 0
        %3876 = vmatpush1.bf16.msra.mxu0 0
        %3877 = vmatprep.subr.bf16.mxu0 0
        %3878 = vmatpush1.bf16.msra.mxu0 0
        %3879 = vmatprep.subr.bf16.mxu0 0
        %3880 = vmatpush1.bf16.msra.mxu0 0
        %3881 = vmatprep.subr.bf16.mxu0 0
        %3882 = vmatpush1.bf16.msra.mxu0 0
        %3883 = vmatprep.subr.bf16.mxu0 0
        %3884 = vmatpush1.bf16.msra.mxu0 0
        %3885 = vmatprep.subr.bf16.mxu0 0
        %3886 = vmatpush1.bf16.msra.mxu0 0
        %3887 = vmatprep.subr.bf16.mxu0 0
        %3888 = vmatpush1.bf16.msra.mxu0 0
        %3889 = vmatprep.subr.bf16.mxu0 0
        %3890 = vmatpush1.bf16.msra.mxu0 0
        %3891 = vmatprep.subr.bf16.mxu0 0
        %3892 = vmatpush1.bf16.msra.mxu0 0
        %3893 = vmatprep.subr.bf16.mxu0 0
        %3894 = vmatpush1.bf16.msra.mxu0 0
        %3895 = vmatprep.subr.bf16.mxu0 0
        %3896 = vmatpush1.bf16.msra.mxu0 0
        %3897 = vmatprep.subr.bf16.mxu0 0
        %3898 = vmatpush1.bf16.msra.mxu0 0
        %3899 = vmatprep.subr.bf16.mxu0 0
        %3900 = vmatpush1.bf16.msra.mxu0 0
        %3901 = vmatprep.subr.bf16.mxu0 0
        %3902 = vmatpush1.bf16.msra.mxu0 0
        %3903 = vmatprep.mubr.bf16.mxu0 0
        %3904 = vmatmul.mubr.bf16.gmra.mrb[0].mxu0 %v3848
        %v3905 = vpop.f32.mrb[0].mxu0
        %v3906 = vadd.f32 %v3759, %v3905
        %v3907 = vpop.f32.mrb[0].mxu0
        %v3908 = vadd.f32 %v3761, %v3907
        %v3909 = vpop.f32.mrb[0].mxu0
        %v3910 = vadd.f32 %v3763, %v3909
        %v3911 = vpop.f32.mrb[0].mxu0
        %v3912 = vadd.f32 %v3765, %v3911
        %3913 = vmatprep.mubr.bf16.mxu0 0
        %3914 = vmatmul.mubr.bf16.gmra.mrb[0].mxu0 %v3851
        %v3915 = vpop.f32.mrb[0].mxu0
        %v3916 = vadd.f32 %v3769, %v3915
        %v3917 = vpop.f32.mrb[0].mxu0
        %v3918 = vadd.f32 %v3771, %v3917
        %v3919 = vpop.f32.mrb[0].mxu0
        %v3920 = vadd.f32 %v3773, %v3919
        %v3921 = vpop.f32.mrb[0].mxu0
        %v3922 = vadd.f32 %v3775, %v3921
        %3923 = vmatprep.mubr.bf16.mxu0 0
        %3924 = vmatmul.mubr.bf16.gmra.mrb[0].mxu0 %v3854
        %v3925 = vpop.f32.mrb[0].mxu0
        %v3926 = vadd.f32 %v3779, %v3925
        %v3927 = vpop.f32.mrb[0].mxu0
        %v3928 = vadd.f32 %v3781, %v3927
        %v3929 = vpop.f32.mrb[0].mxu0
        %v3930 = vadd.f32 %v3783, %v3929
        %v3931 = vpop.f32.mrb[0].mxu0
        %v3932 = vadd.f32 %v3785, %v3931
        %3933 = vmatprep.mubr.bf16.mxu0 0
        %3934 = vmatmul.mubr.bf16.gmra.mrb[0].mxu0 %v3857
        %v3935 = vpop.f32.mrb[0].mxu0
        %v3936 = vadd.f32 %v3789, %v3935
        %v3937 = vpop.f32.mrb[0].mxu0
        %v3938 = vadd.f32 %v3791, %v3937
        %v3939 = vpop.f32.mrb[0].mxu0
        %v3940 = vadd.f32 %v3793, %v3939
        %v3941 = vpop.f32.mrb[0].mxu0
        %v3942 = vadd.f32 %v3795, %v3941
        %3943 = vmatprep.mubr.bf16.mxu0 0
        %3944 = vmatmul.mubr.bf16.gmra.mrb[0].mxu0 %v3860
        %v3945 = vpop.f32.mrb[0].mxu0
        %v3946 = vadd.f32 %v3799, %v3945
        %v3947 = vpop.f32.mrb[0].mxu0
        %v3948 = vadd.f32 %v3801, %v3947
        %v3949 = vpop.f32.mrb[0].mxu0
        %v3950 = vadd.f32 %v3803, %v3949
        %v3951 = vpop.f32.mrb[0].mxu0
        %v3952 = vadd.f32 %v3805, %v3951
        %3953 = vmatprep.mubr.bf16.mxu0 0
        %3954 = vmatmul.mubr.bf16.gmra.mrb[0].mxu0 %v3863
        %v3955 = vpop.f32.mrb[0].mxu0
        %v3956 = vadd.f32 %v3809, %v3955
        %v3957 = vpop.f32.mrb[0].mxu0
        %v3958 = vadd.f32 %v3811, %v3957
        %v3959 = vpop.f32.mrb[0].mxu0
        %v3960 = vadd.f32 %v3813, %v3959
        %v3961 = vpop.f32.mrb[0].mxu0
        %v3962 = vadd.f32 %v3815, %v3961
        %3963 = vmatprep.mubr.bf16.mxu0 0
        %3964 = vmatmul.mubr.bf16.gmra.mrb[0].mxu0 %v3866
        %v3965 = vpop.f32.mrb[0].mxu0
        %v3966 = vadd.f32 %v3819, %v3965
        %v3967 = vpop.f32.mrb[0].mxu0
        %v3968 = vadd.f32 %v3821, %v3967
        %v3969 = vpop.f32.mrb[0].mxu0
        %v3970 = vadd.f32 %v3823, %v3969
        %v3971 = vpop.f32.mrb[0].mxu0
        %v3972 = vadd.f32 %v3825, %v3971
        %3973 = vmatprep.mubr.bf16.mxu0 0
        %3974 = vmatmul.mubr.bf16.gmra.mrb[0].mxu0 %v3869
        %v3975 = vpop.f32.mrb[0].mxu0
        %v3976 = vadd.f32 %v3829, %v3975
        %v3977 = vpop.f32.mrb[0].mxu0
        %v3978 = vadd.f32 %v3831, %v3977
        %v3979 = vpop.f32.mrb[0].mxu0
        %v3980 = vadd.f32 %v3833, %v3979
        %v3981 = vpop.f32.mrb[0].mxu0
        %v3982 = vadd.f32 %v3835, %v3981
        %3983 = vdwg.mxu0
        %v3984 = vld [vmem:[#allocation5] sm:$0xff]
        %v3985 = vld [vmem:[#allocation5 + $0x8] sm:$0xff]
        %v3988 = vunpack.c.l.b16 %v3984
        %v3989 = vunpack.c.h.b16 %v3984
        %v3990 = vunpack.c.l.b16 %v3985
        %v3991 = vunpack.c.h.b16 %v3985
        %v3992 = vpack.c.b16 %v3990, %v3988
        %v3993 = vpack.c.b16 %v3991, %v3989
        %v3997 = vsel %vm3699, %v3677, 0
        %v4000 = vsel %vm3699, %v3678, 0
        %v4003 = vsel %vm3699, %v3679, 0
        %v4006 = vsel %vm3699, %v3680, 0
        %v4009 = vsel %vm3699, %v3681, 0
        %v4012 = vsel %vm3699, %v3682, 0
        %v4015 = vsel %vm3699, %v3683, 0
        %v4018 = vsel %vm3699, %v3684, 0
        %4020 = vmatprep.subr.bf16.mxu0 %v3993
        %4021 = vmatpush1.bf16.msra.mxu0 %v3992
        %4022 = vmatprep.subr.bf16.mxu0 0
        %4023 = vmatpush1.bf16.msra.mxu0 0
        %4024 = vmatprep.subr.bf16.mxu0 0
        %4025 = vmatpush1.bf16.msra.mxu0 0
        %4026 = vmatprep.subr.bf16.mxu0 0
        %4027 = vmatpush1.bf16.msra.mxu0 0
        %4028 = vmatprep.subr.bf16.mxu0 0
        %4029 = vmatpush1.bf16.msra.mxu0 0
        %4030 = vmatprep.subr.bf16.mxu0 0
        %4031 = vmatpush1.bf16.msra.mxu0 0
        %4032 = vmatprep.subr.bf16.mxu0 0
        %4033 = vmatpush1.bf16.msra.mxu0 0
        %4034 = vmatprep.subr.bf16.mxu0 0
        %4035 = vmatpush1.bf16.msra.mxu0 0
        %4036 = vmatprep.subr.bf16.mxu0 0
        %4037 = vmatpush1.bf16.msra.mxu0 0
        %4038 = vmatprep.subr.bf16.mxu0 0
        %4039 = vmatpush1.bf16.msra.mxu0 0
        %4040 = vmatprep.subr.bf16.mxu0 0
        %4041 = vmatpush1.bf16.msra.mxu0 0
        %4042 = vmatprep.subr.bf16.mxu0 0
        %4043 = vmatpush1.bf16.msra.mxu0 0
        %4044 = vmatprep.subr.bf16.mxu0 0
        %4045 = vmatpush1.bf16.msra.mxu0 0
        %4046 = vmatprep.subr.bf16.mxu0 0
        %4047 = vmatpush1.bf16.msra.mxu0 0
        %4048 = vmatprep.subr.bf16.mxu0 0
        %4049 = vmatpush1.bf16.msra.mxu0 0
        %4050 = vmatprep.subr.bf16.mxu0 0
        %4051 = vmatpush1.bf16.msra.mxu0 0
        %4052 = vmatprep.mubr.bf16.mxu0 0
        %4053 = vmatmul.mubr.bf16.gmra.mrb[0].mxu0 %v3997
        %v4054 = vpop.f32.mrb[0].mxu0
        %v4055 = vadd.f32 0.0, %v4054
        %v4056 = vpop.f32.mrb[0].mxu0
        %v4057 = vadd.f32 0.0, %v4056
        %v4058 = vpop.f32.mrb[0].mxu0
        %v4059 = vadd.f32 0.0, %v4058
        %v4060 = vpop.f32.mrb[0].mxu0
        %v4061 = vadd.f32 0.0, %v4060
        %4062 = vmatprep.mubr.bf16.mxu0 0
        %4063 = vmatmul.mubr.bf16.gmra.mrb[0].mxu0 %v4000
        %v4064 = vpop.f32.mrb[0].mxu0
        %v4065 = vadd.f32 0.0, %v4064
        %v4066 = vpop.f32.mrb[0].mxu0
        %v4067 = vadd.f32 0.0, %v4066
        %v4068 = vpop.f32.mrb[0].mxu0
        %v4069 = vadd.f32 0.0, %v4068
        %v4070 = vpop.f32.mrb[0].mxu0
        %v4071 = vadd.f32 0.0, %v4070
        %4072 = vmatprep.mubr.bf16.mxu0 0
        %4073 = vmatmul.mubr.bf16.gmra.mrb[0].mxu0 %v4003
        %v4074 = vpop.f32.mrb[0].mxu0
        %v4075 = vadd.f32 0.0, %v4074
        %v4076 = vpop.f32.mrb[0].mxu0
        %v4077 = vadd.f32 0.0, %v4076
        %v4078 = vpop.f32.mrb[0].mxu0
        %v4079 = vadd.f32 0.0, %v4078
        %v4080 = vpop.f32.mrb[0].mxu0
        %v4081 = vadd.f32 0.0, %v4080
        %4082 = vmatprep.mubr.bf16.mxu0 0
        %4083 = vmatmul.mubr.bf16.gmra.mrb[0].mxu0 %v4006
        %v4084 = vpop.f32.mrb[0].mxu0
        %v4085 = vadd.f32 0.0, %v4084
        %v4086 = vpop.f32.mrb[0].mxu0
        %v4087 = vadd.f32 0.0, %v4086
        %v4088 = vpop.f32.mrb[0].mxu0
        %v4089 = vadd.f32 0.0, %v4088
        %v4090 = vpop.f32.mrb[0].mxu0
        %v4091 = vadd.f32 0.0, %v4090
        %4092 = vmatprep.mubr.bf16.mxu0 0
        %4093 = vmatmul.mubr.bf16.gmra.mrb[0].mxu0 %v4009
        %v4094 = vpop.f32.mrb[0].mxu0
        %v4095 = vadd.f32 0.0, %v4094
        %v4096 = vpop.f32.mrb[0].mxu0
        %v4097 = vadd.f32 0.0, %v4096
        %v4098 = vpop.f32.mrb[0].mxu0
        %v4099 = vadd.f32 0.0, %v4098
        %v4100 = vpop.f32.mrb[0].mxu0
        %v4101 = vadd.f32 0.0, %v4100
        %4102 = vmatprep.mubr.bf16.mxu0 0
        %4103 = vmatmul.mubr.bf16.gmra.mrb[0].mxu0 %v4012
        %v4104 = vpop.f32.mrb[0].mxu0
        %v4105 = vadd.f32 0.0, %v4104
        %v4106 = vpop.f32.mrb[0].mxu0
        %v4107 = vadd.f32 0.0, %v4106
        %v4108 = vpop.f32.mrb[0].mxu0
        %v4109 = vadd.f32 0.0, %v4108
        %v4110 = vpop.f32.mrb[0].mxu0
        %v4111 = vadd.f32 0.0, %v4110
        %4112 = vmatprep.mubr.bf16.mxu0 0
        %4113 = vmatmul.mubr.bf16.gmra.mrb[0].mxu0 %v4015
        %v4114 = vpop.f32.mrb[0].mxu0
        %v4115 = vadd.f32 0.0, %v4114
        %v4116 = vpop.f32.mrb[0].mxu0
        %v4117 = vadd.f32 0.0, %v4116
        %v4118 = vpop.f32.mrb[0].mxu0
        %v4119 = vadd.f32 0.0, %v4118
        %v4120 = vpop.f32.mrb[0].mxu0
        %v4121 = vadd.f32 0.0, %v4120
        %4122 = vmatprep.mubr.bf16.mxu0 0
        %4123 = vmatmul.mubr.bf16.gmra.mrb[0].mxu0 %v4018
        %v4124 = vpop.f32.mrb[0].mxu0
        %v4125 = vadd.f32 0.0, %v4124
        %v4126 = vpop.f32.mrb[0].mxu0
        %v4127 = vadd.f32 0.0, %v4126
        %v4128 = vpop.f32.mrb[0].mxu0
        %v4129 = vadd.f32 0.0, %v4128
        %v4130 = vpop.f32.mrb[0].mxu0
        %v4131 = vadd.f32 0.0, %v4130
        %4132 = vdwg.mxu0
        %v4133 = vadd.f32 %v3906, %v4055
        %v4134 = vadd.f32 %v3908, %v4057
        %v4135 = vadd.f32 %v3910, %v4059
        %v4136 = vadd.f32 %v3912, %v4061
        %v4137 = vadd.f32 %v3916, %v4065
        %v4138 = vadd.f32 %v3918, %v4067
        %v4139 = vadd.f32 %v3920, %v4069
        %v4140 = vadd.f32 %v3922, %v4071
        %v4141 = vadd.f32 %v3926, %v4075
        %v4142 = vadd.f32 %v3928, %v4077
        %v4143 = vadd.f32 %v3930, %v4079
        %v4144 = vadd.f32 %v3932, %v4081
        %v4145 = vadd.f32 %v3936, %v4085
        %v4146 = vadd.f32 %v3938, %v4087
        %v4147 = vadd.f32 %v3940, %v4089
        %v4148 = vadd.f32 %v3942, %v4091
        %v4149 = vadd.f32 %v3946, %v4095
        %v4150 = vadd.f32 %v3948, %v4097
        %v4151 = vadd.f32 %v3950, %v4099
        %v4152 = vadd.f32 %v3952, %v4101
        %v4153 = vadd.f32 %v3956, %v4105
        %v4154 = vadd.f32 %v3958, %v4107
        %v4155 = vadd.f32 %v3960, %v4109
        %v4156 = vadd.f32 %v3962, %v4111
        %v4157 = vadd.f32 %v3966, %v4115
        %v4158 = vadd.f32 %v3968, %v4117
        %v4159 = vadd.f32 %v3970, %v4119
        %v4160 = vadd.f32 %v3972, %v4121
        %v4161 = vadd.f32 %v3976, %v4125
        %v4162 = vadd.f32 %v3978, %v4127
        %v4163 = vadd.f32 %v3980, %v4129
        %v4164 = vadd.f32 %v3982, %v4131
        %v4165 = vld [vmem:[%s4] sm:$0x3]
        %v4167 = vlaneseq
        %v4168 = vshrl.u32 %v4167, 7
        %v4169 = vsub.s32 0, %v4168
        %v4170 = vrot.slane %v4165, %v4169
        %v4171 = vlaneseq
        %v4172 = vshrl.u32 %v4171, 7
        %v4173 = vsub.s32 1, %v4172
        %v4174 = vrot.slane %v4165, %v4173
        %v4177 = vadd.f32 %v4133, %v4170
        %v4178 = vadd.f32 %v4134, %v4174
        %v4179 = vadd.f32 %v4135, %v4170
        %v4180 = vadd.f32 %v4136, %v4174
        %v4181 = vadd.f32 %v4137, %v4170
        %v4182 = vadd.f32 %v4138, %v4174
        %v4183 = vadd.f32 %v4139, %v4170
        %v4184 = vadd.f32 %v4140, %v4174
        %v4185 = vadd.f32 %v4141, %v4170
        %v4186 = vadd.f32 %v4142, %v4174
        %v4187 = vadd.f32 %v4143, %v4170
        %v4188 = vadd.f32 %v4144, %v4174
        %v4189 = vadd.f32 %v4145, %v4170
        %v4190 = vadd.f32 %v4146, %v4174
        %v4191 = vadd.f32 %v4147, %v4170
        %v4192 = vadd.f32 %v4148, %v4174
        %v4193 = vadd.f32 %v4149, %v4170
        %v4194 = vadd.f32 %v4150, %v4174
        %v4195 = vadd.f32 %v4151, %v4170
        %v4196 = vadd.f32 %v4152, %v4174
        %v4197 = vadd.f32 %v4153, %v4170
        %v4198 = vadd.f32 %v4154, %v4174
        %v4199 = vadd.f32 %v4155, %v4170
        %v4200 = vadd.f32 %v4156, %v4174
        %v4201 = vadd.f32 %v4157, %v4170
        %v4202 = vadd.f32 %v4158, %v4174
        %v4203 = vadd.f32 %v4159, %v4170
        %v4204 = vadd.f32 %v4160, %v4174
        %v4205 = vadd.f32 %v4161, %v4170
        %v4206 = vadd.f32 %v4162, %v4174
        %v4207 = vadd.f32 %v4163, %v4170
        %v4208 = vadd.f32 %v4164, %v4174
        %v4209 = vmax.f32 %v4177, 0.0
        %v4210 = vmax.f32 %v4178, 0.0
        %v4211 = vmax.f32 %v4179, 0.0
        %v4212 = vmax.f32 %v4180, 0.0
        %v4213 = vmax.f32 %v4181, 0.0
        %v4214 = vmax.f32 %v4182, 0.0
        %v4215 = vmax.f32 %v4183, 0.0
        %v4216 = vmax.f32 %v4184, 0.0
        %v4217 = vmax.f32 %v4185, 0.0
        %v4218 = vmax.f32 %v4186, 0.0
        %v4219 = vmax.f32 %v4187, 0.0
        %v4220 = vmax.f32 %v4188, 0.0
        %v4221 = vmax.f32 %v4189, 0.0
        %v4222 = vmax.f32 %v4190, 0.0
        %v4223 = vmax.f32 %v4191, 0.0
        %v4224 = vmax.f32 %v4192, 0.0
        %v4225 = vmax.f32 %v4193, 0.0
        %v4226 = vmax.f32 %v4194, 0.0
        %v4227 = vmax.f32 %v4195, 0.0
        %v4228 = vmax.f32 %v4196, 0.0
        %v4229 = vmax.f32 %v4197, 0.0
        %v4230 = vmax.f32 %v4198, 0.0
        %v4231 = vmax.f32 %v4199, 0.0
        %v4232 = vmax.f32 %v4200, 0.0
        %v4233 = vmax.f32 %v4201, 0.0
        %v4234 = vmax.f32 %v4202, 0.0
        %v4235 = vmax.f32 %v4203, 0.0
        %v4236 = vmax.f32 %v4204, 0.0
        %v4237 = vmax.f32 %v4205, 0.0
        %v4238 = vmax.f32 %v4206, 0.0
        %v4239 = vmax.f32 %v4207, 0.0
        %v4240 = vmax.f32 %v4208, 0.0
        %v4241 = vpack.c.bf16 %v4211, %v4209
        %v4242 = vpack.c.bf16 %v4212, %v4210
        %v4243 = vpack.c.bf16 %v4215, %v4213
        %v4244 = vpack.c.bf16 %v4216, %v4214
        %v4245 = vpack.c.bf16 %v4219, %v4217
        %v4246 = vpack.c.bf16 %v4220, %v4218
        %v4247 = vpack.c.bf16 %v4223, %v4221
        %v4248 = vpack.c.bf16 %v4224, %v4222
        %v4249 = vpack.c.bf16 %v4227, %v4225
        %v4250 = vpack.c.bf16 %v4228, %v4226
        %v4251 = vpack.c.bf16 %v4231, %v4229
        %v4252 = vpack.c.bf16 %v4232, %v4230
        %v4253 = vpack.c.bf16 %v4235, %v4233
        %v4254 = vpack.c.bf16 %v4236, %v4234
        %v4255 = vpack.c.bf16 %v4239, %v4237
        %v4256 = vpack.c.bf16 %v4240, %v4238
        %v4257 = vld [vmem:[%s5] sm:$0xff]
        %v4258 = vld [vmem:[%s5 + $0x8] sm:$0xff]
        %v4259 = vld [vmem:[%s5 + $0x10] sm:$0xff]
        %v4260 = vld [vmem:[%s5 + $0x18] sm:$0xff]
        %v4261 = vld [vmem:[%s5 + $0x20] sm:$0xff]
        %v4262 = vld [vmem:[%s5 + $0x28] sm:$0xff]
        %v4263 = vld [vmem:[%s5 + $0x30] sm:$0xff]
        %v4264 = vld [vmem:[%s5 + $0x38] sm:$0xff]
        %v4265 = vld [vmem:[%s5 + $0x40] sm:$0xff]
        %v4266 = vld [vmem:[%s5 + $0x48] sm:$0xff]
        %v4267 = vld [vmem:[%s5 + $0x50] sm:$0xff]
        %v4268 = vld [vmem:[%s5 + $0x58] sm:$0xff]
        %v4269 = vld [vmem:[%s5 + $0x60] sm:$0xff]
        %v4270 = vld [vmem:[%s5 + $0x68] sm:$0xff]
        %v4271 = vld [vmem:[%s5 + $0x70] sm:$0xff]
        %v4272 = vld [vmem:[%s5 + $0x78] sm:$0xff]
        %v4273 = vld [vmem:[%s5 + $0x80] sm:$0xff]
        %v4274 = vld [vmem:[%s5 + $0x88] sm:$0xff]
        %v4275 = vld [vmem:[%s5 + $0x90] sm:$0xff]
        %v4276 = vld [vmem:[%s5 + $0x98] sm:$0xff]
        %v4277 = vld [vmem:[%s5 + $0xa0] sm:$0xff]
        %v4278 = vld [vmem:[%s5 + $0xa8] sm:$0xff]
        %v4279 = vld [vmem:[%s5 + $0xb0] sm:$0xff]
        %v4280 = vld [vmem:[%s5 + $0xb8] sm:$0xff]
        %v4281 = vld [vmem:[%s5 + $0xc0] sm:$0xff]
        %v4282 = vld [vmem:[%s5 + $0xc8] sm:$0xff]
        %v4283 = vld [vmem:[%s5 + $0xd0] sm:$0xff]
        %v4284 = vld [vmem:[%s5 + $0xd8] sm:$0xff]
        %v4285 = vld [vmem:[%s5 + $0xe0] sm:$0xff]
        %v4286 = vld [vmem:[%s5 + $0xe8] sm:$0xff]
        %v4287 = vld [vmem:[%s5 + $0xf0] sm:$0xff]
        %v4288 = vld [vmem:[%s5 + $0xf8] sm:$0xff]
        %v4289 = vld [vmem:[%s6] sm:$0x3]
        %v4291 = vlaneseq
        %v4292 = vshrl.u32 %v4291, 7
        %v4293 = vsub.s32 0, %v4292
        %v4294 = vrot.slane %v4289, %v4293
        %v4295 = vlaneseq
        %v4296 = vshrl.u32 %v4295, 7
        %v4297 = vsub.s32 1, %v4296
        %v4298 = vrot.slane %v4289, %v4297
        %v4333 = vunpack.c.l.b16 %v4257
        %v4334 = vunpack.c.h.b16 %v4257
        %v4335 = vunpack.c.l.b16 %v4258
        %v4336 = vunpack.c.h.b16 %v4258
        %v4337 = vunpack.c.l.b16 %v4259
        %v4338 = vunpack.c.h.b16 %v4259
        %v4339 = vunpack.c.l.b16 %v4260
        %v4340 = vunpack.c.h.b16 %v4260
        %v4341 = vunpack.c.l.b16 %v4261
        %v4342 = vunpack.c.h.b16 %v4261
        %v4343 = vunpack.c.l.b16 %v4262
        %v4344 = vunpack.c.h.b16 %v4262
        %v4345 = vunpack.c.l.b16 %v4263
        %v4346 = vunpack.c.h.b16 %v4263
        %v4347 = vunpack.c.l.b16 %v4264
        %v4348 = vunpack.c.h.b16 %v4264
        %v4349 = vunpack.c.l.b16 %v4265
        %v4350 = vunpack.c.h.b16 %v4265
        %v4351 = vunpack.c.l.b16 %v4266
        %v4352 = vunpack.c.h.b16 %v4266
        %v4353 = vunpack.c.l.b16 %v4267
        %v4354 = vunpack.c.h.b16 %v4267
        %v4355 = vunpack.c.l.b16 %v4268
        %v4356 = vunpack.c.h.b16 %v4268
        %v4357 = vunpack.c.l.b16 %v4269
        %v4358 = vunpack.c.h.b16 %v4269
        %v4359 = vunpack.c.l.b16 %v4270
        %v4360 = vunpack.c.h.b16 %v4270
        %v4361 = vunpack.c.l.b16 %v4271
        %v4362 = vunpack.c.h.b16 %v4271
        %v4363 = vunpack.c.l.b16 %v4272
        %v4364 = vunpack.c.h.b16 %v4272
        %v4365 = vunpack.c.l.b16 %v4273
        %v4366 = vunpack.c.h.b16 %v4273
        %v4367 = vunpack.c.l.b16 %v4274
        %v4368 = vunpack.c.h.b16 %v4274
        %v4369 = vunpack.c.l.b16 %v4275
        %v4370 = vunpack.c.h.b16 %v4275
        %v4371 = vunpack.c.l.b16 %v4276
        %v4372 = vunpack.c.h.b16 %v4276
        %v4373 = vunpack.c.l.b16 %v4277
        %v4374 = vunpack.c.h.b16 %v4277
        %v4375 = vunpack.c.l.b16 %v4278
        %v4376 = vunpack.c.h.b16 %v4278
        %v4377 = vunpack.c.l.b16 %v4279
        %v4378 = vunpack.c.h.b16 %v4279
        %v4379 = vunpack.c.l.b16 %v4280
        %v4380 = vunpack.c.h.b16 %v4280
        %v4381 = vunpack.c.l.b16 %v4281
        %v4382 = vunpack.c.h.b16 %v4281
        %v4383 = vunpack.c.l.b16 %v4282
        %v4384 = vunpack.c.h.b16 %v4282
        %v4385 = vunpack.c.l.b16 %v4283
        %v4386 = vunpack.c.h.b16 %v4283
        %v4387 = vunpack.c.l.b16 %v4284
        %v4388 = vunpack.c.h.b16 %v4284
        %v4389 = vunpack.c.l.b16 %v4285
        %v4390 = vunpack.c.h.b16 %v4285
        %v4391 = vunpack.c.l.b16 %v4286
        %v4392 = vunpack.c.h.b16 %v4286
        %v4393 = vunpack.c.l.b16 %v4287
        %v4394 = vunpack.c.h.b16 %v4287
        %v4395 = vunpack.c.l.b16 %v4288
        %v4396 = vunpack.c.h.b16 %v4288
        %v4397 = vpack.c.b16 %v4335, %v4333
        %v4398 = vpack.c.b16 %v4336, %v4334
        %v4399 = vpack.c.b16 %v4339, %v4337
        %v4400 = vpack.c.b16 %v4340, %v4338
        %v4401 = vpack.c.b16 %v4343, %v4341
        %v4402 = vpack.c.b16 %v4344, %v4342
        %v4403 = vpack.c.b16 %v4347, %v4345
        %v4404 = vpack.c.b16 %v4348, %v4346
        %v4405 = vpack.c.b16 %v4351, %v4349
        %v4406 = vpack.c.b16 %v4352, %v4350
        %v4407 = vpack.c.b16 %v4355, %v4353
        %v4408 = vpack.c.b16 %v4356, %v4354
        %v4409 = vpack.c.b16 %v4359, %v4357
        %v4410 = vpack.c.b16 %v4360, %v4358
        %v4411 = vpack.c.b16 %v4363, %v4361
        %v4412 = vpack.c.b16 %v4364, %v4362
        %v4413 = vpack.c.b16 %v4367, %v4365
        %v4414 = vpack.c.b16 %v4368, %v4366
        %v4415 = vpack.c.b16 %v4371, %v4369
        %v4416 = vpack.c.b16 %v4372, %v4370
        %v4417 = vpack.c.b16 %v4375, %v4373
        %v4418 = vpack.c.b16 %v4376, %v4374
        %v4419 = vpack.c.b16 %v4379, %v4377
        %v4420 = vpack.c.b16 %v4380, %v4378
        %v4421 = vpack.c.b16 %v4383, %v4381
        %v4422 = vpack.c.b16 %v4384, %v4382
        %v4423 = vpack.c.b16 %v4387, %v4385
        %v4424 = vpack.c.b16 %v4388, %v4386
        %v4425 = vpack.c.b16 %v4391, %v4389
        %v4426 = vpack.c.b16 %v4392, %v4390
        %v4427 = vpack.c.b16 %v4395, %v4393
        %v4428 = vpack.c.b16 %v4396, %v4394
        %4461 = vmatprep.subr.bf16.mxu0 %v4398
        %4462 = vmatpush1.bf16.msra.mxu0 %v4397
        %4463 = vmatprep.subr.bf16.mxu0 %v4400
        %4464 = vmatpush1.bf16.msra.mxu0 %v4399
        %4465 = vmatprep.subr.bf16.mxu0 %v4402
        %4466 = vmatpush1.bf16.msra.mxu0 %v4401
        %4467 = vmatprep.subr.bf16.mxu0 %v4404
        %4468 = vmatpush1.bf16.msra.mxu0 %v4403
        %4469 = vmatprep.subr.bf16.mxu0 %v4406
        %4470 = vmatpush1.bf16.msra.mxu0 %v4405
        %4471 = vmatprep.subr.bf16.mxu0 %v4408
        %4472 = vmatpush1.bf16.msra.mxu0 %v4407
        %4473 = vmatprep.subr.bf16.mxu0 %v4410
        %4474 = vmatpush1.bf16.msra.mxu0 %v4409
        %4475 = vmatprep.subr.bf16.mxu0 %v4412
        %4476 = vmatpush1.bf16.msra.mxu0 %v4411
        %4477 = vmatprep.subr.bf16.mxu0 %v4414
        %4478 = vmatpush1.bf16.msra.mxu0 %v4413
        %4479 = vmatprep.subr.bf16.mxu0 %v4416
        %4480 = vmatpush1.bf16.msra.mxu0 %v4415
        %4481 = vmatprep.subr.bf16.mxu0 %v4418
        %4482 = vmatpush1.bf16.msra.mxu0 %v4417
        %4483 = vmatprep.subr.bf16.mxu0 %v4420
        %4484 = vmatpush1.bf16.msra.mxu0 %v4419
        %4485 = vmatprep.subr.bf16.mxu0 %v4422
        %4486 = vmatpush1.bf16.msra.mxu0 %v4421
        %4487 = vmatprep.subr.bf16.mxu0 %v4424
        %4488 = vmatpush1.bf16.msra.mxu0 %v4423
        %4489 = vmatprep.subr.bf16.mxu0 %v4426
        %4490 = vmatpush1.bf16.msra.mxu0 %v4425
        %4491 = vmatprep.subr.bf16.mxu0 %v4428
        %4492 = vmatpush1.bf16.msra.mxu0 %v4427
        %4493 = vmatprep.mubr.bf16.mxu0 %v4242
        %4494 = vmatmul.mubr.bf16.gmra.mrb[0].mxu0 %v4241
        %v4495 = vpop.f32.mrb[0].mxu0
        %v4496 = vadd.f32 %v4294, %v4495
        %v4497 = vpop.f32.mrb[0].mxu0
        %v4498 = vadd.f32 %v4298, %v4497
        %v4499 = vpop.f32.mrb[0].mxu0
        %v4500 = vadd.f32 %v4294, %v4499
        %v4501 = vpop.f32.mrb[0].mxu0
        %v4502 = vadd.f32 %v4298, %v4501
        %4503 = vmatprep.mubr.bf16.mxu0 %v4244
        %4504 = vmatmul.mubr.bf16.gmra.mrb[0].mxu0 %v4243
        %v4505 = vpop.f32.mrb[0].mxu0
        %v4506 = vadd.f32 %v4294, %v4505
        %v4507 = vpop.f32.mrb[0].mxu0
        %v4508 = vadd.f32 %v4298, %v4507
        %v4509 = vpop.f32.mrb[0].mxu0
        %v4510 = vadd.f32 %v4294, %v4509
        %v4511 = vpop.f32.mrb[0].mxu0
        %v4512 = vadd.f32 %v4298, %v4511
        %4513 = vmatprep.mubr.bf16.mxu0 %v4246
        %4514 = vmatmul.mubr.bf16.gmra.mrb[0].mxu0 %v4245
        %v4515 = vpop.f32.mrb[0].mxu0
        %v4516 = vadd.f32 %v4294, %v4515
        %v4517 = vpop.f32.mrb[0].mxu0
        %v4518 = vadd.f32 %v4298, %v4517
        %v4519 = vpop.f32.mrb[0].mxu0
        %v4520 = vadd.f32 %v4294, %v4519
        %v4521 = vpop.f32.mrb[0].mxu0
        %v4522 = vadd.f32 %v4298, %v4521
        %4523 = vmatprep.mubr.bf16.mxu0 %v4248
        %4524 = vmatmul.mubr.bf16.gmra.mrb[0].mxu0 %v4247
        %v4525 = vpop.f32.mrb[0].mxu0
        %v4526 = vadd.f32 %v4294, %v4525
        %v4527 = vpop.f32.mrb[0].mxu0
        %v4528 = vadd.f32 %v4298, %v4527
        %v4529 = vpop.f32.mrb[0].mxu0
        %v4530 = vadd.f32 %v4294, %v4529
        %v4531 = vpop.f32.mrb[0].mxu0
        %v4532 = vadd.f32 %v4298, %v4531
        %4533 = vmatprep.mubr.bf16.mxu0 %v4250
        %4534 = vmatmul.mubr.bf16.gmra.mrb[0].mxu0 %v4249
        %v4535 = vpop.f32.mrb[0].mxu0
        %v4536 = vadd.f32 %v4294, %v4535
        %v4537 = vpop.f32.mrb[0].mxu0
        %v4538 = vadd.f32 %v4298, %v4537
        %v4539 = vpop.f32.mrb[0].mxu0
        %v4540 = vadd.f32 %v4294, %v4539
        %v4541 = vpop.f32.mrb[0].mxu0
        %v4542 = vadd.f32 %v4298, %v4541
        %4543 = vmatprep.mubr.bf16.mxu0 %v4252
        %4544 = vmatmul.mubr.bf16.gmra.mrb[0].mxu0 %v4251
        %v4545 = vpop.f32.mrb[0].mxu0
        %v4546 = vadd.f32 %v4294, %v4545
        %v4547 = vpop.f32.mrb[0].mxu0
        %v4548 = vadd.f32 %v4298, %v4547
        %v4549 = vpop.f32.mrb[0].mxu0
        %v4550 = vadd.f32 %v4294, %v4549
        %v4551 = vpop.f32.mrb[0].mxu0
        %v4552 = vadd.f32 %v4298, %v4551
        %4553 = vmatprep.mubr.bf16.mxu0 %v4254
        %4554 = vmatmul.mubr.bf16.gmra.mrb[0].mxu0 %v4253
        %v4555 = vpop.f32.mrb[0].mxu0
        %v4556 = vadd.f32 %v4294, %v4555
        %v4557 = vpop.f32.mrb[0].mxu0
        %v4558 = vadd.f32 %v4298, %v4557
        %v4559 = vpop.f32.mrb[0].mxu0
        %v4560 = vadd.f32 %v4294, %v4559
        %v4561 = vpop.f32.mrb[0].mxu0
        %v4562 = vadd.f32 %v4298, %v4561
        %4563 = vmatprep.mubr.bf16.mxu0 %v4256
        %4564 = vmatmul.mubr.bf16.gmra.mrb[0].mxu0 %v4255
        %v4565 = vpop.f32.mrb[0].mxu0
        %v4566 = vadd.f32 %v4294, %v4565
        %v4567 = vpop.f32.mrb[0].mxu0
        %v4568 = vadd.f32 %v4298, %v4567
        %v4569 = vpop.f32.mrb[0].mxu0
        %v4570 = vadd.f32 %v4294, %v4569
        %v4571 = vpop.f32.mrb[0].mxu0
        %v4572 = vadd.f32 %v4298, %v4571
        %4573 = vdwg.mxu0
        %v4574 = vmax.f32 %v4496, 0.0
        %v4575 = vmax.f32 %v4498, 0.0
        %v4576 = vmax.f32 %v4500, 0.0
        %v4577 = vmax.f32 %v4502, 0.0
        %v4578 = vmax.f32 %v4506, 0.0
        %v4579 = vmax.f32 %v4508, 0.0
        %v4580 = vmax.f32 %v4510, 0.0
        %v4581 = vmax.f32 %v4512, 0.0
        %v4582 = vmax.f32 %v4516, 0.0
        %v4583 = vmax.f32 %v4518, 0.0
        %v4584 = vmax.f32 %v4520, 0.0
        %v4585 = vmax.f32 %v4522, 0.0
        %v4586 = vmax.f32 %v4526, 0.0
        %v4587 = vmax.f32 %v4528, 0.0
        %v4588 = vmax.f32 %v4530, 0.0
        %v4589 = vmax.f32 %v4532, 0.0
        %v4590 = vmax.f32 %v4536, 0.0
        %v4591 = vmax.f32 %v4538, 0.0
        %v4592 = vmax.f32 %v4540, 0.0
        %v4593 = vmax.f32 %v4542, 0.0
        %v4594 = vmax.f32 %v4546, 0.0
        %v4595 = vmax.f32 %v4548, 0.0
        %v4596 = vmax.f32 %v4550, 0.0
        %v4597 = vmax.f32 %v4552, 0.0
        %v4598 = vmax.f32 %v4556, 0.0
        %v4599 = vmax.f32 %v4558, 0.0
        %v4600 = vmax.f32 %v4560, 0.0
        %v4601 = vmax.f32 %v4562, 0.0
        %v4602 = vmax.f32 %v4566, 0.0
        %v4603 = vmax.f32 %v4568, 0.0
        %v4604 = vmax.f32 %v4570, 0.0
        %v4605 = vmax.f32 %v4572, 0.0
        %v4606 = vpack.c.bf16 %v4576, %v4574
        %v4607 = vpack.c.bf16 %v4577, %v4575
        %v4608 = vpack.c.bf16 %v4580, %v4578
        %v4609 = vpack.c.bf16 %v4581, %v4579
        %v4610 = vpack.c.bf16 %v4584, %v4582
        %v4611 = vpack.c.bf16 %v4585, %v4583
        %v4612 = vpack.c.bf16 %v4588, %v4586
        %v4613 = vpack.c.bf16 %v4589, %v4587
        %v4614 = vpack.c.bf16 %v4592, %v4590
        %v4615 = vpack.c.bf16 %v4593, %v4591
        %v4616 = vpack.c.bf16 %v4596, %v4594
        %v4617 = vpack.c.bf16 %v4597, %v4595
        %v4618 = vpack.c.bf16 %v4600, %v4598
        %v4619 = vpack.c.bf16 %v4601, %v4599
        %v4620 = vpack.c.bf16 %v4604, %v4602
        %v4621 = vpack.c.bf16 %v4605, %v4603
        %v4622 = vld [vmem:[#allocation7] sm:$0xf]
        %v4623 = vld [vmem:[#allocation7 + $0x4] sm:$0xf]
        %v4624 = vld [vmem:[#allocation7 + $0x8] sm:$0xf]
        %v4625 = vld [vmem:[#allocation7 + $0xc] sm:$0xf]
        %v4626 = vld [vmem:[#allocation7 + $0x10] sm:$0xf]
        %v4627 = vld [vmem:[#allocation7 + $0x14] sm:$0xf]
        %v4628 = vld [vmem:[#allocation7 + $0x18] sm:$0xf]
        %v4629 = vld [vmem:[#allocation7 + $0x1c] sm:$0xf]
        %v4630 = vld [vmem:[#allocation7 + $0x20] sm:$0xf]
        %v4631 = vld [vmem:[#allocation7 + $0x24] sm:$0xf]
        %v4632 = vld [vmem:[#allocation7 + $0x28] sm:$0xf]
        %v4633 = vld [vmem:[#allocation7 + $0x2c] sm:$0xf]
        %v4634 = vld [vmem:[#allocation7 + $0x30] sm:$0xf]
        %v4635 = vld [vmem:[#allocation7 + $0x34] sm:$0xf]
        %v4636 = vld [vmem:[#allocation7 + $0x38] sm:$0xf]
        %v4637 = vld [vmem:[#allocation7 + $0x3c] sm:$0xf]
        %v4638 = vld [vmem:[#allocation7 + $0x40] sm:$0xf]
        %v4639 = vld [vmem:[#allocation7 + $0x44] sm:$0xf]
        %v4640 = vld [vmem:[#allocation7 + $0x48] sm:$0xf]
        %v4641 = vld [vmem:[#allocation7 + $0x4c] sm:$0xf]
        %v4642 = vld [vmem:[#allocation7 + $0x50] sm:$0xf]
        %v4643 = vld [vmem:[#allocation7 + $0x54] sm:$0xf]
        %v4644 = vld [vmem:[#allocation7 + $0x58] sm:$0xf]
        %v4645 = vld [vmem:[#allocation7 + $0x5c] sm:$0xf]
        %v4646 = vld [vmem:[#allocation7 + $0x60] sm:$0xf]
        %v4647 = vld [vmem:[#allocation7 + $0x64] sm:$0xf]
        %v4648 = vld [vmem:[#allocation7 + $0x68] sm:$0xf]
        %v4649 = vld [vmem:[#allocation7 + $0x6c] sm:$0xf]
        %v4650 = vld [vmem:[#allocation7 + $0x70] sm:$0xf]
        %v4651 = vld [vmem:[#allocation7 + $0x74] sm:$0xf]
        %v4652 = vld [vmem:[#allocation7 + $0x78] sm:$0xf]
        %v4653 = vld [vmem:[#allocation7 + $0x7c] sm:$0xf]
        %v4654 = vld [vmem:[%s8] sm:$0x1]
        %v4656 = vlaneseq
        %v4657 = vshrl.u32 %v4656, 7
        %v4658 = vsub.s32 0, %v4657
        %v4659 = vrot.slane %v4654, %v4658
        %v4693 = vunpack.c.l.b16 %v4622
        %v4694 = vunpack.c.l.b16 %v4623
        %v4695 = vunpack.c.l.b16 %v4624
        %v4696 = vunpack.c.l.b16 %v4625
        %v4697 = vunpack.c.l.b16 %v4626
        %v4698 = vunpack.c.l.b16 %v4627
        %v4699 = vunpack.c.l.b16 %v4628
        %v4700 = vunpack.c.l.b16 %v4629
        %v4701 = vunpack.c.l.b16 %v4630
        %v4702 = vunpack.c.l.b16 %v4631
        %v4703 = vunpack.c.l.b16 %v4632
        %v4704 = vunpack.c.l.b16 %v4633
        %v4705 = vunpack.c.l.b16 %v4634
        %v4706 = vunpack.c.l.b16 %v4635
        %v4707 = vunpack.c.l.b16 %v4636
        %v4708 = vunpack.c.l.b16 %v4637
        %v4709 = vunpack.c.l.b16 %v4638
        %v4710 = vunpack.c.l.b16 %v4639
        %v4711 = vunpack.c.l.b16 %v4640
        %v4712 = vunpack.c.l.b16 %v4641
        %v4713 = vunpack.c.l.b16 %v4642
        %v4714 = vunpack.c.l.b16 %v4643
        %v4715 = vunpack.c.l.b16 %v4644
        %v4716 = vunpack.c.l.b16 %v4645
        %v4717 = vunpack.c.l.b16 %v4646
        %v4718 = vunpack.c.l.b16 %v4647
        %v4719 = vunpack.c.l.b16 %v4648
        %v4720 = vunpack.c.l.b16 %v4649
        %v4721 = vunpack.c.l.b16 %v4650
        %v4722 = vunpack.c.l.b16 %v4651
        %v4723 = vunpack.c.l.b16 %v4652
        %v4724 = vunpack.c.l.b16 %v4653
        %v4725 = vpack.c.b16 %v4694, %v4693
        %v4726 = vpack.c.b16 %v4696, %v4695
        %v4727 = vpack.c.b16 %v4698, %v4697
        %v4728 = vpack.c.b16 %v4700, %v4699
        %v4729 = vpack.c.b16 %v4702, %v4701
        %v4730 = vpack.c.b16 %v4704, %v4703
        %v4731 = vpack.c.b16 %v4706, %v4705
        %v4732 = vpack.c.b16 %v4708, %v4707
        %v4733 = vpack.c.b16 %v4710, %v4709
        %v4734 = vpack.c.b16 %v4712, %v4711
        %v4735 = vpack.c.b16 %v4714, %v4713
        %v4736 = vpack.c.b16 %v4716, %v4715
        %v4737 = vpack.c.b16 %v4718, %v4717
        %v4738 = vpack.c.b16 %v4720, %v4719
        %v4739 = vpack.c.b16 %v4722, %v4721
        %v4740 = vpack.c.b16 %v4724, %v4723
        %4757 = vmatprep.subr.bf16.mxu0 0
        %4758 = vmatpush1.bf16.msra.mxu0 %v4725
        %4759 = vmatprep.subr.bf16.mxu0 0
        %4760 = vmatpush1.bf16.msra.mxu0 %v4726
        %4761 = vmatprep.subr.bf16.mxu0 0
        %4762 = vmatpush1.bf16.msra.mxu0 %v4727
        %4763 = vmatprep.subr.bf16.mxu0 0
        %4764 = vmatpush1.bf16.msra.mxu0 %v4728
        %4765 = vmatprep.subr.bf16.mxu0 0
        %4766 = vmatpush1.bf16.msra.mxu0 %v4729
        %4767 = vmatprep.subr.bf16.mxu0 0
        %4768 = vmatpush1.bf16.msra.mxu0 %v4730
        %4769 = vmatprep.subr.bf16.mxu0 0
        %4770 = vmatpush1.bf16.msra.mxu0 %v4731
        %4771 = vmatprep.subr.bf16.mxu0 0
        %4772 = vmatpush1.bf16.msra.mxu0 %v4732
        %4773 = vmatprep.subr.bf16.mxu0 0
        %4774 = vmatpush1.bf16.msra.mxu0 %v4733
        %4775 = vmatprep.subr.bf16.mxu0 0
        %4776 = vmatpush1.bf16.msra.mxu0 %v4734
        %4777 = vmatprep.subr.bf16.mxu0 0
        %4778 = vmatpush1.bf16.msra.mxu0 %v4735
        %4779 = vmatprep.subr.bf16.mxu0 0
        %4780 = vmatpush1.bf16.msra.mxu0 %v4736
        %4781 = vmatprep.subr.bf16.mxu0 0
        %4782 = vmatpush1.bf16.msra.mxu0 %v4737
        %4783 = vmatprep.subr.bf16.mxu0 0
        %4784 = vmatpush1.bf16.msra.mxu0 %v4738
        %4785 = vmatprep.subr.bf16.mxu0 0
        %4786 = vmatpush1.bf16.msra.mxu0 %v4739
        %4787 = vmatprep.subr.bf16.mxu0 0
        %4788 = vmatpush1.bf16.msra.mxu0 %v4740
        %4789 = vmatprep.mubr.bf16.mxu0 %v4607
        %4790 = vmatmul.mubr.bf16.gmra.mrb[0].mxu0 %v4606
        %v4791 = vpop.f32.mrb[0].mxu0
        %v4792 = vadd.f32 %v4659, %v4791
        %v4793 = vpop.f32.mrb[0].mxu0
        %v4794 = vpop.f32.mrb[0].mxu0
        %v4795 = vadd.f32 %v4659, %v4794
        %v4796 = vpop.f32.mrb[0].mxu0
        %4797 = vmatprep.mubr.bf16.mxu0 %v4609
        %4798 = vmatmul.mubr.bf16.gmra.mrb[0].mxu0 %v4608
        %v4799 = vpop.f32.mrb[0].mxu0
        %v4800 = vadd.f32 %v4659, %v4799
        %v4801 = vpop.f32.mrb[0].mxu0
        %v4802 = vpop.f32.mrb[0].mxu0
        %v4803 = vadd.f32 %v4659, %v4802
        %v4804 = vpop.f32.mrb[0].mxu0
        %4805 = vmatprep.mubr.bf16.mxu0 %v4611
        %4806 = vmatmul.mubr.bf16.gmra.mrb[0].mxu0 %v4610
        %v4807 = vpop.f32.mrb[0].mxu0
        %v4808 = vadd.f32 %v4659, %v4807
        %v4809 = vpop.f32.mrb[0].mxu0
        %v4810 = vpop.f32.mrb[0].mxu0
        %v4811 = vadd.f32 %v4659, %v4810
        %v4812 = vpop.f32.mrb[0].mxu0
        %4813 = vmatprep.mubr.bf16.mxu0 %v4613
        %4814 = vmatmul.mubr.bf16.gmra.mrb[0].mxu0 %v4612
        %v4815 = vpop.f32.mrb[0].mxu0
        %v4816 = vadd.f32 %v4659, %v4815
        %v4817 = vpop.f32.mrb[0].mxu0
        %v4818 = vpop.f32.mrb[0].mxu0
        %v4819 = vadd.f32 %v4659, %v4818
        %v4820 = vpop.f32.mrb[0].mxu0
        %4821 = vmatprep.mubr.bf16.mxu0 %v4615
        %4822 = vmatmul.mubr.bf16.gmra.mrb[0].mxu0 %v4614
        %v4823 = vpop.f32.mrb[0].mxu0
        %v4824 = vadd.f32 %v4659, %v4823
        %v4825 = vpop.f32.mrb[0].mxu0
        %v4826 = vpop.f32.mrb[0].mxu0
        %v4827 = vadd.f32 %v4659, %v4826
        %v4828 = vpop.f32.mrb[0].mxu0
        %4829 = vmatprep.mubr.bf16.mxu0 %v4617
        %4830 = vmatmul.mubr.bf16.gmra.mrb[0].mxu0 %v4616
        %v4831 = vpop.f32.mrb[0].mxu0
        %v4832 = vadd.f32 %v4659, %v4831
        %v4833 = vpop.f32.mrb[0].mxu0
        %v4834 = vpop.f32.mrb[0].mxu0
        %v4835 = vadd.f32 %v4659, %v4834
        %v4836 = vpop.f32.mrb[0].mxu0
        %4837 = vmatprep.mubr.bf16.mxu0 %v4619
        %4838 = vmatmul.mubr.bf16.gmra.mrb[0].mxu0 %v4618
        %v4839 = vpop.f32.mrb[0].mxu0
        %v4840 = vadd.f32 %v4659, %v4839
        %v4841 = vpop.f32.mrb[0].mxu0
        %v4842 = vpop.f32.mrb[0].mxu0
        %v4843 = vadd.f32 %v4659, %v4842
        %v4844 = vpop.f32.mrb[0].mxu0
        %4845 = vmatprep.mubr.bf16.mxu0 %v4621
        %4846 = vmatmul.mubr.bf16.gmra.mrb[0].mxu0 %v4620
        %v4847 = vpop.f32.mrb[0].mxu0
        %v4848 = vadd.f32 %v4659, %v4847
        %v4849 = vpop.f32.mrb[0].mxu0
        %v4850 = vpop.f32.mrb[0].mxu0
        %v4851 = vadd.f32 %v4659, %v4850
        %v4852 = vpop.f32.mrb[0].mxu0
        %4853 = vdwg.mxu0
        %4854 = vst [vmem:[%s370] sm:$0xff] %v4792
        %4855 = vst [vmem:[%s370 + $0x8] sm:$0xff] %v4795
        %4856 = vst [vmem:[%s370 + $0x10] sm:$0xff] %v4800
        %4857 = vst [vmem:[%s370 + $0x18] sm:$0xff] %v4803
        %4858 = vst [vmem:[%s370 + $0x20] sm:$0xff] %v4808
        %4859 = vst [vmem:[%s370 + $0x28] sm:$0xff] %v4811
        %4860 = vst [vmem:[%s370 + $0x30] sm:$0xff] %v4816
        %4861 = vst [vmem:[%s370 + $0x38] sm:$0xff] %v4819
        %4862 = vst [vmem:[%s370 + $0x40] sm:$0xff] %v4824
        %4863 = vst [vmem:[%s370 + $0x48] sm:$0xff] %v4827
        %4864 = vst [vmem:[%s370 + $0x50] sm:$0xff] %v4832
        %4865 = vst [vmem:[%s370 + $0x58] sm:$0xff] %v4835
        %4866 = vst [vmem:[%s370 + $0x60] sm:$0xff] %v4840
        %4867 = vst [vmem:[%s370 + $0x68] sm:$0xff] %v4843
        %4868 = vst [vmem:[%s370 + $0x70] sm:$0xff] %v4848
        %4869 = vst [vmem:[%s370 + $0x78] sm:$0xff] %v4851
        %s4870 = sand.u32 %s227, 1
        %s4871 = scalar_lea.sflag [#allocation4], %s4870
        %s4872 = sand.u32 %s227, 1
        %s4873 = smul.addr %s4872, 128
        %s4874 = scalar_lea.vmem [#allocation8], %s4873
        // Predicated region
        $region69: #{tpu_custom_call.1} parent=55 // pred_check
          %p4875 = pneg %p237
        $region70: #{tpu_custom_call.1} parent=55 // pred_check_branch
          %4877 = sbr.rel (%p4875) target = $region72
        $region71: #{tpu_custom_call.1} parent=55 // pred_region
          %s4878 = smul.u32 16, %s25
          %s4880 = ssub.s32 2048, 2048
          %4881 = vsyncadd %s4871, %s4880
          %s4882 = smul.addr %s4878, 128
          %s4883 = scalar_lea.hbm %s9, %s4882
          %s4884 = sshll.u32 %s4874, 4
          %s4885 = int_to_ptr.vmem [resolvable:$true] %s4884
          %4890 = dma.vmem_to_hbm [thread:$0]  %s4885, 2048, %s4883, %s4871, 128, 128, 8
        $region72: #{tpu_custom_call.1} parent=55 // pred_fallthru
          _
      $region56: #{tpu_custom_call.1} parent=5 // pred_fallthru
        _
      %p4891 = scmp.le.s32.totalorder 2, %s20
      // Predicated region
      $region73: #{tpu_custom_call.1} parent=5 // pred_check
        %p4892 = pneg %p4891
      $region74: #{tpu_custom_call.1} parent=5 // pred_check_branch
        %4894 = sbr.rel (%p4892) target = $region76
      $region75: #{tpu_custom_call.1} parent=5 // pred_region
        %s4895 = ssub.s32 %s20, 2
        // Predicated region
        $region77: #{tpu_custom_call.1} parent=75 // pred_check
          %p4896 = pneg %p243
        $region78: #{tpu_custom_call.1} parent=75 // pred_check_branch
          %4898 = sbr.rel (%p4896) target = $region80
        $region79: #{tpu_custom_call.1} parent=75 // pred_region
          %s4899 = sand.u32 %s228, 1
          %s4900 = scalar_lea.sflag [#allocation4], %s4899
          %s4901 = sand.u32 %s228, 1
          %s4902 = smul.addr %s4901, 128
          %s4903 = scalar_lea.vmem [#allocation8], %s4902
          %4904 = dma.done %s4900, 2048
        $region80: #{tpu_custom_call.1} parent=75 // pred_fallthru
          _
      $region76: #{tpu_custom_call.1} parent=5 // pred_fallthru
        _
    $region6: #{tpu_custom_call.1} parent=1 // loop_footer
      %s24 = sadd.s32 1, %s20
    $region7: #{tpu_custom_call.1} parent=1 // loop_footer_branch
      %19 = sbr.rel target = $region3
    $region8: #{tpu_custom_call.1} parent=1 // loop_exit
      _
    %4905 = vsyncpa [#allocation3], 1
    %s4906 = scalar_lea.sflag [#allocation3], 1
    %4907 = vsyncpa %s4906, 1
    %4908 = vsyncpa [#allocation6], 1
    %4909 = vsyncpa [#allocation4], 1
    %s4910 = scalar_lea.sflag [#allocation4], 1
    %4911 = vsyncpa %s4910, 1

</llo_original>
